<compile_context>
chip_gen: v7x
topology: tpu7x:2x2x1
jax: 0.10.0
libtpu: 0.0.40
codegen_flags: <defaults>
</compile_context>

<pallas_src>
import math

import jax
import jax.numpy as jnp
from jax.experimental import pallas as pl
from jax.experimental.pallas import tpu as pltpu

S = 8        # sequence length
D = 32       # temporal_dim
H = 4        # n_heads
DH = D // H  # head dim
F = 64       # ff_dim
L = 2        # n_layers
LN_EPS = 1e-5
COS_EPS2 = 1e-16   # (cosine_similarity eps=1e-8)^2, clamp on squared norms
LANE = 128

# ---------------- packed-parameter layout (static, shared host<->kernel) ------

# "vec" buffer: one row (padded to 128 lanes) per 1-row parameter.
ROW_WT, ROW_BT = 0, 1
VEC_LAYER_BASE = 2
VEC_PER_LAYER = 8            # bqkv, bo, ln1g, ln1b, b1, b2, ln2g, ln2b
ROW_FBQKV = VEC_LAYER_BASE + L * VEC_PER_LAYER   # 18
ROW_FBO = ROW_FBQKV + 1                          # 19
VEC_ROWS = 24                                    # padded to multiple of 8

# "mat" buffer: lane-compacted 2-D weights.
#   per layer l (base = l * MAT_PER_LAYER):
#     wqkv : rows [base,      base+D  ), lanes [0,    3D )   (32 x 96)
#     wo   : rows [base,      base+D  ), lanes [3D,   4D )   (32 x 32)
#     w1   : rows [base+D,    base+2D ), lanes [0,    F  )   (32 x 64)
#     w2   : rows [base+D,    base+D+F), lanes [F,    F+D)   (64 x 32)
#   final MHA (base = L * MAT_PER_LAYER):
#     fwqkv: rows [base, base+D), lanes [0, 3D); fwo: lanes [3D, 4D)
MAT_PER_LAYER = D + F          # 96 rows per encoder layer
MAT_FINAL = L * MAT_PER_LAYER  # 192
MAT_ROWS = MAT_FINAL + D       # 224  (224*128*4B = 112 KiB, VMEM-resident)


# ---------------- in-kernel helpers (traced inside the Pallas body) -----------

def _softmax(x):
    m = jnp.max(x, axis=-1, keepdims=True)
    e = jnp.exp(x - m)
    return e * pl.reciprocal(jnp.sum(e, axis=-1, keepdims=True), approx=True)


def _layernorm(x, g, b):
    mu = jnp.mean(x, axis=-1, keepdims=True)
    var = jnp.mean((x - mu) ** 2, axis=-1, keepdims=True)
    return (x - mu) * jax.lax.rsqrt(var + LN_EPS) * g + b


def _mha(x, wqkv, bqkv, wo, bo):
    # x: (S, D), wqkv: (D, 3D), bqkv: (1, 3D), wo: (D, D), bo: (1, D)
    qkv = jnp.dot(x, wqkv, preferred_element_type=jnp.float32) + bqkv
    scale = 1.0 / math.sqrt(DH)
    heads = []
    for h in range(H):
        lo = h * DH
        qh = qkv[:, lo:lo + DH]
        kh = qkv[:, D + lo:D + lo + DH]
        vh = qkv[:, 2 * D + lo:2 * D + lo + DH]
        # contract both last dims -> no explicit transpose of the 8x8 slab
        s = jax.lax.dot_general(qh, kh, (((1,), (1,)), ((), ())),
                                preferred_element_type=jnp.float32) * scale
        p = _softmax(s)
        heads.append(jnp.dot(p, vh, preferred_element_type=jnp.float32))
    o = jnp.concatenate(heads, axis=-1)      # head outputs stay in registers
    return jnp.dot(o, wo, preferred_element_type=jnp.float32) + bo


# ---------------- the Pallas kernel --------------------------------------------

def temporal_kernel(xin_ref, vec_ref, mat_ref, out_ref, coh_ref):
    def vrow(r, c):
        return vec_ref[r:r + 1, 0:c]

    seq = xin_ref[:, 0:D]
    ts = xin_ref[:, D:D + 1]

    # time embedding: nn.Linear(1, D)  ->  ts * W + b
    x = seq + ts * vrow(ROW_WT, D) + vrow(ROW_BT, D)

    # sequence_coherence: cosine similarity of consecutive time-embedded states
    # (the reference computes it on sequence + time_embeddings, pre-encoder).
    # Exact math: one squared-norm reduce, exact rsqrt, torch-style eps clamp.
    n2 = jnp.sum(x * x, axis=-1, keepdims=True)                       # (S, 1)
    dot = jnp.sum(x[:-1, :] * x[1:, :], axis=-1, keepdims=True)       # (S-1, 1)
    denom2 = jnp.maximum(n2[:-1, :], COS_EPS2) * jnp.maximum(n2[1:, :], COS_EPS2)
    coh_ref[...] = jnp.mean(dot * jax.lax.rsqrt(denom2), axis=0, keepdims=True)

    # nn.TransformerEncoder: L post-norm layers, relu FFN (dropout = eval no-op)
    for l in range(L):
        vb = VEC_LAYER_BASE + l * VEC_PER_LAYER
        mb = l * MAT_PER_LAYER
        sa = _mha(x,
                  mat_ref[mb:mb + D, 0:3 * D],
                  vrow(vb + 0, 3 * D),
                  mat_ref[mb:mb + D, 3 * D:4 * D],
                  vrow(vb + 1, D))
        x = _layernorm(x + sa, vrow(vb + 2, D), vrow(vb + 3, D))
        h1 = jnp.maximum(
            jnp.dot(x, mat_ref[mb + D:mb + 2 * D, 0:F],
                    preferred_element_type=jnp.float32) + vrow(vb + 4, F),
            0.0)
        ff = jnp.dot(h1, mat_ref[mb + D:mb + D + F, F:F + D],
                     preferred_element_type=jnp.float32) + vrow(vb + 5, D)
        x = _layernorm(x + ff, vrow(vb + 6, D), vrow(vb + 7, D))

    # final temporal nn.MultiheadAttention (self-attention on encoded sequence)
    out_ref[...] = _mha(x,
                        mat_ref[MAT_FINAL:MAT_FINAL + D, 0:3 * D],
                        vrow(ROW_FBQKV, 3 * D),
                        mat_ref[MAT_FINAL:MAT_FINAL + D, 3 * D:4 * D],
                        vrow(ROW_FBO, D))


# ---------------- wrapper -------------------------------------------------------

@jax.jit
def temporal_context_forward(sequence, timestamps, vec, mat):
    # Fold timestamps into an extra lane column of the sequence tile: 3 input
    # DMAs (x_in, vec, mat) instead of 4.
    ts_col = timestamps.reshape(S, 1).astype(jnp.float32)
    x_in = jnp.concatenate([sequence.astype(jnp.float32), ts_col], axis=-1)  # (S, D+1)

    vmem = pl.BlockSpec(memory_space=pltpu.MemorySpace.VMEM)
    attended, coh = pl.pallas_call(
        temporal_kernel,
        out_shape=(jax.ShapeDtypeStruct((S, D), jnp.float32),
                   jax.ShapeDtypeStruct((1, 1), jnp.float32)),
        in_specs=[vmem, vmem, vmem],
        out_specs=(vmem, vmem),
    )(x_in, vec, mat)

    # TODO(synk): _calculate_attention_stability / _calculate_consolidation_quality /
    # _calculate_temporal_consistency are not defined in the reference module;
    # reported as 0.0 placeholders. Metrics stay on-device (no host sync).
    metrics = {
        'sequence_coherence': coh[0, 0],
        'attention_stability': jnp.float32(0.0),
        'consolidation_quality': jnp.float32(0.0),
        'temporal_consistency': jnp.float32(0.0),
    }
    return attended, metrics


# ---------------- deterministic synthetic parameters + host-side packing -------

def init_params(key):
    keys = iter(jax.random.split(key, 64))

    def rnd(shape, scale=0.05):
        return jax.random.normal(next(keys), shape, jnp.float32) * scale

    p = {}
    p['wt'] = rnd((1, D))                      # time embedding Linear(1, D)
    p['bt'] = rnd((1, D))
    p['wqkv'] = rnd((L, D, 3 * D))
    p['bqkv'] = jnp.zeros((L, 1, 3 * D), jnp.float32)
    p['wo'] = rnd((L, D, D))
    p['bo'] = jnp.zeros((L, 1, D), jnp.float32)
    p['ln1g'] = jnp.ones((L, 1, D), jnp.float32)
    p['ln1b'] = jnp.zeros((L, 1, D), jnp.float32)
    p['w1'] = rnd((L, D, F))
    p['b1'] = jnp.zeros((L, 1, F), jnp.float32)
    p['w2'] = rnd((L, F, D))
    p['b2'] = jnp.zeros((L, 1, D), jnp.float32)
    p['ln2g'] = jnp.ones((L, 1, D), jnp.float32)
    p['ln2b'] = jnp.zeros((L, 1, D), jnp.float32)
    p['fwqkv'] = rnd((D, 3 * D))               # final MultiheadAttention
    p['fbqkv'] = jnp.zeros((1, 3 * D), jnp.float32)
    p['fwo'] = rnd((D, D))
    p['fbo'] = jnp.zeros((1, D), jnp.float32)
    return p


def pack_params(p):
    """Pack all parameters into two contiguous, lane-compacted f32 buffers (once)."""
    vec = jnp.zeros((VEC_ROWS, LANE), jnp.float32)
    mat = jnp.zeros((MAT_ROWS, LANE), jnp.float32)

    def pv(buf, row, a):                       # a: (1, c) -> one row
        return buf.at[row, :a.shape[-1]].set(a.reshape(-1))

    def pm(buf, row, col, a):                  # a: (r, c) -> rows x lanes block
        return buf.at[row:row + a.shape[0], col:col + a.shape[1]].set(a)

    vec = pv(vec, ROW_WT, p['wt'])
    vec = pv(vec, ROW_BT, p['bt'])
    for l in range(L):
        vb = VEC_LAYER_BASE + l * VEC_PER_LAYER
        vec = pv(vec, vb + 0, p['bqkv'][l])
        vec = pv(vec, vb + 1, p['bo'][l])
        vec = pv(vec, vb + 2, p['ln1g'][l])
        vec = pv(vec, vb + 3, p['ln1b'][l])
        vec = pv(vec, vb + 4, p['b1'][l])
        vec = pv(vec, vb + 5, p['b2'][l])
        vec = pv(vec, vb + 6, p['ln2g'][l])
        vec = pv(vec, vb + 7, p['ln2b'][l])
        mb = l * MAT_PER_LAYER
        mat = pm(mat, mb, 0, p['wqkv'][l])          # (32, 96)  lanes [0, 96)
        mat = pm(mat, mb, 3 * D, p['wo'][l])        # (32, 32)  lanes [96, 128)
        mat = pm(mat, mb + D, 0, p['w1'][l])        # (32, 64)  lanes [0, 64)
        mat = pm(mat, mb + D, F, p['w2'][l])        # (64, 32)  lanes [64, 96)
    vec = pv(vec, ROW_FBQKV, p['fbqkv'])
    vec = pv(vec, ROW_FBO, p['fbo'])
    mat = pm(mat, MAT_FINAL, 0, p['fwqkv'])
    mat = pm(mat, MAT_FINAL, 3 * D, p['fwo'])
    return vec, mat


if __name__ == "__main__":
    key = jax.random.PRNGKey(0)
    k_seq, _, k_par = jax.random.split(key, 3)
    sequence = jax.random.normal(k_seq, (S, D), jnp.float32)
    timestamps = jnp.arange(S, dtype=jnp.float32) * 0.1
    params = init_params(k_par)
    vec, mat = pack_params(params)            # packed once at init, reused per call

    attended, metrics = temporal_context_forward(sequence, timestamps, vec, mat)
    jax.block_until_ready((attended, metrics))
    assert attended.shape == (S, D)
    print("KERNEL_OK")
</pallas_src>

<mosaic_0001>
module attributes {stable_mosaic.version = 11 : i64} {
  func.func @temporal_kernel(%arg0: memref<8x33xf32, #tpu.memory_space<vmem>>, %arg1: memref<24x128xf32, #tpu.memory_space<vmem>>, %arg2: memref<224x128xf32, #tpu.memory_space<vmem>>, %arg3: memref<8x32xf32, #tpu.memory_space<vmem>>, %arg4: memref<1x1xf32, #tpu.memory_space<vmem>>) attributes {dimension_semantics = [], scalar_prefetch = 0 : i64, scratch_operands = 0 : i64, tpu.core_type = #tpu.core_type<tc>} {
    %c0 = arith.constant 0 : index
    %c0_0 = arith.constant 0 : index
    %0 = vector.load %arg0[%c0, %c0_0] : memref<8x33xf32, #tpu.memory_space<vmem>>, vector<8x32xf32>
    %c0_1 = arith.constant 0 : index
    %c32 = arith.constant 32 : index
    %1 = vector.load %arg0[%c0_1, %c32] : memref<8x33xf32, #tpu.memory_space<vmem>>, vector<8x1xf32>
    %c0_2 = arith.constant 0 : index
    %c0_3 = arith.constant 0 : index
    %2 = vector.load %arg1[%c0_2, %c0_3] : memref<24x128xf32, #tpu.memory_space<vmem>>, vector<1x32xf32>
    %3 = vector.broadcast %1 : vector<8x1xf32> to vector<8x32xf32>
    %4 = vector.broadcast %2 : vector<1x32xf32> to vector<8x32xf32>
    %5 = arith.mulf %3, %4 : vector<8x32xf32>
    %6 = arith.addf %0, %5 : vector<8x32xf32>
    %c1 = arith.constant 1 : index
    %c0_4 = arith.constant 0 : index
    %7 = vector.load %arg1[%c1, %c0_4] : memref<24x128xf32, #tpu.memory_space<vmem>>, vector<1x32xf32>
    %8 = vector.broadcast %7 : vector<1x32xf32> to vector<8x32xf32>
    %9 = arith.addf %6, %8 : vector<8x32xf32>
    %10 = arith.mulf %9, %9 : vector<8x32xf32>
    %cst = arith.constant dense<0.000000e+00> : vector<8xf32>
    %11 = vector.multi_reduction <add>, %10, %cst [1] : vector<8x32xf32> to vector<8xf32>
    %12 = vector.shape_cast %11 : vector<8xf32> to vector<8x1xf32>
    %13 = vector.extract_strided_slice %9 {offsets = [0, 0], sizes = [7, 32], strides = [1, 1]} : vector<8x32xf32> to vector<7x32xf32>
    %14 = vector.extract_strided_slice %9 {offsets = [1, 0], sizes = [7, 32], strides = [1, 1]} : vector<8x32xf32> to vector<7x32xf32>
    %15 = arith.mulf %13, %14 : vector<7x32xf32>
    %cst_5 = arith.constant dense<0.000000e+00> : vector<7xf32>
    %16 = vector.multi_reduction <add>, %15, %cst_5 [1] : vector<7x32xf32> to vector<7xf32>
    %17 = vector.shape_cast %16 : vector<7xf32> to vector<7x1xf32>
    %18 = vector.extract_strided_slice %12 {offsets = [0, 0], sizes = [7, 1], strides = [1, 1]} : vector<8x1xf32> to vector<7x1xf32>
    %cst_6 = arith.constant 1.000000e-16 : f32
    %19 = vector.broadcast %cst_6 : f32 to vector<7x1xf32>
    %20 = arith.maximumf %18, %19 : vector<7x1xf32>
    %21 = vector.extract_strided_slice %12 {offsets = [1, 0], sizes = [7, 1], strides = [1, 1]} : vector<8x1xf32> to vector<7x1xf32>
    %cst_7 = arith.constant 1.000000e-16 : f32
    %22 = vector.broadcast %cst_7 : f32 to vector<7x1xf32>
    %23 = arith.maximumf %21, %22 : vector<7x1xf32>
    %24 = arith.mulf %20, %23 : vector<7x1xf32>
    %25 = math.rsqrt %24 : vector<7x1xf32>
    %26 = arith.mulf %17, %25 : vector<7x1xf32>
    %cst_8 = arith.constant dense<0.000000e+00> : vector<1xf32>
    %27 = vector.multi_reduction <add>, %26, %cst_8 [0] : vector<7x1xf32> to vector<1xf32>
    %28 = vector.shape_cast %27 : vector<1xf32> to vector<1x1xf32>
    %cst_9 = arith.constant 7.000000e+00 : f32
    %29 = vector.broadcast %cst_9 : f32 to vector<1x1xf32>
    %30 = arith.divf %28, %29 : vector<1x1xf32>
    %c0_10 = arith.constant 0 : index
    %c0_11 = arith.constant 0 : index
    %31 = vector.load %arg4[%c0_10, %c0_11] : memref<1x1xf32, #tpu.memory_space<vmem>>, vector<1x1xf32>
    tpu.vector_store %arg4[%c0_10, %c0_11], %30 {strides = array<i32>} : memref<1x1xf32, #tpu.memory_space<vmem>>, vector<1x1xf32>,
    %c0_12 = arith.constant 0 : index
    %c0_13 = arith.constant 0 : index
    %32 = vector.load %arg2[%c0_12, %c0_13] : memref<224x128xf32, #tpu.memory_space<vmem>>, vector<32x96xf32>
    %c2 = arith.constant 2 : index
    %c0_14 = arith.constant 0 : index
    %33 = vector.load %arg1[%c2, %c0_14] : memref<24x128xf32, #tpu.memory_space<vmem>>, vector<1x96xf32>
    %c0_15 = arith.constant 0 : index
    %c96 = arith.constant 96 : index
    %34 = vector.load %arg2[%c0_15, %c96] : memref<224x128xf32, #tpu.memory_space<vmem>>, vector<32x32xf32>
    %c3 = arith.constant 3 : index
    %c0_16 = arith.constant 0 : index
    %35 = vector.load %arg1[%c3, %c0_16] : memref<24x128xf32, #tpu.memory_space<vmem>>, vector<1x32xf32>
    %cst_17 = arith.constant dense<0.000000e+00> : vector<8x96xf32>
    %36 = tpu.matmul %9, %32, %cst_17 {dimension_numbers = #tpu.dot_dimension_numbers<[1], [0], [0], [1], [0, 0, 1, 1], [], []>} : vector<8x32xf32>, vector<32x96xf32>, vector<8x96xf32> -> vector<8x96xf32>
    %37 = vector.broadcast %33 : vector<1x96xf32> to vector<8x96xf32>
    %38 = arith.addf %36, %37 : vector<8x96xf32>
    %39 = vector.extract_strided_slice %38 {offsets = [0, 0], sizes = [8, 8], strides = [1, 1]} : vector<8x96xf32> to vector<8x8xf32>
    %40 = vector.extract_strided_slice %38 {offsets = [0, 32], sizes = [8, 8], strides = [1, 1]} : vector<8x96xf32> to vector<8x8xf32>
    %41 = vector.extract_strided_slice %38 {offsets = [0, 64], sizes = [8, 8], strides = [1, 1]} : vector<8x96xf32> to vector<8x8xf32>
    %cst_18 = arith.constant dense<0.000000e+00> : vector<8x8xf32>
    %42 = tpu.matmul %39, %40, %cst_18 {dimension_numbers = #tpu.dot_dimension_numbers<[1], [1], [0], [0], [0, 0, 1, 0], [], []>} : vector<8x8xf32>, vector<8x8xf32>, vector<8x8xf32> -> vector<8x8xf32>
    %cst_19 = arith.constant 0.353553385 : f32
    %43 = vector.broadcast %cst_19 : f32 to vector<8x8xf32>
    %44 = arith.mulf %42, %43 : vector<8x8xf32>
    %cst_20 = arith.constant dense<0xFF800000> : vector<8xf32>
    %45 = vector.multi_reduction <maximumf>, %44, %cst_20 [1] : vector<8x8xf32> to vector<8xf32>
    %46 = vector.shape_cast %45 : vector<8xf32> to vector<8x1xf32>
    %47 = vector.broadcast %46 : vector<8x1xf32> to vector<8x8xf32>
    %48 = arith.subf %44, %47 : vector<8x8xf32>
    %49 = math.exp %48 : vector<8x8xf32>
    %cst_21 = arith.constant dense<0.000000e+00> : vector<8xf32>
    %50 = vector.multi_reduction <add>, %49, %cst_21 [1] : vector<8x8xf32> to vector<8xf32>
    %51 = vector.shape_cast %50 : vector<8xf32> to vector<8x1xf32>
    %52 = tpu.reciprocal %51 {approx = true} : vector<8x1xf32> -> vector<8x1xf32>
    %53 = vector.broadcast %52 : vector<8x1xf32> to vector<8x8xf32>
    %54 = arith.mulf %49, %53 : vector<8x8xf32>
    %cst_22 = arith.constant dense<0.000000e+00> : vector<8x8xf32>
    %55 = tpu.matmul %54, %41, %cst_22 {dimension_numbers = #tpu.dot_dimension_numbers<[1], [0], [0], [1], [0, 0, 1, 1], [], []>} : vector<8x8xf32>, vector<8x8xf32>, vector<8x8xf32> -> vector<8x8xf32>
    %56 = vector.extract_strided_slice %38 {offsets = [0, 8], sizes = [8, 8], strides = [1, 1]} : vector<8x96xf32> to vector<8x8xf32>
    %57 = vector.extract_strided_slice %38 {offsets = [0, 40], sizes = [8, 8], strides = [1, 1]} : vector<8x96xf32> to vector<8x8xf32>
    %58 = vector.extract_strided_slice %38 {offsets = [0, 72], sizes = [8, 8], strides = [1, 1]} : vector<8x96xf32> to vector<8x8xf32>
    %cst_23 = arith.constant dense<0.000000e+00> : vector<8x8xf32>
    %59 = tpu.matmul %56, %57, %cst_23 {dimension_numbers = #tpu.dot_dimension_numbers<[1], [1], [0], [0], [0, 0, 1, 0], [], []>} : vector<8x8xf32>, vector<8x8xf32>, vector<8x8xf32> -> vector<8x8xf32>
    %cst_24 = arith.constant 0.353553385 : f32
    %60 = vector.broadcast %cst_24 : f32 to vector<8x8xf32>
    %61 = arith.mulf %59, %60 : vector<8x8xf32>
    %cst_25 = arith.constant dense<0xFF800000> : vector<8xf32>
    %62 = vector.multi_reduction <maximumf>, %61, %cst_25 [1] : vector<8x8xf32> to vector<8xf32>
    %63 = vector.shape_cast %62 : vector<8xf32> to vector<8x1xf32>
    %64 = vector.broadcast %63 : vector<8x1xf32> to vector<8x8xf32>
    %65 = arith.subf %61, %64 : vector<8x8xf32>
    %66 = math.exp %65 : vector<8x8xf32>
    %cst_26 = arith.constant dense<0.000000e+00> : vector<8xf32>
    %67 = vector.multi_reduction <add>, %66, %cst_26 [1] : vector<8x8xf32> to vector<8xf32>
    %68 = vector.shape_cast %67 : vector<8xf32> to vector<8x1xf32>
    %69 = tpu.reciprocal %68 {approx = true} : vector<8x1xf32> -> vector<8x1xf32>
    %70 = vector.broadcast %69 : vector<8x1xf32> to vector<8x8xf32>
    %71 = arith.mulf %66, %70 : vector<8x8xf32>
    %cst_27 = arith.constant dense<0.000000e+00> : vector<8x8xf32>
    %72 = tpu.matmul %71, %58, %cst_27 {dimension_numbers = #tpu.dot_dimension_numbers<[1], [0], [0], [1], [0, 0, 1, 1], [], []>} : vector<8x8xf32>, vector<8x8xf32>, vector<8x8xf32> -> vector<8x8xf32>
    %73 = vector.extract_strided_slice %38 {offsets = [0, 16], sizes = [8, 8], strides = [1, 1]} : vector<8x96xf32> to vector<8x8xf32>
    %74 = vector.extract_strided_slice %38 {offsets = [0, 48], sizes = [8, 8], strides = [1, 1]} : vector<8x96xf32> to vector<8x8xf32>
    %75 = vector.extract_strided_slice %38 {offsets = [0, 80], sizes = [8, 8], strides = [1, 1]} : vector<8x96xf32> to vector<8x8xf32>
    %cst_28 = arith.constant dense<0.000000e+00> : vector<8x8xf32>
    %76 = tpu.matmul %73, %74, %cst_28 {dimension_numbers = #tpu.dot_dimension_numbers<[1], [1], [0], [0], [0, 0, 1, 0], [], []>} : vector<8x8xf32>, vector<8x8xf32>, vector<8x8xf32> -> vector<8x8xf32>
    %cst_29 = arith.constant 0.353553385 : f32
    %77 = vector.broadcast %cst_29 : f32 to vector<8x8xf32>
    %78 = arith.mulf %76, %77 : vector<8x8xf32>
    %cst_30 = arith.constant dense<0xFF800000> : vector<8xf32>
    %79 = vector.multi_reduction <maximumf>, %78, %cst_30 [1] : vector<8x8xf32> to vector<8xf32>
    %80 = vector.shape_cast %79 : vector<8xf32> to vector<8x1xf32>
    %81 = vector.broadcast %80 : vector<8x1xf32> to vector<8x8xf32>
    %82 = arith.subf %78, %81 : vector<8x8xf32>
    %83 = math.exp %82 : vector<8x8xf32>
    %cst_31 = arith.constant dense<0.000000e+00> : vector<8xf32>
    %84 = vector.multi_reduction <add>, %83, %cst_31 [1] : vector<8x8xf32> to vector<8xf32>
    %85 = vector.shape_cast %84 : vector<8xf32> to vector<8x1xf32>
    %86 = tpu.reciprocal %85 {approx = true} : vector<8x1xf32> -> vector<8x1xf32>
    %87 = vector.broadcast %86 : vector<8x1xf32> to vector<8x8xf32>
    %88 = arith.mulf %83, %87 : vector<8x8xf32>
    %cst_32 = arith.constant dense<0.000000e+00> : vector<8x8xf32>
    %89 = tpu.matmul %88, %75, %cst_32 {dimension_numbers = #tpu.dot_dimension_numbers<[1], [0], [0], [1], [0, 0, 1, 1], [], []>} : vector<8x8xf32>, vector<8x8xf32>, vector<8x8xf32> -> vector<8x8xf32>
    %90 = vector.extract_strided_slice %38 {offsets = [0, 24], sizes = [8, 8], strides = [1, 1]} : vector<8x96xf32> to vector<8x8xf32>
    %91 = vector.extract_strided_slice %38 {offsets = [0, 56], sizes = [8, 8], strides = [1, 1]} : vector<8x96xf32> to vector<8x8xf32>
    %92 = vector.extract_strided_slice %38 {offsets = [0, 88], sizes = [8, 8], strides = [1, 1]} : vector<8x96xf32> to vector<8x8xf32>
    %cst_33 = arith.constant dense<0.000000e+00> : vector<8x8xf32>
    %93 = tpu.matmul %90, %91, %cst_33 {dimension_numbers = #tpu.dot_dimension_numbers<[1], [1], [0], [0], [0, 0, 1, 0], [], []>} : vector<8x8xf32>, vector<8x8xf32>, vector<8x8xf32> -> vector<8x8xf32>
    %cst_34 = arith.constant 0.353553385 : f32
    %94 = vector.broadcast %cst_34 : f32 to vector<8x8xf32>
    %95 = arith.mulf %93, %94 : vector<8x8xf32>
    %cst_35 = arith.constant dense<0xFF800000> : vector<8xf32>
    %96 = vector.multi_reduction <maximumf>, %95, %cst_35 [1] : vector<8x8xf32> to vector<8xf32>
    %97 = vector.shape_cast %96 : vector<8xf32> to vector<8x1xf32>
    %98 = vector.broadcast %97 : vector<8x1xf32> to vector<8x8xf32>
    %99 = arith.subf %95, %98 : vector<8x8xf32>
    %100 = math.exp %99 : vector<8x8xf32>
    %cst_36 = arith.constant dense<0.000000e+00> : vector<8xf32>
    %101 = vector.multi_reduction <add>, %100, %cst_36 [1] : vector<8x8xf32> to vector<8xf32>
    %102 = vector.shape_cast %101 : vector<8xf32> to vector<8x1xf32>
    %103 = tpu.reciprocal %102 {approx = true} : vector<8x1xf32> -> vector<8x1xf32>
    %104 = vector.broadcast %103 : vector<8x1xf32> to vector<8x8xf32>
    %105 = arith.mulf %100, %104 : vector<8x8xf32>
    %cst_37 = arith.constant dense<0.000000e+00> : vector<8x8xf32>
    %106 = tpu.matmul %105, %92, %cst_37 {dimension_numbers = #tpu.dot_dimension_numbers<[1], [0], [0], [1], [0, 0, 1, 1], [], []>} : vector<8x8xf32>, vector<8x8xf32>, vector<8x8xf32> -> vector<8x8xf32>
    %107 = tpu.concatenate %55, %72, %89, %106 in 1 : vector<8x8xf32>, vector<8x8xf32>, vector<8x8xf32>, vector<8x8xf32> -> vector<8x32xf32>
    %cst_38 = arith.constant dense<0.000000e+00> : vector<8x32xf32>
    %108 = tpu.matmul %107, %34, %cst_38 {dimension_numbers = #tpu.dot_dimension_numbers<[1], [0], [0], [1], [0, 0, 1, 1], [], []>} : vector<8x32xf32>, vector<32x32xf32>, vector<8x32xf32> -> vector<8x32xf32>
    %109 = vector.broadcast %35 : vector<1x32xf32> to vector<8x32xf32>
    %110 = arith.addf %108, %109 : vector<8x32xf32>
    %111 = arith.addf %9, %110 : vector<8x32xf32>
    %c4 = arith.constant 4 : index
    %c0_39 = arith.constant 0 : index
    %112 = vector.load %arg1[%c4, %c0_39] : memref<24x128xf32, #tpu.memory_space<vmem>>, vector<1x32xf32>
    %c5 = arith.constant 5 : index
    %c0_40 = arith.constant 0 : index
    %113 = vector.load %arg1[%c5, %c0_40] : memref<24x128xf32, #tpu.memory_space<vmem>>, vector<1x32xf32>
    %cst_41 = arith.constant dense<0.000000e+00> : vector<8xf32>
    %114 = vector.multi_reduction <add>, %111, %cst_41 [1] : vector<8x32xf32> to vector<8xf32>
    %115 = vector.shape_cast %114 : vector<8xf32> to vector<8x1xf32>
    %cst_42 = arith.constant 3.200000e+01 : f32
    %116 = vector.broadcast %cst_42 : f32 to vector<8x1xf32>
    %117 = arith.divf %115, %116 : vector<8x1xf32>
    %118 = vector.broadcast %117 : vector<8x1xf32> to vector<8x32xf32>
    %119 = arith.subf %111, %118 : vector<8x32xf32>
    %120 = arith.mulf %119, %119 : vector<8x32xf32>
    %cst_43 = arith.constant dense<0.000000e+00> : vector<8xf32>
    %121 = vector.multi_reduction <add>, %120, %cst_43 [1] : vector<8x32xf32> to vector<8xf32>
    %122 = vector.shape_cast %121 : vector<8xf32> to vector<8x1xf32>
    %cst_44 = arith.constant 3.200000e+01 : f32
    %123 = vector.broadcast %cst_44 : f32 to vector<8x1xf32>
    %124 = arith.divf %122, %123 : vector<8x1xf32>
    %125 = vector.broadcast %117 : vector<8x1xf32> to vector<8x32xf32>
    %126 = arith.subf %111, %125 : vector<8x32xf32>
    %cst_45 = arith.constant 9.99999974E-6 : f32
    %127 = vector.broadcast %cst_45 : f32 to vector<8x1xf32>
    %128 = arith.addf %124, %127 : vector<8x1xf32>
    %129 = math.rsqrt %128 : vector<8x1xf32>
    %130 = vector.broadcast %129 : vector<8x1xf32> to vector<8x32xf32>
    %131 = arith.mulf %126, %130 : vector<8x32xf32>
    %132 = vector.broadcast %112 : vector<1x32xf32> to vector<8x32xf32>
    %133 = arith.mulf %131, %132 : vector<8x32xf32>
    %134 = vector.broadcast %113 : vector<1x32xf32> to vector<8x32xf32>
    %135 = arith.addf %133, %134 : vector<8x32xf32>
    %c32_46 = arith.constant 32 : index
    %c0_47 = arith.constant 0 : index
    %136 = vector.load %arg2[%c32_46, %c0_47] : memref<224x128xf32, #tpu.memory_space<vmem>>, vector<32x64xf32>
    %cst_48 = arith.constant dense<0.000000e+00> : vector<8x64xf32>
    %137 = tpu.matmul %135, %136, %cst_48 {dimension_numbers = #tpu.dot_dimension_numbers<[1], [0], [0], [1], [0, 0, 1, 1], [], []>} : vector<8x32xf32>, vector<32x64xf32>, vector<8x64xf32> -> vector<8x64xf32>
    %c6 = arith.constant 6 : index
    %c0_49 = arith.constant 0 : index
    %138 = vector.load %arg1[%c6, %c0_49] : memref<24x128xf32, #tpu.memory_space<vmem>>, vector<1x64xf32>
    %139 = vector.broadcast %138 : vector<1x64xf32> to vector<8x64xf32>
    %140 = arith.addf %137, %139 : vector<8x64xf32>
    %cst_50 = arith.constant 0.000000e+00 : f32
    %141 = vector.broadcast %cst_50 : f32 to vector<8x64xf32>
    %142 = arith.maximumf %140, %141 : vector<8x64xf32>
    %c32_51 = arith.constant 32 : index
    %c64 = arith.constant 64 : index
    %143 = vector.load %arg2[%c32_51, %c64] : memref<224x128xf32, #tpu.memory_space<vmem>>, vector<64x32xf32>
    %cst_52 = arith.constant dense<0.000000e+00> : vector<8x32xf32>
    %144 = tpu.matmul %142, %143, %cst_52 {dimension_numbers = #tpu.dot_dimension_numbers<[1], [0], [0], [1], [0, 0, 1, 1], [], []>} : vector<8x64xf32>, vector<64x32xf32>, vector<8x32xf32> -> vector<8x32xf32>
    %c7 = arith.constant 7 : index
    %c0_53 = arith.constant 0 : index
    %145 = vector.load %arg1[%c7, %c0_53] : memref<24x128xf32, #tpu.memory_space<vmem>>, vector<1x32xf32>
    %146 = vector.broadcast %145 : vector<1x32xf32> to vector<8x32xf32>
    %147 = arith.addf %144, %146 : vector<8x32xf32>
    %148 = arith.addf %135, %147 : vector<8x32xf32>
    %c8 = arith.constant 8 : index
    %c0_54 = arith.constant 0 : index
    %149 = vector.load %arg1[%c8, %c0_54] : memref<24x128xf32, #tpu.memory_space<vmem>>, vector<1x32xf32>
    %c9 = arith.constant 9 : index
    %c0_55 = arith.constant 0 : index
    %150 = vector.load %arg1[%c9, %c0_55] : memref<24x128xf32, #tpu.memory_space<vmem>>, vector<1x32xf32>
    %cst_56 = arith.constant dense<0.000000e+00> : vector<8xf32>
    %151 = vector.multi_reduction <add>, %148, %cst_56 [1] : vector<8x32xf32> to vector<8xf32>
    %152 = vector.shape_cast %151 : vector<8xf32> to vector<8x1xf32>
    %cst_57 = arith.constant 3.200000e+01 : f32
    %153 = vector.broadcast %cst_57 : f32 to vector<8x1xf32>
    %154 = arith.divf %152, %153 : vector<8x1xf32>
    %155 = vector.broadcast %154 : vector<8x1xf32> to vector<8x32xf32>
    %156 = arith.subf %148, %155 : vector<8x32xf32>
    %157 = arith.mulf %156, %156 : vector<8x32xf32>
    %cst_58 = arith.constant dense<0.000000e+00> : vector<8xf32>
    %158 = vector.multi_reduction <add>, %157, %cst_58 [1] : vector<8x32xf32> to vector<8xf32>
    %159 = vector.shape_cast %158 : vector<8xf32> to vector<8x1xf32>
    %cst_59 = arith.constant 3.200000e+01 : f32
    %160 = vector.broadcast %cst_59 : f32 to vector<8x1xf32>
    %161 = arith.divf %159, %160 : vector<8x1xf32>
    %162 = vector.broadcast %154 : vector<8x1xf32> to vector<8x32xf32>
    %163 = arith.subf %148, %162 : vector<8x32xf32>
    %cst_60 = arith.constant 9.99999974E-6 : f32
    %164 = vector.broadcast %cst_60 : f32 to vector<8x1xf32>
    %165 = arith.addf %161, %164 : vector<8x1xf32>
    %166 = math.rsqrt %165 : vector<8x1xf32>
    %167 = vector.broadcast %166 : vector<8x1xf32> to vector<8x32xf32>
    %168 = arith.mulf %163, %167 : vector<8x32xf32>
    %169 = vector.broadcast %149 : vector<1x32xf32> to vector<8x32xf32>
    %170 = arith.mulf %168, %169 : vector<8x32xf32>
    %171 = vector.broadcast %150 : vector<1x32xf32> to vector<8x32xf32>
    %172 = arith.addf %170, %171 : vector<8x32xf32>
    %c96_61 = arith.constant 96 : index
    %c0_62 = arith.constant 0 : index
    %173 = vector.load %arg2[%c96_61, %c0_62] : memref<224x128xf32, #tpu.memory_space<vmem>>, vector<32x96xf32>
    %c10 = arith.constant 10 : index
    %c0_63 = arith.constant 0 : index
    %174 = vector.load %arg1[%c10, %c0_63] : memref<24x128xf32, #tpu.memory_space<vmem>>, vector<1x96xf32>
    %c96_64 = arith.constant 96 : index
    %c96_65 = arith.constant 96 : index
    %175 = vector.load %arg2[%c96_64, %c96_65] : memref<224x128xf32, #tpu.memory_space<vmem>>, vector<32x32xf32>
    %c11 = arith.constant 11 : index
    %c0_66 = arith.constant 0 : index
    %176 = vector.load %arg1[%c11, %c0_66] : memref<24x128xf32, #tpu.memory_space<vmem>>, vector<1x32xf32>
    %cst_67 = arith.constant dense<0.000000e+00> : vector<8x96xf32>
    %177 = tpu.matmul %172, %173, %cst_67 {dimension_numbers = #tpu.dot_dimension_numbers<[1], [0], [0], [1], [0, 0, 1, 1], [], []>} : vector<8x32xf32>, vector<32x96xf32>, vector<8x96xf32> -> vector<8x96xf32>
    %178 = vector.broadcast %174 : vector<1x96xf32> to vector<8x96xf32>
    %179 = arith.addf %177, %178 : vector<8x96xf32>
    %180 = vector.extract_strided_slice %179 {offsets = [0, 0], sizes = [8, 8], strides = [1, 1]} : vector<8x96xf32> to vector<8x8xf32>
    %181 = vector.extract_strided_slice %179 {offsets = [0, 32], sizes = [8, 8], strides = [1, 1]} : vector<8x96xf32> to vector<8x8xf32>
    %182 = vector.extract_strided_slice %179 {offsets = [0, 64], sizes = [8, 8], strides = [1, 1]} : vector<8x96xf32> to vector<8x8xf32>
    %cst_68 = arith.constant dense<0.000000e+00> : vector<8x8xf32>
    %183 = tpu.matmul %180, %181, %cst_68 {dimension_numbers = #tpu.dot_dimension_numbers<[1], [1], [0], [0], [0, 0, 1, 0], [], []>} : vector<8x8xf32>, vector<8x8xf32>, vector<8x8xf32> -> vector<8x8xf32>
    %cst_69 = arith.constant 0.353553385 : f32
    %184 = vector.broadcast %cst_69 : f32 to vector<8x8xf32>
    %185 = arith.mulf %183, %184 : vector<8x8xf32>
    %cst_70 = arith.constant dense<0xFF800000> : vector<8xf32>
    %186 = vector.multi_reduction <maximumf>, %185, %cst_70 [1] : vector<8x8xf32> to vector<8xf32>
    %187 = vector.shape_cast %186 : vector<8xf32> to vector<8x1xf32>
    %188 = vector.broadcast %187 : vector<8x1xf32> to vector<8x8xf32>
    %189 = arith.subf %185, %188 : vector<8x8xf32>
    %190 = math.exp %189 : vector<8x8xf32>
    %cst_71 = arith.constant dense<0.000000e+00> : vector<8xf32>
    %191 = vector.multi_reduction <add>, %190, %cst_71 [1] : vector<8x8xf32> to vector<8xf32>
    %192 = vector.shape_cast %191 : vector<8xf32> to vector<8x1xf32>
    %193 = tpu.reciprocal %192 {approx = true} : vector<8x1xf32> -> vector<8x1xf32>
    %194 = vector.broadcast %193 : vector<8x1xf32> to vector<8x8xf32>
    %195 = arith.mulf %190, %194 : vector<8x8xf32>
    %cst_72 = arith.constant dense<0.000000e+00> : vector<8x8xf32>
    %196 = tpu.matmul %195, %182, %cst_72 {dimension_numbers = #tpu.dot_dimension_numbers<[1], [0], [0], [1], [0, 0, 1, 1], [], []>} : vector<8x8xf32>, vector<8x8xf32>, vector<8x8xf32> -> vector<8x8xf32>
    %197 = vector.extract_strided_slice %179 {offsets = [0, 8], sizes = [8, 8], strides = [1, 1]} : vector<8x96xf32> to vector<8x8xf32>
    %198 = vector.extract_strided_slice %179 {offsets = [0, 40], sizes = [8, 8], strides = [1, 1]} : vector<8x96xf32> to vector<8x8xf32>
    %199 = vector.extract_strided_slice %179 {offsets = [0, 72], sizes = [8, 8], strides = [1, 1]} : vector<8x96xf32> to vector<8x8xf32>
    %cst_73 = arith.constant dense<0.000000e+00> : vector<8x8xf32>
    %200 = tpu.matmul %197, %198, %cst_73 {dimension_numbers = #tpu.dot_dimension_numbers<[1], [1], [0], [0], [0, 0, 1, 0], [], []>} : vector<8x8xf32>, vector<8x8xf32>, vector<8x8xf32> -> vector<8x8xf32>
    %cst_74 = arith.constant 0.353553385 : f32
    %201 = vector.broadcast %cst_74 : f32 to vector<8x8xf32>
    %202 = arith.mulf %200, %201 : vector<8x8xf32>
    %cst_75 = arith.constant dense<0xFF800000> : vector<8xf32>
    %203 = vector.multi_reduction <maximumf>, %202, %cst_75 [1] : vector<8x8xf32> to vector<8xf32>
    %204 = vector.shape_cast %203 : vector<8xf32> to vector<8x1xf32>
    %205 = vector.broadcast %204 : vector<8x1xf32> to vector<8x8xf32>
    %206 = arith.subf %202, %205 : vector<8x8xf32>
    %207 = math.exp %206 : vector<8x8xf32>
    %cst_76 = arith.constant dense<0.000000e+00> : vector<8xf32>
    %208 = vector.multi_reduction <add>, %207, %cst_76 [1] : vector<8x8xf32> to vector<8xf32>
    %209 = vector.shape_cast %208 : vector<8xf32> to vector<8x1xf32>
    %210 = tpu.reciprocal %209 {approx = true} : vector<8x1xf32> -> vector<8x1xf32>
    %211 = vector.broadcast %210 : vector<8x1xf32> to vector<8x8xf32>
    %212 = arith.mulf %207, %211 : vector<8x8xf32>
    %cst_77 = arith.constant dense<0.000000e+00> : vector<8x8xf32>
    %213 = tpu.matmul %212, %199, %cst_77 {dimension_numbers = #tpu.dot_dimension_numbers<[1], [0], [0], [1], [0, 0, 1, 1], [], []>} : vector<8x8xf32>, vector<8x8xf32>, vector<8x8xf32> -> vector<8x8xf32>
    %214 = vector.extract_strided_slice %179 {offsets = [0, 16], sizes = [8, 8], strides = [1, 1]} : vector<8x96xf32> to vector<8x8xf32>
    %215 = vector.extract_strided_slice %179 {offsets = [0, 48], sizes = [8, 8], strides = [1, 1]} : vector<8x96xf32> to vector<8x8xf32>
    %216 = vector.extract_strided_slice %179 {offsets = [0, 80], sizes = [8, 8], strides = [1, 1]} : vector<8x96xf32> to vector<8x8xf32>
    %cst_78 = arith.constant dense<0.000000e+00> : vector<8x8xf32>
    %217 = tpu.matmul %214, %215, %cst_78 {dimension_numbers = #tpu.dot_dimension_numbers<[1], [1], [0], [0], [0, 0, 1, 0], [], []>} : vector<8x8xf32>, vector<8x8xf32>, vector<8x8xf32> -> vector<8x8xf32>
    %cst_79 = arith.constant 0.353553385 : f32
    %218 = vector.broadcast %cst_79 : f32 to vector<8x8xf32>
    %219 = arith.mulf %217, %218 : vector<8x8xf32>
    %cst_80 = arith.constant dense<0xFF800000> : vector<8xf32>
    %220 = vector.multi_reduction <maximumf>, %219, %cst_80 [1] : vector<8x8xf32> to vector<8xf32>
    %221 = vector.shape_cast %220 : vector<8xf32> to vector<8x1xf32>
    %222 = vector.broadcast %221 : vector<8x1xf32> to vector<8x8xf32>
    %223 = arith.subf %219, %222 : vector<8x8xf32>
    %224 = math.exp %223 : vector<8x8xf32>
    %cst_81 = arith.constant dense<0.000000e+00> : vector<8xf32>
    %225 = vector.multi_reduction <add>, %224, %cst_81 [1] : vector<8x8xf32> to vector<8xf32>
    %226 = vector.shape_cast %225 : vector<8xf32> to vector<8x1xf32>
    %227 = tpu.reciprocal %226 {approx = true} : vector<8x1xf32> -> vector<8x1xf32>
    %228 = vector.broadcast %227 : vector<8x1xf32> to vector<8x8xf32>
    %229 = arith.mulf %224, %228 : vector<8x8xf32>
    %cst_82 = arith.constant dense<0.000000e+00> : vector<8x8xf32>
    %230 = tpu.matmul %229, %216, %cst_82 {dimension_numbers = #tpu.dot_dimension_numbers<[1], [0], [0], [1], [0, 0, 1, 1], [], []>} : vector<8x8xf32>, vector<8x8xf32>, vector<8x8xf32> -> vector<8x8xf32>
    %231 = vector.extract_strided_slice %179 {offsets = [0, 24], sizes = [8, 8], strides = [1, 1]} : vector<8x96xf32> to vector<8x8xf32>
    %232 = vector.extract_strided_slice %179 {offsets = [0, 56], sizes = [8, 8], strides = [1, 1]} : vector<8x96xf32> to vector<8x8xf32>
    %233 = vector.extract_strided_slice %179 {offsets = [0, 88], sizes = [8, 8], strides = [1, 1]} : vector<8x96xf32> to vector<8x8xf32>
    %cst_83 = arith.constant dense<0.000000e+00> : vector<8x8xf32>
    %234 = tpu.matmul %231, %232, %cst_83 {dimension_numbers = #tpu.dot_dimension_numbers<[1], [1], [0], [0], [0, 0, 1, 0], [], []>} : vector<8x8xf32>, vector<8x8xf32>, vector<8x8xf32> -> vector<8x8xf32>
    %cst_84 = arith.constant 0.353553385 : f32
    %235 = vector.broadcast %cst_84 : f32 to vector<8x8xf32>
    %236 = arith.mulf %234, %235 : vector<8x8xf32>
    %cst_85 = arith.constant dense<0xFF800000> : vector<8xf32>
    %237 = vector.multi_reduction <maximumf>, %236, %cst_85 [1] : vector<8x8xf32> to vector<8xf32>
    %238 = vector.shape_cast %237 : vector<8xf32> to vector<8x1xf32>
    %239 = vector.broadcast %238 : vector<8x1xf32> to vector<8x8xf32>
    %240 = arith.subf %236, %239 : vector<8x8xf32>
    %241 = math.exp %240 : vector<8x8xf32>
    %cst_86 = arith.constant dense<0.000000e+00> : vector<8xf32>
    %242 = vector.multi_reduction <add>, %241, %cst_86 [1] : vector<8x8xf32> to vector<8xf32>
    %243 = vector.shape_cast %242 : vector<8xf32> to vector<8x1xf32>
    %244 = tpu.reciprocal %243 {approx = true} : vector<8x1xf32> -> vector<8x1xf32>
    %245 = vector.broadcast %244 : vector<8x1xf32> to vector<8x8xf32>
    %246 = arith.mulf %241, %245 : vector<8x8xf32>
    %cst_87 = arith.constant dense<0.000000e+00> : vector<8x8xf32>
    %247 = tpu.matmul %246, %233, %cst_87 {dimension_numbers = #tpu.dot_dimension_numbers<[1], [0], [0], [1], [0, 0, 1, 1], [], []>} : vector<8x8xf32>, vector<8x8xf32>, vector<8x8xf32> -> vector<8x8xf32>
    %248 = tpu.concatenate %196, %213, %230, %247 in 1 : vector<8x8xf32>, vector<8x8xf32>, vector<8x8xf32>, vector<8x8xf32> -> vector<8x32xf32>
    %cst_88 = arith.constant dense<0.000000e+00> : vector<8x32xf32>
    %249 = tpu.matmul %248, %175, %cst_88 {dimension_numbers = #tpu.dot_dimension_numbers<[1], [0], [0], [1], [0, 0, 1, 1], [], []>} : vector<8x32xf32>, vector<32x32xf32>, vector<8x32xf32> -> vector<8x32xf32>
    %250 = vector.broadcast %176 : vector<1x32xf32> to vector<8x32xf32>
    %251 = arith.addf %249, %250 : vector<8x32xf32>
    %252 = arith.addf %172, %251 : vector<8x32xf32>
    %c12 = arith.constant 12 : index
    %c0_89 = arith.constant 0 : index
    %253 = vector.load %arg1[%c12, %c0_89] : memref<24x128xf32, #tpu.memory_space<vmem>>, vector<1x32xf32>
    %c13 = arith.constant 13 : index
    %c0_90 = arith.constant 0 : index
    %254 = vector.load %arg1[%c13, %c0_90] : memref<24x128xf32, #tpu.memory_space<vmem>>, vector<1x32xf32>
    %cst_91 = arith.constant dense<0.000000e+00> : vector<8xf32>
    %255 = vector.multi_reduction <add>, %252, %cst_91 [1] : vector<8x32xf32> to vector<8xf32>
    %256 = vector.shape_cast %255 : vector<8xf32> to vector<8x1xf32>
    %cst_92 = arith.constant 3.200000e+01 : f32
    %257 = vector.broadcast %cst_92 : f32 to vector<8x1xf32>
    %258 = arith.divf %256, %257 : vector<8x1xf32>
    %259 = vector.broadcast %258 : vector<8x1xf32> to vector<8x32xf32>
    %260 = arith.subf %252, %259 : vector<8x32xf32>
    %261 = arith.mulf %260, %260 : vector<8x32xf32>
    %cst_93 = arith.constant dense<0.000000e+00> : vector<8xf32>
    %262 = vector.multi_reduction <add>, %261, %cst_93 [1] : vector<8x32xf32> to vector<8xf32>
    %263 = vector.shape_cast %262 : vector<8xf32> to vector<8x1xf32>
    %cst_94 = arith.constant 3.200000e+01 : f32
    %264 = vector.broadcast %cst_94 : f32 to vector<8x1xf32>
    %265 = arith.divf %263, %264 : vector<8x1xf32>
    %266 = vector.broadcast %258 : vector<8x1xf32> to vector<8x32xf32>
    %267 = arith.subf %252, %266 : vector<8x32xf32>
    %cst_95 = arith.constant 9.99999974E-6 : f32
    %268 = vector.broadcast %cst_95 : f32 to vector<8x1xf32>
    %269 = arith.addf %265, %268 : vector<8x1xf32>
    %270 = math.rsqrt %269 : vector<8x1xf32>
    %271 = vector.broadcast %270 : vector<8x1xf32> to vector<8x32xf32>
    %272 = arith.mulf %267, %271 : vector<8x32xf32>
    %273 = vector.broadcast %253 : vector<1x32xf32> to vector<8x32xf32>
    %274 = arith.mulf %272, %273 : vector<8x32xf32>
    %275 = vector.broadcast %254 : vector<1x32xf32> to vector<8x32xf32>
    %276 = arith.addf %274, %275 : vector<8x32xf32>
    %c128 = arith.constant 128 : index
    %c0_96 = arith.constant 0 : index
    %277 = vector.load %arg2[%c128, %c0_96] : memref<224x128xf32, #tpu.memory_space<vmem>>, vector<32x64xf32>
    %cst_97 = arith.constant dense<0.000000e+00> : vector<8x64xf32>
    %278 = tpu.matmul %276, %277, %cst_97 {dimension_numbers = #tpu.dot_dimension_numbers<[1], [0], [0], [1], [0, 0, 1, 1], [], []>} : vector<8x32xf32>, vector<32x64xf32>, vector<8x64xf32> -> vector<8x64xf32>
    %c14 = arith.constant 14 : index
    %c0_98 = arith.constant 0 : index
    %279 = vector.load %arg1[%c14, %c0_98] : memref<24x128xf32, #tpu.memory_space<vmem>>, vector<1x64xf32>
    %280 = vector.broadcast %279 : vector<1x64xf32> to vector<8x64xf32>
    %281 = arith.addf %278, %280 : vector<8x64xf32>
    %cst_99 = arith.constant 0.000000e+00 : f32
    %282 = vector.broadcast %cst_99 : f32 to vector<8x64xf32>
    %283 = arith.maximumf %281, %282 : vector<8x64xf32>
    %c128_100 = arith.constant 128 : index
    %c64_101 = arith.constant 64 : index
    %284 = vector.load %arg2[%c128_100, %c64_101] : memref<224x128xf32, #tpu.memory_space<vmem>>, vector<64x32xf32>
    %cst_102 = arith.constant dense<0.000000e+00> : vector<8x32xf32>
    %285 = tpu.matmul %283, %284, %cst_102 {dimension_numbers = #tpu.dot_dimension_numbers<[1], [0], [0], [1], [0, 0, 1, 1], [], []>} : vector<8x64xf32>, vector<64x32xf32>, vector<8x32xf32> -> vector<8x32xf32>
    %c15 = arith.constant 15 : index
    %c0_103 = arith.constant 0 : index
    %286 = vector.load %arg1[%c15, %c0_103] : memref<24x128xf32, #tpu.memory_space<vmem>>, vector<1x32xf32>
    %287 = vector.broadcast %286 : vector<1x32xf32> to vector<8x32xf32>
    %288 = arith.addf %285, %287 : vector<8x32xf32>
    %289 = arith.addf %276, %288 : vector<8x32xf32>
    %c16 = arith.constant 16 : index
    %c0_104 = arith.constant 0 : index
    %290 = vector.load %arg1[%c16, %c0_104] : memref<24x128xf32, #tpu.memory_space<vmem>>, vector<1x32xf32>
    %c17 = arith.constant 17 : index
    %c0_105 = arith.constant 0 : index
    %291 = vector.load %arg1[%c17, %c0_105] : memref<24x128xf32, #tpu.memory_space<vmem>>, vector<1x32xf32>
    %cst_106 = arith.constant dense<0.000000e+00> : vector<8xf32>
    %292 = vector.multi_reduction <add>, %289, %cst_106 [1] : vector<8x32xf32> to vector<8xf32>
    %293 = vector.shape_cast %292 : vector<8xf32> to vector<8x1xf32>
    %cst_107 = arith.constant 3.200000e+01 : f32
    %294 = vector.broadcast %cst_107 : f32 to vector<8x1xf32>
    %295 = arith.divf %293, %294 : vector<8x1xf32>
    %296 = vector.broadcast %295 : vector<8x1xf32> to vector<8x32xf32>
    %297 = arith.subf %289, %296 : vector<8x32xf32>
    %298 = arith.mulf %297, %297 : vector<8x32xf32>
    %cst_108 = arith.constant dense<0.000000e+00> : vector<8xf32>
    %299 = vector.multi_reduction <add>, %298, %cst_108 [1] : vector<8x32xf32> to vector<8xf32>
    %300 = vector.shape_cast %299 : vector<8xf32> to vector<8x1xf32>
    %cst_109 = arith.constant 3.200000e+01 : f32
    %301 = vector.broadcast %cst_109 : f32 to vector<8x1xf32>
    %302 = arith.divf %300, %301 : vector<8x1xf32>
    %303 = vector.broadcast %295 : vector<8x1xf32> to vector<8x32xf32>
    %304 = arith.subf %289, %303 : vector<8x32xf32>
    %cst_110 = arith.constant 9.99999974E-6 : f32
    %305 = vector.broadcast %cst_110 : f32 to vector<8x1xf32>
    %306 = arith.addf %302, %305 : vector<8x1xf32>
    %307 = math.rsqrt %306 : vector<8x1xf32>
    %308 = vector.broadcast %307 : vector<8x1xf32> to vector<8x32xf32>
    %309 = arith.mulf %304, %308 : vector<8x32xf32>
    %310 = vector.broadcast %290 : vector<1x32xf32> to vector<8x32xf32>
    %311 = arith.mulf %309, %310 : vector<8x32xf32>
    %312 = vector.broadcast %291 : vector<1x32xf32> to vector<8x32xf32>
    %313 = arith.addf %311, %312 : vector<8x32xf32>
    %c192 = arith.constant 192 : index
    %c0_111 = arith.constant 0 : index
    %314 = vector.load %arg2[%c192, %c0_111] : memref<224x128xf32, #tpu.memory_space<vmem>>, vector<32x96xf32>
    %c18 = arith.constant 18 : index
    %c0_112 = arith.constant 0 : index
    %315 = vector.load %arg1[%c18, %c0_112] : memref<24x128xf32, #tpu.memory_space<vmem>>, vector<1x96xf32>
    %c192_113 = arith.constant 192 : index
    %c96_114 = arith.constant 96 : index
    %316 = vector.load %arg2[%c192_113, %c96_114] : memref<224x128xf32, #tpu.memory_space<vmem>>, vector<32x32xf32>
    %c19 = arith.constant 19 : index
    %c0_115 = arith.constant 0 : index
    %317 = vector.load %arg1[%c19, %c0_115] : memref<24x128xf32, #tpu.memory_space<vmem>>, vector<1x32xf32>
    %cst_116 = arith.constant dense<0.000000e+00> : vector<8x96xf32>
    %318 = tpu.matmul %313, %314, %cst_116 {dimension_numbers = #tpu.dot_dimension_numbers<[1], [0], [0], [1], [0, 0, 1, 1], [], []>} : vector<8x32xf32>, vector<32x96xf32>, vector<8x96xf32> -> vector<8x96xf32>
    %319 = vector.broadcast %315 : vector<1x96xf32> to vector<8x96xf32>
    %320 = arith.addf %318, %319 : vector<8x96xf32>
    %321 = vector.extract_strided_slice %320 {offsets = [0, 0], sizes = [8, 8], strides = [1, 1]} : vector<8x96xf32> to vector<8x8xf32>
    %322 = vector.extract_strided_slice %320 {offsets = [0, 32], sizes = [8, 8], strides = [1, 1]} : vector<8x96xf32> to vector<8x8xf32>
    %323 = vector.extract_strided_slice %320 {offsets = [0, 64], sizes = [8, 8], strides = [1, 1]} : vector<8x96xf32> to vector<8x8xf32>
    %cst_117 = arith.constant dense<0.000000e+00> : vector<8x8xf32>
    %324 = tpu.matmul %321, %322, %cst_117 {dimension_numbers = #tpu.dot_dimension_numbers<[1], [1], [0], [0], [0, 0, 1, 0], [], []>} : vector<8x8xf32>, vector<8x8xf32>, vector<8x8xf32> -> vector<8x8xf32>
    %cst_118 = arith.constant 0.353553385 : f32
    %325 = vector.broadcast %cst_118 : f32 to vector<8x8xf32>
    %326 = arith.mulf %324, %325 : vector<8x8xf32>
    %cst_119 = arith.constant dense<0xFF800000> : vector<8xf32>
    %327 = vector.multi_reduction <maximumf>, %326, %cst_119 [1] : vector<8x8xf32> to vector<8xf32>
    %328 = vector.shape_cast %327 : vector<8xf32> to vector<8x1xf32>
    %329 = vector.broadcast %328 : vector<8x1xf32> to vector<8x8xf32>
    %330 = arith.subf %326, %329 : vector<8x8xf32>
    %331 = math.exp %330 : vector<8x8xf32>
    %cst_120 = arith.constant dense<0.000000e+00> : vector<8xf32>
    %332 = vector.multi_reduction <add>, %331, %cst_120 [1] : vector<8x8xf32> to vector<8xf32>
    %333 = vector.shape_cast %332 : vector<8xf32> to vector<8x1xf32>
    %334 = tpu.reciprocal %333 {approx = true} : vector<8x1xf32> -> vector<8x1xf32>
    %335 = vector.broadcast %334 : vector<8x1xf32> to vector<8x8xf32>
    %336 = arith.mulf %331, %335 : vector<8x8xf32>
    %cst_121 = arith.constant dense<0.000000e+00> : vector<8x8xf32>
    %337 = tpu.matmul %336, %323, %cst_121 {dimension_numbers = #tpu.dot_dimension_numbers<[1], [0], [0], [1], [0, 0, 1, 1], [], []>} : vector<8x8xf32>, vector<8x8xf32>, vector<8x8xf32> -> vector<8x8xf32>
    %338 = vector.extract_strided_slice %320 {offsets = [0, 8], sizes = [8, 8], strides = [1, 1]} : vector<8x96xf32> to vector<8x8xf32>
    %339 = vector.extract_strided_slice %320 {offsets = [0, 40], sizes = [8, 8], strides = [1, 1]} : vector<8x96xf32> to vector<8x8xf32>
    %340 = vector.extract_strided_slice %320 {offsets = [0, 72], sizes = [8, 8], strides = [1, 1]} : vector<8x96xf32> to vector<8x8xf32>
    %cst_122 = arith.constant dense<0.000000e+00> : vector<8x8xf32>
    %341 = tpu.matmul %338, %339, %cst_122 {dimension_numbers = #tpu.dot_dimension_numbers<[1], [1], [0], [0], [0, 0, 1, 0], [], []>} : vector<8x8xf32>, vector<8x8xf32>, vector<8x8xf32> -> vector<8x8xf32>
    %cst_123 = arith.constant 0.353553385 : f32
    %342 = vector.broadcast %cst_123 : f32 to vector<8x8xf32>
    %343 = arith.mulf %341, %342 : vector<8x8xf32>
    %cst_124 = arith.constant dense<0xFF800000> : vector<8xf32>
    %344 = vector.multi_reduction <maximumf>, %343, %cst_124 [1] : vector<8x8xf32> to vector<8xf32>
    %345 = vector.shape_cast %344 : vector<8xf32> to vector<8x1xf32>
    %346 = vector.broadcast %345 : vector<8x1xf32> to vector<8x8xf32>
    %347 = arith.subf %343, %346 : vector<8x8xf32>
    %348 = math.exp %347 : vector<8x8xf32>
    %cst_125 = arith.constant dense<0.000000e+00> : vector<8xf32>
    %349 = vector.multi_reduction <add>, %348, %cst_125 [1] : vector<8x8xf32> to vector<8xf32>
    %350 = vector.shape_cast %349 : vector<8xf32> to vector<8x1xf32>
    %351 = tpu.reciprocal %350 {approx = true} : vector<8x1xf32> -> vector<8x1xf32>
    %352 = vector.broadcast %351 : vector<8x1xf32> to vector<8x8xf32>
    %353 = arith.mulf %348, %352 : vector<8x8xf32>
    %cst_126 = arith.constant dense<0.000000e+00> : vector<8x8xf32>
    %354 = tpu.matmul %353, %340, %cst_126 {dimension_numbers = #tpu.dot_dimension_numbers<[1], [0], [0], [1], [0, 0, 1, 1], [], []>} : vector<8x8xf32>, vector<8x8xf32>, vector<8x8xf32> -> vector<8x8xf32>
    %355 = vector.extract_strided_slice %320 {offsets = [0, 16], sizes = [8, 8], strides = [1, 1]} : vector<8x96xf32> to vector<8x8xf32>
    %356 = vector.extract_strided_slice %320 {offsets = [0, 48], sizes = [8, 8], strides = [1, 1]} : vector<8x96xf32> to vector<8x8xf32>
    %357 = vector.extract_strided_slice %320 {offsets = [0, 80], sizes = [8, 8], strides = [1, 1]} : vector<8x96xf32> to vector<8x8xf32>
    %cst_127 = arith.constant dense<0.000000e+00> : vector<8x8xf32>
    %358 = tpu.matmul %355, %356, %cst_127 {dimension_numbers = #tpu.dot_dimension_numbers<[1], [1], [0], [0], [0, 0, 1, 0], [], []>} : vector<8x8xf32>, vector<8x8xf32>, vector<8x8xf32> -> vector<8x8xf32>
    %cst_128 = arith.constant 0.353553385 : f32
    %359 = vector.broadcast %cst_128 : f32 to vector<8x8xf32>
    %360 = arith.mulf %358, %359 : vector<8x8xf32>
    %cst_129 = arith.constant dense<0xFF800000> : vector<8xf32>
    %361 = vector.multi_reduction <maximumf>, %360, %cst_129 [1] : vector<8x8xf32> to vector<8xf32>
    %362 = vector.shape_cast %361 : vector<8xf32> to vector<8x1xf32>
    %363 = vector.broadcast %362 : vector<8x1xf32> to vector<8x8xf32>
    %364 = arith.subf %360, %363 : vector<8x8xf32>
    %365 = math.exp %364 : vector<8x8xf32>
    %cst_130 = arith.constant dense<0.000000e+00> : vector<8xf32>
    %366 = vector.multi_reduction <add>, %365, %cst_130 [1] : vector<8x8xf32> to vector<8xf32>
    %367 = vector.shape_cast %366 : vector<8xf32> to vector<8x1xf32>
    %368 = tpu.reciprocal %367 {approx = true} : vector<8x1xf32> -> vector<8x1xf32>
    %369 = vector.broadcast %368 : vector<8x1xf32> to vector<8x8xf32>
    %370 = arith.mulf %365, %369 : vector<8x8xf32>
    %cst_131 = arith.constant dense<0.000000e+00> : vector<8x8xf32>
    %371 = tpu.matmul %370, %357, %cst_131 {dimension_numbers = #tpu.dot_dimension_numbers<[1], [0], [0], [1], [0, 0, 1, 1], [], []>} : vector<8x8xf32>, vector<8x8xf32>, vector<8x8xf32> -> vector<8x8xf32>
    %372 = vector.extract_strided_slice %320 {offsets = [0, 24], sizes = [8, 8], strides = [1, 1]} : vector<8x96xf32> to vector<8x8xf32>
    %373 = vector.extract_strided_slice %320 {offsets = [0, 56], sizes = [8, 8], strides = [1, 1]} : vector<8x96xf32> to vector<8x8xf32>
    %374 = vector.extract_strided_slice %320 {offsets = [0, 88], sizes = [8, 8], strides = [1, 1]} : vector<8x96xf32> to vector<8x8xf32>
    %cst_132 = arith.constant dense<0.000000e+00> : vector<8x8xf32>
    %375 = tpu.matmul %372, %373, %cst_132 {dimension_numbers = #tpu.dot_dimension_numbers<[1], [1], [0], [0], [0, 0, 1, 0], [], []>} : vector<8x8xf32>, vector<8x8xf32>, vector<8x8xf32> -> vector<8x8xf32>
    %cst_133 = arith.constant 0.353553385 : f32
    %376 = vector.broadcast %cst_133 : f32 to vector<8x8xf32>
    %377 = arith.mulf %375, %376 : vector<8x8xf32>
    %cst_134 = arith.constant dense<0xFF800000> : vector<8xf32>
    %378 = vector.multi_reduction <maximumf>, %377, %cst_134 [1] : vector<8x8xf32> to vector<8xf32>
    %379 = vector.shape_cast %378 : vector<8xf32> to vector<8x1xf32>
    %380 = vector.broadcast %379 : vector<8x1xf32> to vector<8x8xf32>
    %381 = arith.subf %377, %380 : vector<8x8xf32>
    %382 = math.exp %381 : vector<8x8xf32>
    %cst_135 = arith.constant dense<0.000000e+00> : vector<8xf32>
    %383 = vector.multi_reduction <add>, %382, %cst_135 [1] : vector<8x8xf32> to vector<8xf32>
    %384 = vector.shape_cast %383 : vector<8xf32> to vector<8x1xf32>
    %385 = tpu.reciprocal %384 {approx = true} : vector<8x1xf32> -> vector<8x1xf32>
    %386 = vector.broadcast %385 : vector<8x1xf32> to vector<8x8xf32>
    %387 = arith.mulf %382, %386 : vector<8x8xf32>
    %cst_136 = arith.constant dense<0.000000e+00> : vector<8x8xf32>
    %388 = tpu.matmul %387, %374, %cst_136 {dimension_numbers = #tpu.dot_dimension_numbers<[1], [0], [0], [1], [0, 0, 1, 1], [], []>} : vector<8x8xf32>, vector<8x8xf32>, vector<8x8xf32> -> vector<8x8xf32>
    %389 = tpu.concatenate %337, %354, %371, %388 in 1 : vector<8x8xf32>, vector<8x8xf32>, vector<8x8xf32>, vector<8x8xf32> -> vector<8x32xf32>
    %cst_137 = arith.constant dense<0.000000e+00> : vector<8x32xf32>
    %390 = tpu.matmul %389, %316, %cst_137 {dimension_numbers = #tpu.dot_dimension_numbers<[1], [0], [0], [1], [0, 0, 1, 1], [], []>} : vector<8x32xf32>, vector<32x32xf32>, vector<8x32xf32> -> vector<8x32xf32>
    %391 = vector.broadcast %317 : vector<1x32xf32> to vector<8x32xf32>
    %392 = arith.addf %390, %391 : vector<8x32xf32>
    %c0_138 = arith.constant 0 : index
    %c0_139 = arith.constant 0 : index
    %393 = vector.load %arg3[%c0_138, %c0_139] : memref<8x32xf32, #tpu.memory_space<vmem>>, vector<8x32xf32>
    tpu.vector_store %arg3[%c0_138, %c0_139], %392 {strides = array<i32>} : memref<8x32xf32, #tpu.memory_space<vmem>>, vector<8x32xf32>,
    return
  }
}

</mosaic_0001>

<llo_original>
// kernel: temporal_context_forward.1
$region0: #{temporal_context_forward.1}
  #allocation0 [shape = 'u32[]', space=smem, size = 0x4, offset = 0x4, fixed_abs, tag = 'smem constant byte address 0x4 - core index']
  #allocation1 [shape = 'u32[144,128]{1,0:T(1,128)}', space=vmem, size = 0x12000, scoped, tag = 'internal scratch']
  %s0 = inlined_call_operand.vmem [shape: f32[8,33], index: 0, kind: input, shape index: {}]
  %s1 = inlined_call_operand.vmem [shape: f32[24,128], index: 1, kind: input, shape index: {}]
  %s2 = inlined_call_operand.hbm [shape: f32[224,128], index: 2, kind: input, shape index: {}]
  %s3 = inlined_call_operand.hbm [shape: f32[8,32], index: 3, kind: output, shape index: {0}]
  %s4 = inlined_call_operand.hbm [shape: f32[1,1], index: 4, kind: output, shape index: {1}]
  %5 = xla_tuple %s3, %s4
  %s6 = sld [smem:[#allocation0]]
  $region34: #{temporal_context_forward.1} parent=0
    _
  %s8 = ssub.s32 1, %s6
  %s9 = scalar_select 0, %s8, %s6
  $region1: #{temporal_context_forward.1} parent=0
    #allocation2 [shape = 'u8[114688]{0}', space=vmem, size = 0x1c000, scoped, tag = 'input window, operand 2, single buffered']
    #allocation3 [shape = 's32[1]{0}', space=sflag, size = 0x4, scoped, tag = 'scoped memory for temporal_context_forward.1']
    #allocation4 [shape = 's32[1]{0}', space=sflag, size = 0x4, scoped, tag = 'scoped memory for temporal_context_forward.1']
    #allocation5 [shape = 'u8[4096]{0}', space=vmem, size = 0x1000, scoped, tag = 'output window, operand 0, single buffered']
    #allocation6 [shape = 'u8[512]{0}', space=vmem, size = 0x400, scoped, tag = 'output window, operand 1, single buffered']
    #allocation7 [shape = 's32[1]{0}', space=sflag, size = 0x4, scoped, tag = 'scoped memory for temporal_context_forward.1']
    %10 = vsyncpa [#allocation3], 0
    %11 = vsyncpa [#allocation4], 0
    %12 = vsyncpa [#allocation7], 0
    // Predicated region
    $region2: #{temporal_context_forward.1} parent=1 // pred_check
      _
    $region3: #{temporal_context_forward.1} parent=1 // pred_check_branch
      %14 = sbr.rel (0) target = $region5
    $region4: #{temporal_context_forward.1} parent=1 // pred_region
      _
    $region5: #{temporal_context_forward.1} parent=1 // pred_fallthru
      _
    // Predicated region
    $region6: #{temporal_context_forward.1} parent=1 // pred_check
      _
    $region7: #{temporal_context_forward.1} parent=1 // pred_check_branch
      %16 = sbr.rel (0) target = $region9
    $region8: #{temporal_context_forward.1} parent=1 // pred_region
      _
    $region9: #{temporal_context_forward.1} parent=1 // pred_fallthru
      _
    // Predicated region
    $region10: #{temporal_context_forward.1} parent=1 // pred_check
      _
    $region11: #{temporal_context_forward.1} parent=1 // pred_check_branch
      %18 = sbr.rel (0) target = $region13
    $region12: #{temporal_context_forward.1} parent=1 // pred_region
      %s20 = ssub.s32 3584, 3584
      %21 = vsyncadd [#allocation3], %s20
      %s22 = sshll.u32 [#allocation2], 4
      %s23 = int_to_ptr.vmem [resolvable:$true] %s22
      %28 = dma.hbm_to_vmem [thread:$0]  %s2, 3584, %s23, [#allocation3], 128, 128, 8
    $region13: #{temporal_context_forward.1} parent=1 // pred_fallthru
      _
    // Predicated region
    $region14: #{temporal_context_forward.1} parent=1 // pred_check
      _
    $region15: #{temporal_context_forward.1} parent=1 // pred_check_branch
      %30 = sbr.rel (0) target = $region17
    $region16: #{temporal_context_forward.1} parent=1 // pred_region
      %31 = dma.done [#allocation3], 3584
    $region17: #{temporal_context_forward.1} parent=1 // pred_fallthru
      _
    %v32 = vld [vmem:[%s0] sm:$0xff]
    %v33 = vld [vmem:[%s1] sm:$0x1]
    %35 = vset.pattern.permute.xlu0 32
    %36 = vperm.xlu0 %35, %v32
    %v37 = vpop.permute.xlu0 %36
    %v39 = vlaneseq
    %v40 = vshrl.u32 %v39, 7
    %v41 = vsub.s32 0, %v40
    %v42 = vrot.slane %v33, %v41
    %v43 = vmul.f32 %v37, %v42
    %v44 = vadd.f32 %v32, %v43
    %v45 = vld [vmem:[%s1 + $0x1] sm:$0x1]
    %v46 = vlaneseq
    %v47 = vshrl.u32 %v46, 7
    %v48 = vsub.s32 0, %v47
    %v49 = vrot.slane %v45, %v48
    %v50 = vadd.f32 %v44, %v49
    %v51 = vmul.f32 %v50, %v50
    %vm52 = vcmask 261120
    %v53 = vsel %vm52, %v51, 0.0
    %54 = vadd.xlane.f32.xlu0 %v53
    %v55 = vpop.xlane.xlu0 %54
    %v57 = vrot.slane %v50, 1
    %v59 = vmul.f32 %v50, %v57
    %vm60 = vcmask 260096
    %v61 = vsel %vm60, %v59, 0.0
    %62 = vadd.xlane.f32.xlu0 %v61
    %v63 = vpop.xlane.xlu0 %62
    %v64 = vmax.f32 %v55, 1e-16
    %v66 = vrot.slane %v64, 1
    %v68 = vmul.f32 %v64, %v66
    %v69 = vrsqrt.pop %v68
    %v70 = vmul.f32 %v63, %v69
    %vm71 = vcmask 6144
    %v72 = vsel %vm71, %v70, 0.0
    %v73 = vrot.slane %v72, 4
    %v74 = vadd.f32 %v72, %v73
    %v75 = vrot.slane %v74, 2
    %v76 = vadd.f32 %v74, %v75
    %v77 = vrot.slane %v76, 1
    %v78 = vadd.f32 %v76, %v77
    %v79 = vrcp.pop 7.0
    %v80 = vmul.f32 %v78, %v79
    %vm81 = vcmask 0
    %82 = vst.msk [vmem:[#allocation6] sm:$0x1] %vm81, %v80
    %v83 = vld [vmem:[#allocation2] sm:$0xff]
    %v84 = vld [vmem:[#allocation2 + $0x8] sm:$0xff]
    %v85 = vld [vmem:[#allocation2 + $0x10] sm:$0xff]
    %v86 = vld [vmem:[#allocation2 + $0x18] sm:$0xff]
    %v87 = vld [vmem:[%s1 + $0x2] sm:$0x1]
    %v88 = vld [vmem:[%s1 + $0x3] sm:$0x1]
    %v89 = vlaneseq
    %v90 = vshrl.u32 %v89, 7
    %v91 = vsub.s32 0, %v90
    %v92 = vrot.slane %v87, %v91
    %v93 = vsel %vm52, %v50, 0
    %95 = vmatprep.subr.mxu0 0.0
    %96 = vmatpush1.msra.mxu0 %v83
    %97 = vmatprep.subr.mxu0 0.0
    %98 = vmatpush1.msra.mxu0 %v84
    %99 = vmatprep.subr.mxu0 0.0
    %100 = vmatpush1.msra.mxu0 %v85
    %101 = vmatprep.subr.mxu0 0.0
    %102 = vmatpush1.msra.mxu0 %v86
    %103 = vmatprep.subr.mxu0 0.0
    %104 = vmatpush1.msra.mxu0 0.0
    %105 = vmatprep.subr.mxu0 0.0
    %106 = vmatpush1.msra.mxu0 0.0
    %107 = vmatprep.subr.mxu0 0.0
    %108 = vmatpush1.msra.mxu0 0.0
    %109 = vmatprep.subr.mxu0 0.0
    %110 = vmatpush1.msra.mxu0 0.0
    %111 = vmatprep.subr.mxu0 0.0
    %112 = vmatpush1.msra.mxu0 0.0
    %113 = vmatprep.subr.mxu0 0.0
    %114 = vmatpush1.msra.mxu0 0.0
    %115 = vmatprep.subr.mxu0 0.0
    %116 = vmatpush1.msra.mxu0 0.0
    %117 = vmatprep.subr.mxu0 0.0
    %118 = vmatpush1.msra.mxu0 0.0
    %119 = vmatprep.subr.mxu0 0.0
    %120 = vmatpush1.msra.mxu0 0.0
    %121 = vmatprep.subr.mxu0 0.0
    %122 = vmatpush1.msra.mxu0 0.0
    %123 = vmatprep.subr.mxu0 0.0
    %124 = vmatpush1.msra.mxu0 0.0
    %125 = vmatprep.subr.mxu0 0.0
    %126 = vmatpush1.msra.mxu0 0.0
    %127 = vmatprep.subr.mxu0 0.0
    %128 = vmatpush1.msra.mxu0 0.0
    %129 = vmatprep.subr.mxu0 0.0
    %130 = vmatpush1.msra.mxu0 0.0
    %131 = vmatprep.subr.mxu0 0.0
    %132 = vmatpush1.msra.mxu0 0.0
    %133 = vmatprep.subr.mxu0 0.0
    %134 = vmatpush1.msra.mxu0 0.0
    %135 = vmatprep.subr.mxu0 0.0
    %136 = vmatpush1.msra.mxu0 0.0
    %137 = vmatprep.subr.mxu0 0.0
    %138 = vmatpush1.msra.mxu0 0.0
    %139 = vmatprep.subr.mxu0 0.0
    %140 = vmatpush1.msra.mxu0 0.0
    %141 = vmatprep.subr.mxu0 0.0
    %142 = vmatpush1.msra.mxu0 0.0
    %143 = vmatprep.subr.mxu0 0.0
    %144 = vmatpush1.msra.mxu0 0.0
    %145 = vmatprep.subr.mxu0 0.0
    %146 = vmatpush1.msra.mxu0 0.0
    %147 = vmatprep.subr.mxu0 0.0
    %148 = vmatpush1.msra.mxu0 0.0
    %149 = vmatprep.subr.mxu0 0.0
    %150 = vmatpush1.msra.mxu0 0.0
    %151 = vmatprep.subr.mxu0 0.0
    %152 = vmatpush1.msra.mxu0 0.0
    %153 = vmatprep.subr.mxu0 0.0
    %154 = vmatpush1.msra.mxu0 0.0
    %155 = vmatprep.subr.mxu0 0.0
    %156 = vmatpush1.msra.mxu0 0.0
    %157 = vmatprep.subr.mxu0 0.0
    %158 = vmatpush1.msra.mxu0 0.0
    %159 = vmatprep.mubr.f32.mxu0 0.0
    %160 = vmatmul.mubr.f32.gmra.mrb[0].mxu0 %v93
    %v161 = vpop.f32.mrb[0].mxu0
    %v162 = vadd.f32 %v92, %v161
    %v163 = vpop.f32.mrb[0].mxu0
    %164 = vdwg.mxu0
    %166 = vrot.lane.b32.xlu0 %v162, 96
    %v167 = vpop.permute.xlu0 %166
    %vm168 = vcmask 64512
    %v169 = vsel %vm168, %v162, 0
    %v171 = vsel %vm168, %v167, 0
    %173 = vmatprep.subr.mxu0 0.0
    %174 = vmatpush1.xpose.msra.mxu0 %v171
    %175 = vmatprep.subr.mxu0 0.0
    %176 = vmatpush1.xpose.msra.mxu0 0.0
    %177 = vmatprep.subr.mxu0 0.0
    %178 = vmatpush1.xpose.msra.mxu0 0.0
    %179 = vmatprep.subr.mxu0 0.0
    %180 = vmatpush1.xpose.msra.mxu0 0.0
    %181 = vmatprep.subr.mxu0 0.0
    %182 = vmatpush1.xpose.msra.mxu0 0.0
    %183 = vmatprep.subr.mxu0 0.0
    %184 = vmatpush1.xpose.msra.mxu0 0.0
    %185 = vmatprep.subr.mxu0 0.0
    %186 = vmatpush1.xpose.msra.mxu0 0.0
    %187 = vmatprep.subr.mxu0 0.0
    %188 = vmatpush1.xpose.msra.mxu0 0.0
    %189 = vmatprep.subr.mxu0 0.0
    %190 = vmatpush1.xpose.msra.mxu0 0.0
    %191 = vmatprep.subr.mxu0 0.0
    %192 = vmatpush1.xpose.msra.mxu0 0.0
    %193 = vmatprep.subr.mxu0 0.0
    %194 = vmatpush1.xpose.msra.mxu0 0.0
    %195 = vmatprep.subr.mxu0 0.0
    %196 = vmatpush1.xpose.msra.mxu0 0.0
    %197 = vmatprep.subr.mxu0 0.0
    %198 = vmatpush1.xpose.msra.mxu0 0.0
    %199 = vmatprep.subr.mxu0 0.0
    %200 = vmatpush1.xpose.msra.mxu0 0.0
    %201 = vmatprep.subr.mxu0 0.0
    %202 = vmatpush1.xpose.msra.mxu0 0.0
    %203 = vmatprep.subr.mxu0 0.0
    %204 = vmatpush1.xpose.msra.mxu0 0.0
    %205 = vmatprep.subr.mxu0 0.0
    %206 = vmatpush1.xpose.msra.mxu0 0.0
    %207 = vmatprep.subr.mxu0 0.0
    %208 = vmatpush1.xpose.msra.mxu0 0.0
    %209 = vmatprep.subr.mxu0 0.0
    %210 = vmatpush1.xpose.msra.mxu0 0.0
    %211 = vmatprep.subr.mxu0 0.0
    %212 = vmatpush1.xpose.msra.mxu0 0.0
    %213 = vmatprep.subr.mxu0 0.0
    %214 = vmatpush1.xpose.msra.mxu0 0.0
    %215 = vmatprep.subr.mxu0 0.0
    %216 = vmatpush1.xpose.msra.mxu0 0.0
    %217 = vmatprep.subr.mxu0 0.0
    %218 = vmatpush1.xpose.msra.mxu0 0.0
    %219 = vmatprep.subr.mxu0 0.0
    %220 = vmatpush1.xpose.msra.mxu0 0.0
    %221 = vmatprep.subr.mxu0 0.0
    %222 = vmatpush1.xpose.msra.mxu0 0.0
    %223 = vmatprep.subr.mxu0 0.0
    %224 = vmatpush1.xpose.msra.mxu0 0.0
    %225 = vmatprep.subr.mxu0 0.0
    %226 = vmatpush1.xpose.msra.mxu0 0.0
    %227 = vmatprep.subr.mxu0 0.0
    %228 = vmatpush1.xpose.msra.mxu0 0.0
    %229 = vmatprep.subr.mxu0 0.0
    %230 = vmatpush1.xpose.msra.mxu0 0.0
    %231 = vmatprep.subr.mxu0 0.0
    %232 = vmatpush1.xpose.msra.mxu0 0.0
    %233 = vmatprep.subr.mxu0 0.0
    %234 = vmatpush1.xpose.msra.mxu0 0.0
    %235 = vmatprep.subr.mxu0 0.0
    %236 = vmatpush1.xpose.msra.mxu0 0.0
    %237 = vmatprep.mubr.f32.mxu0 0.0
    %238 = vmatmul.mubr.f32.gmra.mrb[0].mxu0 %v169
    %v239 = vpop.f32.mrb[0].mxu0
    %v240 = vadd.f32 0.0, %v239
    %v241 = vpop.f32.mrb[0].mxu0
    %242 = vdwg.mxu0
    %v243 = vmul.f32 %v240, 0.35355338
    %v244 = vsel %vm168, %v243, -inf
    %245 = vmax.xlane.f32.xlu0 %v244
    %v246 = vpop.xlane.xlu0 %245
    %v247 = vsub.f32 %v243, %v246
    %v248 = vmul.f32 %v247, 1.442695
    %v249 = vpow.pop %v248
    %v250 = vsel %vm168, %v249, 0.0
    %251 = vadd.xlane.f32.xlu0 %v250
    %v252 = vpop.xlane.xlu0 %251
    %v253 = vrcp.pop %v252
    %v254 = vmul.f32 %v249, %v253
    %255 = vrot.lane.b32.xlu0 %v162, 64
    %v256 = vpop.permute.xlu0 %255
    %v259 = vsel %vm168, %v254, 0
    %261 = vmatprep.subr.mxu0 0.0
    %262 = vmatpush1.msra.mxu0 %v256
    %263 = vmatprep.subr.mxu0 0.0
    %264 = vmatpush1.msra.mxu0 0.0
    %265 = vmatprep.subr.mxu0 0.0
    %266 = vmatpush1.msra.mxu0 0.0
    %267 = vmatprep.subr.mxu0 0.0
    %268 = vmatpush1.msra.mxu0 0.0
    %269 = vmatprep.subr.mxu0 0.0
    %270 = vmatpush1.msra.mxu0 0.0
    %271 = vmatprep.subr.mxu0 0.0
    %272 = vmatpush1.msra.mxu0 0.0
    %273 = vmatprep.subr.mxu0 0.0
    %274 = vmatpush1.msra.mxu0 0.0
    %275 = vmatprep.subr.mxu0 0.0
    %276 = vmatpush1.msra.mxu0 0.0
    %277 = vmatprep.subr.mxu0 0.0
    %278 = vmatpush1.msra.mxu0 0.0
    %279 = vmatprep.subr.mxu0 0.0
    %280 = vmatpush1.msra.mxu0 0.0
    %281 = vmatprep.subr.mxu0 0.0
    %282 = vmatpush1.msra.mxu0 0.0
    %283 = vmatprep.subr.mxu0 0.0
    %284 = vmatpush1.msra.mxu0 0.0
    %285 = vmatprep.subr.mxu0 0.0
    %286 = vmatpush1.msra.mxu0 0.0
    %287 = vmatprep.subr.mxu0 0.0
    %288 = vmatpush1.msra.mxu0 0.0
    %289 = vmatprep.subr.mxu0 0.0
    %290 = vmatpush1.msra.mxu0 0.0
    %291 = vmatprep.subr.mxu0 0.0
    %292 = vmatpush1.msra.mxu0 0.0
    %293 = vmatprep.subr.mxu0 0.0
    %294 = vmatpush1.msra.mxu0 0.0
    %295 = vmatprep.subr.mxu0 0.0
    %296 = vmatpush1.msra.mxu0 0.0
    %297 = vmatprep.subr.mxu0 0.0
    %298 = vmatpush1.msra.mxu0 0.0
    %299 = vmatprep.subr.mxu0 0.0
    %300 = vmatpush1.msra.mxu0 0.0
    %301 = vmatprep.subr.mxu0 0.0
    %302 = vmatpush1.msra.mxu0 0.0
    %303 = vmatprep.subr.mxu0 0.0
    %304 = vmatpush1.msra.mxu0 0.0
    %305 = vmatprep.subr.mxu0 0.0
    %306 = vmatpush1.msra.mxu0 0.0
    %307 = vmatprep.subr.mxu0 0.0
    %308 = vmatpush1.msra.mxu0 0.0
    %309 = vmatprep.subr.mxu0 0.0
    %310 = vmatpush1.msra.mxu0 0.0
    %311 = vmatprep.subr.mxu0 0.0
    %312 = vmatpush1.msra.mxu0 0.0
    %313 = vmatprep.subr.mxu0 0.0
    %314 = vmatpush1.msra.mxu0 0.0
    %315 = vmatprep.subr.mxu0 0.0
    %316 = vmatpush1.msra.mxu0 0.0
    %317 = vmatprep.subr.mxu0 0.0
    %318 = vmatpush1.msra.mxu0 0.0
    %319 = vmatprep.subr.mxu0 0.0
    %320 = vmatpush1.msra.mxu0 0.0
    %321 = vmatprep.subr.mxu0 0.0
    %322 = vmatpush1.msra.mxu0 0.0
    %323 = vmatprep.subr.mxu0 0.0
    %324 = vmatpush1.msra.mxu0 0.0
    %325 = vmatprep.mubr.f32.mxu0 0.0
    %326 = vmatmul.mubr.f32.gmra.mrb[0].mxu0 %v259
    %v327 = vpop.f32.mrb[0].mxu0
    %v328 = vadd.f32 0.0, %v327
    %v329 = vpop.f32.mrb[0].mxu0
    %330 = vdwg.mxu0
    %331 = vrot.lane.b32.xlu0 %v162, 120
    %v332 = vpop.permute.xlu0 %331
    %333 = vrot.lane.b32.xlu0 %v162, 88
    %v334 = vpop.permute.xlu0 %333
    %v335 = vsel %vm168, %v332, 0
    %v337 = vsel %vm168, %v334, 0
    %339 = vmatprep.subr.mxu0 0.0
    %340 = vmatpush1.xpose.msra.mxu0 %v337
    %341 = vmatprep.subr.mxu0 0.0
    %342 = vmatpush1.xpose.msra.mxu0 0.0
    %343 = vmatprep.subr.mxu0 0.0
    %344 = vmatpush1.xpose.msra.mxu0 0.0
    %345 = vmatprep.subr.mxu0 0.0
    %346 = vmatpush1.xpose.msra.mxu0 0.0
    %347 = vmatprep.subr.mxu0 0.0
    %348 = vmatpush1.xpose.msra.mxu0 0.0
    %349 = vmatprep.subr.mxu0 0.0
    %350 = vmatpush1.xpose.msra.mxu0 0.0
    %351 = vmatprep.subr.mxu0 0.0
    %352 = vmatpush1.xpose.msra.mxu0 0.0
    %353 = vmatprep.subr.mxu0 0.0
    %354 = vmatpush1.xpose.msra.mxu0 0.0
    %355 = vmatprep.subr.mxu0 0.0
    %356 = vmatpush1.xpose.msra.mxu0 0.0
    %357 = vmatprep.subr.mxu0 0.0
    %358 = vmatpush1.xpose.msra.mxu0 0.0
    %359 = vmatprep.subr.mxu0 0.0
    %360 = vmatpush1.xpose.msra.mxu0 0.0
    %361 = vmatprep.subr.mxu0 0.0
    %362 = vmatpush1.xpose.msra.mxu0 0.0
    %363 = vmatprep.subr.mxu0 0.0
    %364 = vmatpush1.xpose.msra.mxu0 0.0
    %365 = vmatprep.subr.mxu0 0.0
    %366 = vmatpush1.xpose.msra.mxu0 0.0
    %367 = vmatprep.subr.mxu0 0.0
    %368 = vmatpush1.xpose.msra.mxu0 0.0
    %369 = vmatprep.subr.mxu0 0.0
    %370 = vmatpush1.xpose.msra.mxu0 0.0
    %371 = vmatprep.subr.mxu0 0.0
    %372 = vmatpush1.xpose.msra.mxu0 0.0
    %373 = vmatprep.subr.mxu0 0.0
    %374 = vmatpush1.xpose.msra.mxu0 0.0
    %375 = vmatprep.subr.mxu0 0.0
    %376 = vmatpush1.xpose.msra.mxu0 0.0
    %377 = vmatprep.subr.mxu0 0.0
    %378 = vmatpush1.xpose.msra.mxu0 0.0
    %379 = vmatprep.subr.mxu0 0.0
    %380 = vmatpush1.xpose.msra.mxu0 0.0
    %381 = vmatprep.subr.mxu0 0.0
    %382 = vmatpush1.xpose.msra.mxu0 0.0
    %383 = vmatprep.subr.mxu0 0.0
    %384 = vmatpush1.xpose.msra.mxu0 0.0
    %385 = vmatprep.subr.mxu0 0.0
    %386 = vmatpush1.xpose.msra.mxu0 0.0
    %387 = vmatprep.subr.mxu0 0.0
    %388 = vmatpush1.xpose.msra.mxu0 0.0
    %389 = vmatprep.subr.mxu0 0.0
    %390 = vmatpush1.xpose.msra.mxu0 0.0
    %391 = vmatprep.subr.mxu0 0.0
    %392 = vmatpush1.xpose.msra.mxu0 0.0
    %393 = vmatprep.subr.mxu0 0.0
    %394 = vmatpush1.xpose.msra.mxu0 0.0
    %395 = vmatprep.subr.mxu0 0.0
    %396 = vmatpush1.xpose.msra.mxu0 0.0
    %397 = vmatprep.subr.mxu0 0.0
    %398 = vmatpush1.xpose.msra.mxu0 0.0
    %399 = vmatprep.subr.mxu0 0.0
    %400 = vmatpush1.xpose.msra.mxu0 0.0
    %401 = vmatprep.subr.mxu0 0.0
    %402 = vmatpush1.xpose.msra.mxu0 0.0
    %403 = vmatprep.mubr.f32.mxu0 0.0
    %404 = vmatmul.mubr.f32.gmra.mrb[0].mxu0 %v335
    %v405 = vpop.f32.mrb[0].mxu0
    %v406 = vadd.f32 0.0, %v405
    %v407 = vpop.f32.mrb[0].mxu0
    %408 = vdwg.mxu0
    %v409 = vmul.f32 %v406, 0.35355338
    %v410 = vsel %vm168, %v409, -inf
    %411 = vmax.xlane.f32.xlu0 %v410
    %v412 = vpop.xlane.xlu0 %411
    %v413 = vsub.f32 %v409, %v412
    %v414 = vmul.f32 %v413, 1.442695
    %v415 = vpow.pop %v414
    %v416 = vsel %vm168, %v415, 0.0
    %417 = vadd.xlane.f32.xlu0 %v416
    %v418 = vpop.xlane.xlu0 %417
    %v419 = vrcp.pop %v418
    %v420 = vmul.f32 %v415, %v419
    %421 = vrot.lane.b32.xlu0 %v162, 56
    %v422 = vpop.permute.xlu0 %421
    %v425 = vsel %vm168, %v420, 0
    %427 = vmatprep.subr.mxu0 0.0
    %428 = vmatpush1.msra.mxu0 %v422
    %429 = vmatprep.subr.mxu0 0.0
    %430 = vmatpush1.msra.mxu0 0.0
    %431 = vmatprep.subr.mxu0 0.0
    %432 = vmatpush1.msra.mxu0 0.0
    %433 = vmatprep.subr.mxu0 0.0
    %434 = vmatpush1.msra.mxu0 0.0
    %435 = vmatprep.subr.mxu0 0.0
    %436 = vmatpush1.msra.mxu0 0.0
    %437 = vmatprep.subr.mxu0 0.0
    %438 = vmatpush1.msra.mxu0 0.0
    %439 = vmatprep.subr.mxu0 0.0
    %440 = vmatpush1.msra.mxu0 0.0
    %441 = vmatprep.subr.mxu0 0.0
    %442 = vmatpush1.msra.mxu0 0.0
    %443 = vmatprep.subr.mxu0 0.0
    %444 = vmatpush1.msra.mxu0 0.0
    %445 = vmatprep.subr.mxu0 0.0
    %446 = vmatpush1.msra.mxu0 0.0
    %447 = vmatprep.subr.mxu0 0.0
    %448 = vmatpush1.msra.mxu0 0.0
    %449 = vmatprep.subr.mxu0 0.0
    %450 = vmatpush1.msra.mxu0 0.0
    %451 = vmatprep.subr.mxu0 0.0
    %452 = vmatpush1.msra.mxu0 0.0
    %453 = vmatprep.subr.mxu0 0.0
    %454 = vmatpush1.msra.mxu0 0.0
    %455 = vmatprep.subr.mxu0 0.0
    %456 = vmatpush1.msra.mxu0 0.0
    %457 = vmatprep.subr.mxu0 0.0
    %458 = vmatpush1.msra.mxu0 0.0
    %459 = vmatprep.subr.mxu0 0.0
    %460 = vmatpush1.msra.mxu0 0.0
    %461 = vmatprep.subr.mxu0 0.0
    %462 = vmatpush1.msra.mxu0 0.0
    %463 = vmatprep.subr.mxu0 0.0
    %464 = vmatpush1.msra.mxu0 0.0
    %465 = vmatprep.subr.mxu0 0.0
    %466 = vmatpush1.msra.mxu0 0.0
    %467 = vmatprep.subr.mxu0 0.0
    %468 = vmatpush1.msra.mxu0 0.0
    %469 = vmatprep.subr.mxu0 0.0
    %470 = vmatpush1.msra.mxu0 0.0
    %471 = vmatprep.subr.mxu0 0.0
    %472 = vmatpush1.msra.mxu0 0.0
    %473 = vmatprep.subr.mxu0 0.0
    %474 = vmatpush1.msra.mxu0 0.0
    %475 = vmatprep.subr.mxu0 0.0
    %476 = vmatpush1.msra.mxu0 0.0
    %477 = vmatprep.subr.mxu0 0.0
    %478 = vmatpush1.msra.mxu0 0.0
    %479 = vmatprep.subr.mxu0 0.0
    %480 = vmatpush1.msra.mxu0 0.0
    %481 = vmatprep.subr.mxu0 0.0
    %482 = vmatpush1.msra.mxu0 0.0
    %483 = vmatprep.subr.mxu0 0.0
    %484 = vmatpush1.msra.mxu0 0.0
    %485 = vmatprep.subr.mxu0 0.0
    %486 = vmatpush1.msra.mxu0 0.0
    %487 = vmatprep.subr.mxu0 0.0
    %488 = vmatpush1.msra.mxu0 0.0
    %489 = vmatprep.subr.mxu0 0.0
    %490 = vmatpush1.msra.mxu0 0.0
    %491 = vmatprep.mubr.f32.mxu0 0.0
    %492 = vmatmul.mubr.f32.gmra.mrb[0].mxu0 %v425
    %v493 = vpop.f32.mrb[0].mxu0
    %v494 = vadd.f32 0.0, %v493
    %v495 = vpop.f32.mrb[0].mxu0
    %496 = vdwg.mxu0
    %497 = vrot.lane.b32.xlu0 %v162, 112
    %v498 = vpop.permute.xlu0 %497
    %499 = vrot.lane.b32.xlu0 %v162, 80
    %v500 = vpop.permute.xlu0 %499
    %v501 = vsel %vm168, %v498, 0
    %v503 = vsel %vm168, %v500, 0
    %505 = vmatprep.subr.mxu0 0.0
    %506 = vmatpush1.xpose.msra.mxu0 %v503
    %507 = vmatprep.subr.mxu0 0.0
    %508 = vmatpush1.xpose.msra.mxu0 0.0
    %509 = vmatprep.subr.mxu0 0.0
    %510 = vmatpush1.xpose.msra.mxu0 0.0
    %511 = vmatprep.subr.mxu0 0.0
    %512 = vmatpush1.xpose.msra.mxu0 0.0
    %513 = vmatprep.subr.mxu0 0.0
    %514 = vmatpush1.xpose.msra.mxu0 0.0
    %515 = vmatprep.subr.mxu0 0.0
    %516 = vmatpush1.xpose.msra.mxu0 0.0
    %517 = vmatprep.subr.mxu0 0.0
    %518 = vmatpush1.xpose.msra.mxu0 0.0
    %519 = vmatprep.subr.mxu0 0.0
    %520 = vmatpush1.xpose.msra.mxu0 0.0
    %521 = vmatprep.subr.mxu0 0.0
    %522 = vmatpush1.xpose.msra.mxu0 0.0
    %523 = vmatprep.subr.mxu0 0.0
    %524 = vmatpush1.xpose.msra.mxu0 0.0
    %525 = vmatprep.subr.mxu0 0.0
    %526 = vmatpush1.xpose.msra.mxu0 0.0
    %527 = vmatprep.subr.mxu0 0.0
    %528 = vmatpush1.xpose.msra.mxu0 0.0
    %529 = vmatprep.subr.mxu0 0.0
    %530 = vmatpush1.xpose.msra.mxu0 0.0
    %531 = vmatprep.subr.mxu0 0.0
    %532 = vmatpush1.xpose.msra.mxu0 0.0
    %533 = vmatprep.subr.mxu0 0.0
    %534 = vmatpush1.xpose.msra.mxu0 0.0
    %535 = vmatprep.subr.mxu0 0.0
    %536 = vmatpush1.xpose.msra.mxu0 0.0
    %537 = vmatprep.subr.mxu0 0.0
    %538 = vmatpush1.xpose.msra.mxu0 0.0
    %539 = vmatprep.subr.mxu0 0.0
    %540 = vmatpush1.xpose.msra.mxu0 0.0
    %541 = vmatprep.subr.mxu0 0.0
    %542 = vmatpush1.xpose.msra.mxu0 0.0
    %543 = vmatprep.subr.mxu0 0.0
    %544 = vmatpush1.xpose.msra.mxu0 0.0
    %545 = vmatprep.subr.mxu0 0.0
    %546 = vmatpush1.xpose.msra.mxu0 0.0
    %547 = vmatprep.subr.mxu0 0.0
    %548 = vmatpush1.xpose.msra.mxu0 0.0
    %549 = vmatprep.subr.mxu0 0.0
    %550 = vmatpush1.xpose.msra.mxu0 0.0
    %551 = vmatprep.subr.mxu0 0.0
    %552 = vmatpush1.xpose.msra.mxu0 0.0
    %553 = vmatprep.subr.mxu0 0.0
    %554 = vmatpush1.xpose.msra.mxu0 0.0
    %555 = vmatprep.subr.mxu0 0.0
    %556 = vmatpush1.xpose.msra.mxu0 0.0
    %557 = vmatprep.subr.mxu0 0.0
    %558 = vmatpush1.xpose.msra.mxu0 0.0
    %559 = vmatprep.subr.mxu0 0.0
    %560 = vmatpush1.xpose.msra.mxu0 0.0
    %561 = vmatprep.subr.mxu0 0.0
    %562 = vmatpush1.xpose.msra.mxu0 0.0
    %563 = vmatprep.subr.mxu0 0.0
    %564 = vmatpush1.xpose.msra.mxu0 0.0
    %565 = vmatprep.subr.mxu0 0.0
    %566 = vmatpush1.xpose.msra.mxu0 0.0
    %567 = vmatprep.subr.mxu0 0.0
    %568 = vmatpush1.xpose.msra.mxu0 0.0
    %569 = vmatprep.mubr.f32.mxu0 0.0
    %570 = vmatmul.mubr.f32.gmra.mrb[0].mxu0 %v501
    %v571 = vpop.f32.mrb[0].mxu0
    %v572 = vadd.f32 0.0, %v571
    %v573 = vpop.f32.mrb[0].mxu0
    %574 = vdwg.mxu0
    %v575 = vmul.f32 %v572, 0.35355338
    %v576 = vsel %vm168, %v575, -inf
    %577 = vmax.xlane.f32.xlu0 %v576
    %v578 = vpop.xlane.xlu0 %577
    %v579 = vsub.f32 %v575, %v578
    %v580 = vmul.f32 %v579, 1.442695
    %v581 = vpow.pop %v580
    %v582 = vsel %vm168, %v581, 0.0
    %583 = vadd.xlane.f32.xlu0 %v582
    %v584 = vpop.xlane.xlu0 %583
    %v585 = vrcp.pop %v584
    %v586 = vmul.f32 %v581, %v585
    %587 = vrot.lane.b32.xlu0 %v162, 48
    %v588 = vpop.permute.xlu0 %587
    %v591 = vsel %vm168, %v586, 0
    %593 = vmatprep.subr.mxu0 0.0
    %594 = vmatpush1.msra.mxu0 %v588
    %595 = vmatprep.subr.mxu0 0.0
    %596 = vmatpush1.msra.mxu0 0.0
    %597 = vmatprep.subr.mxu0 0.0
    %598 = vmatpush1.msra.mxu0 0.0
    %599 = vmatprep.subr.mxu0 0.0
    %600 = vmatpush1.msra.mxu0 0.0
    %601 = vmatprep.subr.mxu0 0.0
    %602 = vmatpush1.msra.mxu0 0.0
    %603 = vmatprep.subr.mxu0 0.0
    %604 = vmatpush1.msra.mxu0 0.0
    %605 = vmatprep.subr.mxu0 0.0
    %606 = vmatpush1.msra.mxu0 0.0
    %607 = vmatprep.subr.mxu0 0.0
    %608 = vmatpush1.msra.mxu0 0.0
    %609 = vmatprep.subr.mxu0 0.0
    %610 = vmatpush1.msra.mxu0 0.0
    %611 = vmatprep.subr.mxu0 0.0
    %612 = vmatpush1.msra.mxu0 0.0
    %613 = vmatprep.subr.mxu0 0.0
    %614 = vmatpush1.msra.mxu0 0.0
    %615 = vmatprep.subr.mxu0 0.0
    %616 = vmatpush1.msra.mxu0 0.0
    %617 = vmatprep.subr.mxu0 0.0
    %618 = vmatpush1.msra.mxu0 0.0
    %619 = vmatprep.subr.mxu0 0.0
    %620 = vmatpush1.msra.mxu0 0.0
    %621 = vmatprep.subr.mxu0 0.0
    %622 = vmatpush1.msra.mxu0 0.0
    %623 = vmatprep.subr.mxu0 0.0
    %624 = vmatpush1.msra.mxu0 0.0
    %625 = vmatprep.subr.mxu0 0.0
    %626 = vmatpush1.msra.mxu0 0.0
    %627 = vmatprep.subr.mxu0 0.0
    %628 = vmatpush1.msra.mxu0 0.0
    %629 = vmatprep.subr.mxu0 0.0
    %630 = vmatpush1.msra.mxu0 0.0
    %631 = vmatprep.subr.mxu0 0.0
    %632 = vmatpush1.msra.mxu0 0.0
    %633 = vmatprep.subr.mxu0 0.0
    %634 = vmatpush1.msra.mxu0 0.0
    %635 = vmatprep.subr.mxu0 0.0
    %636 = vmatpush1.msra.mxu0 0.0
    %637 = vmatprep.subr.mxu0 0.0
    %638 = vmatpush1.msra.mxu0 0.0
    %639 = vmatprep.subr.mxu0 0.0
    %640 = vmatpush1.msra.mxu0 0.0
    %641 = vmatprep.subr.mxu0 0.0
    %642 = vmatpush1.msra.mxu0 0.0
    %643 = vmatprep.subr.mxu0 0.0
    %644 = vmatpush1.msra.mxu0 0.0
    %645 = vmatprep.subr.mxu0 0.0
    %646 = vmatpush1.msra.mxu0 0.0
    %647 = vmatprep.subr.mxu0 0.0
    %648 = vmatpush1.msra.mxu0 0.0
    %649 = vmatprep.subr.mxu0 0.0
    %650 = vmatpush1.msra.mxu0 0.0
    %651 = vmatprep.subr.mxu0 0.0
    %652 = vmatpush1.msra.mxu0 0.0
    %653 = vmatprep.subr.mxu0 0.0
    %654 = vmatpush1.msra.mxu0 0.0
    %655 = vmatprep.subr.mxu0 0.0
    %656 = vmatpush1.msra.mxu0 0.0
    %657 = vmatprep.mubr.f32.mxu0 0.0
    %658 = vmatmul.mubr.f32.gmra.mrb[0].mxu0 %v591
    %v659 = vpop.f32.mrb[0].mxu0
    %v660 = vadd.f32 0.0, %v659
    %v661 = vpop.f32.mrb[0].mxu0
    %662 = vdwg.mxu0
    %663 = vrot.lane.b32.xlu0 %v162, 104
    %v664 = vpop.permute.xlu0 %663
    %665 = vrot.lane.b32.xlu0 %v162, 72
    %v666 = vpop.permute.xlu0 %665
    %v667 = vsel %vm168, %v664, 0
    %v669 = vsel %vm168, %v666, 0
    %671 = vmatprep.subr.mxu0 0.0
    %672 = vmatpush1.xpose.msra.mxu0 %v669
    %673 = vmatprep.subr.mxu0 0.0
    %674 = vmatpush1.xpose.msra.mxu0 0.0
    %675 = vmatprep.subr.mxu0 0.0
    %676 = vmatpush1.xpose.msra.mxu0 0.0
    %677 = vmatprep.subr.mxu0 0.0
    %678 = vmatpush1.xpose.msra.mxu0 0.0
    %679 = vmatprep.subr.mxu0 0.0
    %680 = vmatpush1.xpose.msra.mxu0 0.0
    %681 = vmatprep.subr.mxu0 0.0
    %682 = vmatpush1.xpose.msra.mxu0 0.0
    %683 = vmatprep.subr.mxu0 0.0
    %684 = vmatpush1.xpose.msra.mxu0 0.0
    %685 = vmatprep.subr.mxu0 0.0
    %686 = vmatpush1.xpose.msra.mxu0 0.0
    %687 = vmatprep.subr.mxu0 0.0
    %688 = vmatpush1.xpose.msra.mxu0 0.0
    %689 = vmatprep.subr.mxu0 0.0
    %690 = vmatpush1.xpose.msra.mxu0 0.0
    %691 = vmatprep.subr.mxu0 0.0
    %692 = vmatpush1.xpose.msra.mxu0 0.0
    %693 = vmatprep.subr.mxu0 0.0
    %694 = vmatpush1.xpose.msra.mxu0 0.0
    %695 = vmatprep.subr.mxu0 0.0
    %696 = vmatpush1.xpose.msra.mxu0 0.0
    %697 = vmatprep.subr.mxu0 0.0
    %698 = vmatpush1.xpose.msra.mxu0 0.0
    %699 = vmatprep.subr.mxu0 0.0
    %700 = vmatpush1.xpose.msra.mxu0 0.0
    %701 = vmatprep.subr.mxu0 0.0
    %702 = vmatpush1.xpose.msra.mxu0 0.0
    %703 = vmatprep.subr.mxu0 0.0
    %704 = vmatpush1.xpose.msra.mxu0 0.0
    %705 = vmatprep.subr.mxu0 0.0
    %706 = vmatpush1.xpose.msra.mxu0 0.0
    %707 = vmatprep.subr.mxu0 0.0
    %708 = vmatpush1.xpose.msra.mxu0 0.0
    %709 = vmatprep.subr.mxu0 0.0
    %710 = vmatpush1.xpose.msra.mxu0 0.0
    %711 = vmatprep.subr.mxu0 0.0
    %712 = vmatpush1.xpose.msra.mxu0 0.0
    %713 = vmatprep.subr.mxu0 0.0
    %714 = vmatpush1.xpose.msra.mxu0 0.0
    %715 = vmatprep.subr.mxu0 0.0
    %716 = vmatpush1.xpose.msra.mxu0 0.0
    %717 = vmatprep.subr.mxu0 0.0
    %718 = vmatpush1.xpose.msra.mxu0 0.0
    %719 = vmatprep.subr.mxu0 0.0
    %720 = vmatpush1.xpose.msra.mxu0 0.0
    %721 = vmatprep.subr.mxu0 0.0
    %722 = vmatpush1.xpose.msra.mxu0 0.0
    %723 = vmatprep.subr.mxu0 0.0
    %724 = vmatpush1.xpose.msra.mxu0 0.0
    %725 = vmatprep.subr.mxu0 0.0
    %726 = vmatpush1.xpose.msra.mxu0 0.0
    %727 = vmatprep.subr.mxu0 0.0
    %728 = vmatpush1.xpose.msra.mxu0 0.0
    %729 = vmatprep.subr.mxu0 0.0
    %730 = vmatpush1.xpose.msra.mxu0 0.0
    %731 = vmatprep.subr.mxu0 0.0
    %732 = vmatpush1.xpose.msra.mxu0 0.0
    %733 = vmatprep.subr.mxu0 0.0
    %734 = vmatpush1.xpose.msra.mxu0 0.0
    %735 = vmatprep.mubr.f32.mxu0 0.0
    %736 = vmatmul.mubr.f32.gmra.mrb[0].mxu0 %v667
    %v737 = vpop.f32.mrb[0].mxu0
    %v738 = vadd.f32 0.0, %v737
    %v739 = vpop.f32.mrb[0].mxu0
    %740 = vdwg.mxu0
    %v741 = vmul.f32 %v738, 0.35355338
    %v742 = vsel %vm168, %v741, -inf
    %743 = vmax.xlane.f32.xlu0 %v742
    %v744 = vpop.xlane.xlu0 %743
    %v745 = vsub.f32 %v741, %v744
    %v746 = vmul.f32 %v745, 1.442695
    %v747 = vpow.pop %v746
    %v748 = vsel %vm168, %v747, 0.0
    %749 = vadd.xlane.f32.xlu0 %v748
    %v750 = vpop.xlane.xlu0 %749
    %v751 = vrcp.pop %v750
    %v752 = vmul.f32 %v747, %v751
    %753 = vrot.lane.b32.xlu0 %v162, 40
    %v754 = vpop.permute.xlu0 %753
    %v757 = vsel %vm168, %v752, 0
    %759 = vmatprep.subr.mxu0 0.0
    %760 = vmatpush1.msra.mxu0 %v754
    %761 = vmatprep.subr.mxu0 0.0
    %762 = vmatpush1.msra.mxu0 0.0
    %763 = vmatprep.subr.mxu0 0.0
    %764 = vmatpush1.msra.mxu0 0.0
    %765 = vmatprep.subr.mxu0 0.0
    %766 = vmatpush1.msra.mxu0 0.0
    %767 = vmatprep.subr.mxu0 0.0
    %768 = vmatpush1.msra.mxu0 0.0
    %769 = vmatprep.subr.mxu0 0.0
    %770 = vmatpush1.msra.mxu0 0.0
    %771 = vmatprep.subr.mxu0 0.0
    %772 = vmatpush1.msra.mxu0 0.0
    %773 = vmatprep.subr.mxu0 0.0
    %774 = vmatpush1.msra.mxu0 0.0
    %775 = vmatprep.subr.mxu0 0.0
    %776 = vmatpush1.msra.mxu0 0.0
    %777 = vmatprep.subr.mxu0 0.0
    %778 = vmatpush1.msra.mxu0 0.0
    %779 = vmatprep.subr.mxu0 0.0
    %780 = vmatpush1.msra.mxu0 0.0
    %781 = vmatprep.subr.mxu0 0.0
    %782 = vmatpush1.msra.mxu0 0.0
    %783 = vmatprep.subr.mxu0 0.0
    %784 = vmatpush1.msra.mxu0 0.0
    %785 = vmatprep.subr.mxu0 0.0
    %786 = vmatpush1.msra.mxu0 0.0
    %787 = vmatprep.subr.mxu0 0.0
    %788 = vmatpush1.msra.mxu0 0.0
    %789 = vmatprep.subr.mxu0 0.0
    %790 = vmatpush1.msra.mxu0 0.0
    %791 = vmatprep.subr.mxu0 0.0
    %792 = vmatpush1.msra.mxu0 0.0
    %793 = vmatprep.subr.mxu0 0.0
    %794 = vmatpush1.msra.mxu0 0.0
    %795 = vmatprep.subr.mxu0 0.0
    %796 = vmatpush1.msra.mxu0 0.0
    %797 = vmatprep.subr.mxu0 0.0
    %798 = vmatpush1.msra.mxu0 0.0
    %799 = vmatprep.subr.mxu0 0.0
    %800 = vmatpush1.msra.mxu0 0.0
    %801 = vmatprep.subr.mxu0 0.0
    %802 = vmatpush1.msra.mxu0 0.0
    %803 = vmatprep.subr.mxu0 0.0
    %804 = vmatpush1.msra.mxu0 0.0
    %805 = vmatprep.subr.mxu0 0.0
    %806 = vmatpush1.msra.mxu0 0.0
    %807 = vmatprep.subr.mxu0 0.0
    %808 = vmatpush1.msra.mxu0 0.0
    %809 = vmatprep.subr.mxu0 0.0
    %810 = vmatpush1.msra.mxu0 0.0
    %811 = vmatprep.subr.mxu0 0.0
    %812 = vmatpush1.msra.mxu0 0.0
    %813 = vmatprep.subr.mxu0 0.0
    %814 = vmatpush1.msra.mxu0 0.0
    %815 = vmatprep.subr.mxu0 0.0
    %816 = vmatpush1.msra.mxu0 0.0
    %817 = vmatprep.subr.mxu0 0.0
    %818 = vmatpush1.msra.mxu0 0.0
    %819 = vmatprep.subr.mxu0 0.0
    %820 = vmatpush1.msra.mxu0 0.0
    %821 = vmatprep.subr.mxu0 0.0
    %822 = vmatpush1.msra.mxu0 0.0
    %823 = vmatprep.mubr.f32.mxu0 0.0
    %824 = vmatmul.mubr.f32.gmra.mrb[0].mxu0 %v757
    %v825 = vpop.f32.mrb[0].mxu0
    %v826 = vadd.f32 0.0, %v825
    %v827 = vpop.f32.mrb[0].mxu0
    %828 = vdwg.mxu0
    %830 = vrot.lane.b32.xlu0 %v494, 8
    %v831 = vpop.permute.xlu0 %830
    %834 = vrot.lane.b32.xlu0 %v660, 16
    %v835 = vpop.permute.xlu0 %834
    %838 = vrot.lane.b32.xlu0 %v826, 24
    %v839 = vpop.permute.xlu0 %838
    %v841 = vsel %vm168, %v328, %v831
    %vm842 = vcmask 130048
    %v843 = vsel %vm842, %v841, %v835
    %vm844 = vcmask 195584
    %v845 = vsel %vm844, %v843, %v839
    %v846 = vlaneseq
    %v847 = vshrl.u32 %v846, 7
    %v848 = vsub.s32 0, %v847
    %v849 = vrot.slane %v88, %v848
    %854 = vrot.lane.b32.xlu0 %v83, 32
    %v855 = vpop.permute.xlu0 %854
    %856 = vrot.lane.b32.xlu0 %v84, 32
    %v857 = vpop.permute.xlu0 %856
    %858 = vrot.lane.b32.xlu0 %v85, 32
    %v859 = vpop.permute.xlu0 %858
    %860 = vrot.lane.b32.xlu0 %v86, 32
    %v861 = vpop.permute.xlu0 %860
    %v867 = vsel %vm52, %v845, 0
    %869 = vmatprep.subr.mxu0 0.0
    %870 = vmatpush1.msra.mxu0 %v855
    %871 = vmatprep.subr.mxu0 0.0
    %872 = vmatpush1.msra.mxu0 %v857
    %873 = vmatprep.subr.mxu0 0.0
    %874 = vmatpush1.msra.mxu0 %v859
    %875 = vmatprep.subr.mxu0 0.0
    %876 = vmatpush1.msra.mxu0 %v861
    %877 = vmatprep.subr.mxu0 0.0
    %878 = vmatpush1.msra.mxu0 0.0
    %879 = vmatprep.subr.mxu0 0.0
    %880 = vmatpush1.msra.mxu0 0.0
    %881 = vmatprep.subr.mxu0 0.0
    %882 = vmatpush1.msra.mxu0 0.0
    %883 = vmatprep.subr.mxu0 0.0
    %884 = vmatpush1.msra.mxu0 0.0
    %885 = vmatprep.subr.mxu0 0.0
    %886 = vmatpush1.msra.mxu0 0.0
    %887 = vmatprep.subr.mxu0 0.0
    %888 = vmatpush1.msra.mxu0 0.0
    %889 = vmatprep.subr.mxu0 0.0
    %890 = vmatpush1.msra.mxu0 0.0
    %891 = vmatprep.subr.mxu0 0.0
    %892 = vmatpush1.msra.mxu0 0.0
    %893 = vmatprep.subr.mxu0 0.0
    %894 = vmatpush1.msra.mxu0 0.0
    %895 = vmatprep.subr.mxu0 0.0
    %896 = vmatpush1.msra.mxu0 0.0
    %897 = vmatprep.subr.mxu0 0.0
    %898 = vmatpush1.msra.mxu0 0.0
    %899 = vmatprep.subr.mxu0 0.0
    %900 = vmatpush1.msra.mxu0 0.0
    %901 = vmatprep.subr.mxu0 0.0
    %902 = vmatpush1.msra.mxu0 0.0
    %903 = vmatprep.subr.mxu0 0.0
    %904 = vmatpush1.msra.mxu0 0.0
    %905 = vmatprep.subr.mxu0 0.0
    %906 = vmatpush1.msra.mxu0 0.0
    %907 = vmatprep.subr.mxu0 0.0
    %908 = vmatpush1.msra.mxu0 0.0
    %909 = vmatprep.subr.mxu0 0.0
    %910 = vmatpush1.msra.mxu0 0.0
    %911 = vmatprep.subr.mxu0 0.0
    %912 = vmatpush1.msra.mxu0 0.0
    %913 = vmatprep.subr.mxu0 0.0
    %914 = vmatpush1.msra.mxu0 0.0
    %915 = vmatprep.subr.mxu0 0.0
    %916 = vmatpush1.msra.mxu0 0.0
    %917 = vmatprep.subr.mxu0 0.0
    %918 = vmatpush1.msra.mxu0 0.0
    %919 = vmatprep.subr.mxu0 0.0
    %920 = vmatpush1.msra.mxu0 0.0
    %921 = vmatprep.subr.mxu0 0.0
    %922 = vmatpush1.msra.mxu0 0.0
    %923 = vmatprep.subr.mxu0 0.0
    %924 = vmatpush1.msra.mxu0 0.0
    %925 = vmatprep.subr.mxu0 0.0
    %926 = vmatpush1.msra.mxu0 0.0
    %927 = vmatprep.subr.mxu0 0.0
    %928 = vmatpush1.msra.mxu0 0.0
    %929 = vmatprep.subr.mxu0 0.0
    %930 = vmatpush1.msra.mxu0 0.0
    %931 = vmatprep.subr.mxu0 0.0
    %932 = vmatpush1.msra.mxu0 0.0
    %933 = vmatprep.mubr.f32.mxu0 0.0
    %934 = vmatmul.mubr.f32.gmra.mrb[0].mxu0 %v867
    %v935 = vpop.f32.mrb[0].mxu0
    %v936 = vadd.f32 %v849, %v935
    %v937 = vpop.f32.mrb[0].mxu0
    %938 = vdwg.mxu0
    %v939 = vadd.f32 %v50, %v936
    %v940 = vld [vmem:[%s1 + $0x4] sm:$0x1]
    %v941 = vld [vmem:[%s1 + $0x5] sm:$0x1]
    %v942 = vsel %vm52, %v939, 0.0
    %943 = vadd.xlane.f32.xlu0 %v942
    %v944 = vpop.xlane.xlu0 %943
    %v945 = vrcp.pop 32.0
    %v946 = vmul.f32 %v944, %v945
    %v947 = vsub.f32 %v939, %v946
    %v948 = vmul.f32 %v947, %v947
    %v949 = vsel %vm52, %v948, 0.0
    %950 = vadd.xlane.f32.xlu0 %v949
    %v951 = vpop.xlane.xlu0 %950
    %v952 = vmul.f32 %v951, %v945
    %v953 = vadd.f32 %v952, 1e-05
    %v954 = vrsqrt.pop %v953
    %v955 = vmul.f32 %v947, %v954
    %v956 = vlaneseq
    %v957 = vshrl.u32 %v956, 7
    %v958 = vsub.s32 0, %v957
    %v959 = vrot.slane %v940, %v958
    %v960 = vmul.f32 %v955, %v959
    %v961 = vlaneseq
    %v962 = vshrl.u32 %v961, 7
    %v963 = vsub.s32 0, %v962
    %v964 = vrot.slane %v941, %v963
    %v965 = vadd.f32 %v960, %v964
    %v966 = vld [vmem:[#allocation2 + $0x20] sm:$0xff]
    %v967 = vld [vmem:[#allocation2 + $0x28] sm:$0xff]
    %v968 = vld [vmem:[#allocation2 + $0x30] sm:$0xff]
    %v969 = vld [vmem:[#allocation2 + $0x38] sm:$0xff]
    %v970 = vld [vmem:[%s1 + $0x6] sm:$0x1]
    %v971 = vlaneseq
    %v972 = vshrl.u32 %v971, 7
    %v973 = vsub.s32 0, %v972
    %v974 = vrot.slane %v970, %v973
    %v976 = vsel %vm52, %v965, 0
    %978 = vmatprep.subr.mxu0 0.0
    %979 = vmatpush1.msra.mxu0 %v966
    %980 = vmatprep.subr.mxu0 0.0
    %981 = vmatpush1.msra.mxu0 %v967
    %982 = vmatprep.subr.mxu0 0.0
    %983 = vmatpush1.msra.mxu0 %v968
    %984 = vmatprep.subr.mxu0 0.0
    %985 = vmatpush1.msra.mxu0 %v969
    %986 = vmatprep.subr.mxu0 0.0
    %987 = vmatpush1.msra.mxu0 0.0
    %988 = vmatprep.subr.mxu0 0.0
    %989 = vmatpush1.msra.mxu0 0.0
    %990 = vmatprep.subr.mxu0 0.0
    %991 = vmatpush1.msra.mxu0 0.0
    %992 = vmatprep.subr.mxu0 0.0
    %993 = vmatpush1.msra.mxu0 0.0
    %994 = vmatprep.subr.mxu0 0.0
    %995 = vmatpush1.msra.mxu0 0.0
    %996 = vmatprep.subr.mxu0 0.0
    %997 = vmatpush1.msra.mxu0 0.0
    %998 = vmatprep.subr.mxu0 0.0
    %999 = vmatpush1.msra.mxu0 0.0
    %1000 = vmatprep.subr.mxu0 0.0
    %1001 = vmatpush1.msra.mxu0 0.0
    %1002 = vmatprep.subr.mxu0 0.0
    %1003 = vmatpush1.msra.mxu0 0.0
    %1004 = vmatprep.subr.mxu0 0.0
    %1005 = vmatpush1.msra.mxu0 0.0
    %1006 = vmatprep.subr.mxu0 0.0
    %1007 = vmatpush1.msra.mxu0 0.0
    %1008 = vmatprep.subr.mxu0 0.0
    %1009 = vmatpush1.msra.mxu0 0.0
    %1010 = vmatprep.subr.mxu0 0.0
    %1011 = vmatpush1.msra.mxu0 0.0
    %1012 = vmatprep.subr.mxu0 0.0
    %1013 = vmatpush1.msra.mxu0 0.0
    %1014 = vmatprep.subr.mxu0 0.0
    %1015 = vmatpush1.msra.mxu0 0.0
    %1016 = vmatprep.subr.mxu0 0.0
    %1017 = vmatpush1.msra.mxu0 0.0
    %1018 = vmatprep.subr.mxu0 0.0
    %1019 = vmatpush1.msra.mxu0 0.0
    %1020 = vmatprep.subr.mxu0 0.0
    %1021 = vmatpush1.msra.mxu0 0.0
    %1022 = vmatprep.subr.mxu0 0.0
    %1023 = vmatpush1.msra.mxu0 0.0
    %1024 = vmatprep.subr.mxu0 0.0
    %1025 = vmatpush1.msra.mxu0 0.0
    %1026 = vmatprep.subr.mxu0 0.0
    %1027 = vmatpush1.msra.mxu0 0.0
    %1028 = vmatprep.subr.mxu0 0.0
    %1029 = vmatpush1.msra.mxu0 0.0
    %1030 = vmatprep.subr.mxu0 0.0
    %1031 = vmatpush1.msra.mxu0 0.0
    %1032 = vmatprep.subr.mxu0 0.0
    %1033 = vmatpush1.msra.mxu0 0.0
    %1034 = vmatprep.subr.mxu0 0.0
    %1035 = vmatpush1.msra.mxu0 0.0
    %1036 = vmatprep.subr.mxu0 0.0
    %1037 = vmatpush1.msra.mxu0 0.0
    %1038 = vmatprep.subr.mxu0 0.0
    %1039 = vmatpush1.msra.mxu0 0.0
    %1040 = vmatprep.subr.mxu0 0.0
    %1041 = vmatpush1.msra.mxu0 0.0
    %1042 = vmatprep.mubr.f32.mxu0 0.0
    %1043 = vmatmul.mubr.f32.gmra.mrb[0].mxu0 %v976
    %v1044 = vpop.f32.mrb[0].mxu0
    %v1045 = vadd.f32 %v974, %v1044
    %v1046 = vpop.f32.mrb[0].mxu0
    %1047 = vdwg.mxu0
    %v1048 = vmax.f32 %v1045, 0.0
    %v1049 = vld [vmem:[#allocation2 + $0x20] sm:$0xff]
    %v1050 = vld [vmem:[#allocation2 + $0x28] sm:$0xff]
    %v1051 = vld [vmem:[#allocation2 + $0x30] sm:$0xff]
    %v1052 = vld [vmem:[#allocation2 + $0x38] sm:$0xff]
    %v1053 = vld [vmem:[#allocation2 + $0x40] sm:$0xff]
    %v1054 = vld [vmem:[#allocation2 + $0x48] sm:$0xff]
    %v1055 = vld [vmem:[#allocation2 + $0x50] sm:$0xff]
    %v1056 = vld [vmem:[#allocation2 + $0x58] sm:$0xff]
    %v1057 = vld [vmem:[%s1 + $0x7] sm:$0x1]
    %v1058 = vlaneseq
    %v1059 = vshrl.u32 %v1058, 7
    %v1060 = vsub.s32 0, %v1059
    %v1061 = vrot.slane %v1057, %v1060
    %1070 = vrot.lane.b32.xlu0 %v1049, 64
    %v1071 = vpop.permute.xlu0 %1070
    %1072 = vrot.lane.b32.xlu0 %v1050, 64
    %v1073 = vpop.permute.xlu0 %1072
    %1074 = vrot.lane.b32.xlu0 %v1051, 64
    %v1075 = vpop.permute.xlu0 %1074
    %1076 = vrot.lane.b32.xlu0 %v1052, 64
    %v1077 = vpop.permute.xlu0 %1076
    %1078 = vrot.lane.b32.xlu0 %v1053, 64
    %v1079 = vpop.permute.xlu0 %1078
    %1080 = vrot.lane.b32.xlu0 %v1054, 64
    %v1081 = vpop.permute.xlu0 %1080
    %1082 = vrot.lane.b32.xlu0 %v1055, 64
    %v1083 = vpop.permute.xlu0 %1082
    %1084 = vrot.lane.b32.xlu0 %v1056, 64
    %v1085 = vpop.permute.xlu0 %1084
    %vm1094 = vcmask 523264
    %v1096 = vsel %vm1094, %v1048, 0
    %1098 = vmatprep.subr.mxu0 0.0
    %1099 = vmatpush1.msra.mxu0 %v1071
    %1100 = vmatprep.subr.mxu0 0.0
    %1101 = vmatpush1.msra.mxu0 %v1073
    %1102 = vmatprep.subr.mxu0 0.0
    %1103 = vmatpush1.msra.mxu0 %v1075
    %1104 = vmatprep.subr.mxu0 0.0
    %1105 = vmatpush1.msra.mxu0 %v1077
    %1106 = vmatprep.subr.mxu0 0.0
    %1107 = vmatpush1.msra.mxu0 %v1079
    %1108 = vmatprep.subr.mxu0 0.0
    %1109 = vmatpush1.msra.mxu0 %v1081
    %1110 = vmatprep.subr.mxu0 0.0
    %1111 = vmatpush1.msra.mxu0 %v1083
    %1112 = vmatprep.subr.mxu0 0.0
    %1113 = vmatpush1.msra.mxu0 %v1085
    %1114 = vmatprep.subr.mxu0 0.0
    %1115 = vmatpush1.msra.mxu0 0.0
    %1116 = vmatprep.subr.mxu0 0.0
    %1117 = vmatpush1.msra.mxu0 0.0
    %1118 = vmatprep.subr.mxu0 0.0
    %1119 = vmatpush1.msra.mxu0 0.0
    %1120 = vmatprep.subr.mxu0 0.0
    %1121 = vmatpush1.msra.mxu0 0.0
    %1122 = vmatprep.subr.mxu0 0.0
    %1123 = vmatpush1.msra.mxu0 0.0
    %1124 = vmatprep.subr.mxu0 0.0
    %1125 = vmatpush1.msra.mxu0 0.0
    %1126 = vmatprep.subr.mxu0 0.0
    %1127 = vmatpush1.msra.mxu0 0.0
    %1128 = vmatprep.subr.mxu0 0.0
    %1129 = vmatpush1.msra.mxu0 0.0
    %1130 = vmatprep.subr.mxu0 0.0
    %1131 = vmatpush1.msra.mxu0 0.0
    %1132 = vmatprep.subr.mxu0 0.0
    %1133 = vmatpush1.msra.mxu0 0.0
    %1134 = vmatprep.subr.mxu0 0.0
    %1135 = vmatpush1.msra.mxu0 0.0
    %1136 = vmatprep.subr.mxu0 0.0
    %1137 = vmatpush1.msra.mxu0 0.0
    %1138 = vmatprep.subr.mxu0 0.0
    %1139 = vmatpush1.msra.mxu0 0.0
    %1140 = vmatprep.subr.mxu0 0.0
    %1141 = vmatpush1.msra.mxu0 0.0
    %1142 = vmatprep.subr.mxu0 0.0
    %1143 = vmatpush1.msra.mxu0 0.0
    %1144 = vmatprep.subr.mxu0 0.0
    %1145 = vmatpush1.msra.mxu0 0.0
    %1146 = vmatprep.subr.mxu0 0.0
    %1147 = vmatpush1.msra.mxu0 0.0
    %1148 = vmatprep.subr.mxu0 0.0
    %1149 = vmatpush1.msra.mxu0 0.0
    %1150 = vmatprep.subr.mxu0 0.0
    %1151 = vmatpush1.msra.mxu0 0.0
    %1152 = vmatprep.subr.mxu0 0.0
    %1153 = vmatpush1.msra.mxu0 0.0
    %1154 = vmatprep.subr.mxu0 0.0
    %1155 = vmatpush1.msra.mxu0 0.0
    %1156 = vmatprep.subr.mxu0 0.0
    %1157 = vmatpush1.msra.mxu0 0.0
    %1158 = vmatprep.subr.mxu0 0.0
    %1159 = vmatpush1.msra.mxu0 0.0
    %1160 = vmatprep.subr.mxu0 0.0
    %1161 = vmatpush1.msra.mxu0 0.0
    %1162 = vmatprep.mubr.f32.mxu0 0.0
    %1163 = vmatmul.mubr.f32.gmra.mrb[0].mxu0 %v1096
    %v1164 = vpop.f32.mrb[0].mxu0
    %v1165 = vadd.f32 %v1061, %v1164
    %v1166 = vpop.f32.mrb[0].mxu0
    %1167 = vdwg.mxu0
    %v1168 = vadd.f32 %v965, %v1165
    %v1169 = vld [vmem:[%s1 + $0x8] sm:$0x1]
    %v1170 = vld [vmem:[%s1 + $0x9] sm:$0x1]
    %v1171 = vsel %vm52, %v1168, 0.0
    %1172 = vadd.xlane.f32.xlu0 %v1171
    %v1173 = vpop.xlane.xlu0 %1172
    %v1174 = vmul.f32 %v1173, %v945
    %v1175 = vsub.f32 %v1168, %v1174
    %v1176 = vmul.f32 %v1175, %v1175
    %v1177 = vsel %vm52, %v1176, 0.0
    %1178 = vadd.xlane.f32.xlu0 %v1177
    %v1179 = vpop.xlane.xlu0 %1178
    %v1180 = vmul.f32 %v1179, %v945
    %v1181 = vadd.f32 %v1180, 1e-05
    %v1182 = vrsqrt.pop %v1181
    %v1183 = vmul.f32 %v1175, %v1182
    %v1184 = vlaneseq
    %v1185 = vshrl.u32 %v1184, 7
    %v1186 = vsub.s32 0, %v1185
    %v1187 = vrot.slane %v1169, %v1186
    %v1188 = vmul.f32 %v1183, %v1187
    %v1189 = vlaneseq
    %v1190 = vshrl.u32 %v1189, 7
    %v1191 = vsub.s32 0, %v1190
    %v1192 = vrot.slane %v1170, %v1191
    %v1193 = vadd.f32 %v1188, %v1192
    %v1194 = vld [vmem:[#allocation2 + $0x60] sm:$0xff]
    %v1195 = vld [vmem:[#allocation2 + $0x68] sm:$0xff]
    %v1196 = vld [vmem:[#allocation2 + $0x70] sm:$0xff]
    %v1197 = vld [vmem:[#allocation2 + $0x78] sm:$0xff]
    %v1198 = vld [vmem:[%s1 + $0xa] sm:$0x1]
    %v1199 = vld [vmem:[%s1 + $0xb] sm:$0x1]
    %v1200 = vlaneseq
    %v1201 = vshrl.u32 %v1200, 7
    %v1202 = vsub.s32 0, %v1201
    %v1203 = vrot.slane %v1198, %v1202
    %v1205 = vsel %vm52, %v1193, 0
    %1207 = vmatprep.subr.mxu0 0.0
    %1208 = vmatpush1.msra.mxu0 %v1194
    %1209 = vmatprep.subr.mxu0 0.0
    %1210 = vmatpush1.msra.mxu0 %v1195
    %1211 = vmatprep.subr.mxu0 0.0
    %1212 = vmatpush1.msra.mxu0 %v1196
    %1213 = vmatprep.subr.mxu0 0.0
    %1214 = vmatpush1.msra.mxu0 %v1197
    %1215 = vmatprep.subr.mxu0 0.0
    %1216 = vmatpush1.msra.mxu0 0.0
    %1217 = vmatprep.subr.mxu0 0.0
    %1218 = vmatpush1.msra.mxu0 0.0
    %1219 = vmatprep.subr.mxu0 0.0
    %1220 = vmatpush1.msra.mxu0 0.0
    %1221 = vmatprep.subr.mxu0 0.0
    %1222 = vmatpush1.msra.mxu0 0.0
    %1223 = vmatprep.subr.mxu0 0.0
    %1224 = vmatpush1.msra.mxu0 0.0
    %1225 = vmatprep.subr.mxu0 0.0
    %1226 = vmatpush1.msra.mxu0 0.0
    %1227 = vmatprep.subr.mxu0 0.0
    %1228 = vmatpush1.msra.mxu0 0.0
    %1229 = vmatprep.subr.mxu0 0.0
    %1230 = vmatpush1.msra.mxu0 0.0
    %1231 = vmatprep.subr.mxu0 0.0
    %1232 = vmatpush1.msra.mxu0 0.0
    %1233 = vmatprep.subr.mxu0 0.0
    %1234 = vmatpush1.msra.mxu0 0.0
    %1235 = vmatprep.subr.mxu0 0.0
    %1236 = vmatpush1.msra.mxu0 0.0
    %1237 = vmatprep.subr.mxu0 0.0
    %1238 = vmatpush1.msra.mxu0 0.0
    %1239 = vmatprep.subr.mxu0 0.0
    %1240 = vmatpush1.msra.mxu0 0.0
    %1241 = vmatprep.subr.mxu0 0.0
    %1242 = vmatpush1.msra.mxu0 0.0
    %1243 = vmatprep.subr.mxu0 0.0
    %1244 = vmatpush1.msra.mxu0 0.0
    %1245 = vmatprep.subr.mxu0 0.0
    %1246 = vmatpush1.msra.mxu0 0.0
    %1247 = vmatprep.subr.mxu0 0.0
    %1248 = vmatpush1.msra.mxu0 0.0
    %1249 = vmatprep.subr.mxu0 0.0
    %1250 = vmatpush1.msra.mxu0 0.0
    %1251 = vmatprep.subr.mxu0 0.0
    %1252 = vmatpush1.msra.mxu0 0.0
    %1253 = vmatprep.subr.mxu0 0.0
    %1254 = vmatpush1.msra.mxu0 0.0
    %1255 = vmatprep.subr.mxu0 0.0
    %1256 = vmatpush1.msra.mxu0 0.0
    %1257 = vmatprep.subr.mxu0 0.0
    %1258 = vmatpush1.msra.mxu0 0.0
    %1259 = vmatprep.subr.mxu0 0.0
    %1260 = vmatpush1.msra.mxu0 0.0
    %1261 = vmatprep.subr.mxu0 0.0
    %1262 = vmatpush1.msra.mxu0 0.0
    %1263 = vmatprep.subr.mxu0 0.0
    %1264 = vmatpush1.msra.mxu0 0.0
    %1265 = vmatprep.subr.mxu0 0.0
    %1266 = vmatpush1.msra.mxu0 0.0
    %1267 = vmatprep.subr.mxu0 0.0
    %1268 = vmatpush1.msra.mxu0 0.0
    %1269 = vmatprep.subr.mxu0 0.0
    %1270 = vmatpush1.msra.mxu0 0.0
    %1271 = vmatprep.mubr.f32.mxu0 0.0
    %1272 = vmatmul.mubr.f32.gmra.mrb[0].mxu0 %v1205
    %v1273 = vpop.f32.mrb[0].mxu0
    %v1274 = vadd.f32 %v1203, %v1273
    %v1275 = vpop.f32.mrb[0].mxu0
    %1276 = vdwg.mxu0
    %1278 = vrot.lane.b32.xlu0 %v1274, 96
    %v1279 = vpop.permute.xlu0 %1278
    %v1280 = vsel %vm168, %v1274, 0
    %v1282 = vsel %vm168, %v1279, 0
    %1284 = vmatprep.subr.mxu0 0.0
    %1285 = vmatpush1.xpose.msra.mxu0 %v1282
    %1286 = vmatprep.subr.mxu0 0.0
    %1287 = vmatpush1.xpose.msra.mxu0 0.0
    %1288 = vmatprep.subr.mxu0 0.0
    %1289 = vmatpush1.xpose.msra.mxu0 0.0
    %1290 = vmatprep.subr.mxu0 0.0
    %1291 = vmatpush1.xpose.msra.mxu0 0.0
    %1292 = vmatprep.subr.mxu0 0.0
    %1293 = vmatpush1.xpose.msra.mxu0 0.0
    %1294 = vmatprep.subr.mxu0 0.0
    %1295 = vmatpush1.xpose.msra.mxu0 0.0
    %1296 = vmatprep.subr.mxu0 0.0
    %1297 = vmatpush1.xpose.msra.mxu0 0.0
    %1298 = vmatprep.subr.mxu0 0.0
    %1299 = vmatpush1.xpose.msra.mxu0 0.0
    %1300 = vmatprep.subr.mxu0 0.0
    %1301 = vmatpush1.xpose.msra.mxu0 0.0
    %1302 = vmatprep.subr.mxu0 0.0
    %1303 = vmatpush1.xpose.msra.mxu0 0.0
    %1304 = vmatprep.subr.mxu0 0.0
    %1305 = vmatpush1.xpose.msra.mxu0 0.0
    %1306 = vmatprep.subr.mxu0 0.0
    %1307 = vmatpush1.xpose.msra.mxu0 0.0
    %1308 = vmatprep.subr.mxu0 0.0
    %1309 = vmatpush1.xpose.msra.mxu0 0.0
    %1310 = vmatprep.subr.mxu0 0.0
    %1311 = vmatpush1.xpose.msra.mxu0 0.0
    %1312 = vmatprep.subr.mxu0 0.0
    %1313 = vmatpush1.xpose.msra.mxu0 0.0
    %1314 = vmatprep.subr.mxu0 0.0
    %1315 = vmatpush1.xpose.msra.mxu0 0.0
    %1316 = vmatprep.subr.mxu0 0.0
    %1317 = vmatpush1.xpose.msra.mxu0 0.0
    %1318 = vmatprep.subr.mxu0 0.0
    %1319 = vmatpush1.xpose.msra.mxu0 0.0
    %1320 = vmatprep.subr.mxu0 0.0
    %1321 = vmatpush1.xpose.msra.mxu0 0.0
    %1322 = vmatprep.subr.mxu0 0.0
    %1323 = vmatpush1.xpose.msra.mxu0 0.0
    %1324 = vmatprep.subr.mxu0 0.0
    %1325 = vmatpush1.xpose.msra.mxu0 0.0
    %1326 = vmatprep.subr.mxu0 0.0
    %1327 = vmatpush1.xpose.msra.mxu0 0.0
    %1328 = vmatprep.subr.mxu0 0.0
    %1329 = vmatpush1.xpose.msra.mxu0 0.0
    %1330 = vmatprep.subr.mxu0 0.0
    %1331 = vmatpush1.xpose.msra.mxu0 0.0
    %1332 = vmatprep.subr.mxu0 0.0
    %1333 = vmatpush1.xpose.msra.mxu0 0.0
    %1334 = vmatprep.subr.mxu0 0.0
    %1335 = vmatpush1.xpose.msra.mxu0 0.0
    %1336 = vmatprep.subr.mxu0 0.0
    %1337 = vmatpush1.xpose.msra.mxu0 0.0
    %1338 = vmatprep.subr.mxu0 0.0
    %1339 = vmatpush1.xpose.msra.mxu0 0.0
    %1340 = vmatprep.subr.mxu0 0.0
    %1341 = vmatpush1.xpose.msra.mxu0 0.0
    %1342 = vmatprep.subr.mxu0 0.0
    %1343 = vmatpush1.xpose.msra.mxu0 0.0
    %1344 = vmatprep.subr.mxu0 0.0
    %1345 = vmatpush1.xpose.msra.mxu0 0.0
    %1346 = vmatprep.subr.mxu0 0.0
    %1347 = vmatpush1.xpose.msra.mxu0 0.0
    %1348 = vmatprep.mubr.f32.mxu0 0.0
    %1349 = vmatmul.mubr.f32.gmra.mrb[0].mxu0 %v1280
    %v1350 = vpop.f32.mrb[0].mxu0
    %v1351 = vadd.f32 0.0, %v1350
    %v1352 = vpop.f32.mrb[0].mxu0
    %1353 = vdwg.mxu0
    %v1354 = vmul.f32 %v1351, 0.35355338
    %v1355 = vsel %vm168, %v1354, -inf
    %1356 = vmax.xlane.f32.xlu0 %v1355
    %v1357 = vpop.xlane.xlu0 %1356
    %v1358 = vsub.f32 %v1354, %v1357
    %v1359 = vmul.f32 %v1358, 1.442695
    %v1360 = vpow.pop %v1359
    %v1361 = vsel %vm168, %v1360, 0.0
    %1362 = vadd.xlane.f32.xlu0 %v1361
    %v1363 = vpop.xlane.xlu0 %1362
    %v1364 = vrcp.pop %v1363
    %v1365 = vmul.f32 %v1360, %v1364
    %1366 = vrot.lane.b32.xlu0 %v1274, 64
    %v1367 = vpop.permute.xlu0 %1366
    %v1370 = vsel %vm168, %v1365, 0
    %1372 = vmatprep.subr.mxu0 0.0
    %1373 = vmatpush1.msra.mxu0 %v1367
    %1374 = vmatprep.subr.mxu0 0.0
    %1375 = vmatpush1.msra.mxu0 0.0
    %1376 = vmatprep.subr.mxu0 0.0
    %1377 = vmatpush1.msra.mxu0 0.0
    %1378 = vmatprep.subr.mxu0 0.0
    %1379 = vmatpush1.msra.mxu0 0.0
    %1380 = vmatprep.subr.mxu0 0.0
    %1381 = vmatpush1.msra.mxu0 0.0
    %1382 = vmatprep.subr.mxu0 0.0
    %1383 = vmatpush1.msra.mxu0 0.0
    %1384 = vmatprep.subr.mxu0 0.0
    %1385 = vmatpush1.msra.mxu0 0.0
    %1386 = vmatprep.subr.mxu0 0.0
    %1387 = vmatpush1.msra.mxu0 0.0
    %1388 = vmatprep.subr.mxu0 0.0
    %1389 = vmatpush1.msra.mxu0 0.0
    %1390 = vmatprep.subr.mxu0 0.0
    %1391 = vmatpush1.msra.mxu0 0.0
    %1392 = vmatprep.subr.mxu0 0.0
    %1393 = vmatpush1.msra.mxu0 0.0
    %1394 = vmatprep.subr.mxu0 0.0
    %1395 = vmatpush1.msra.mxu0 0.0
    %1396 = vmatprep.subr.mxu0 0.0
    %1397 = vmatpush1.msra.mxu0 0.0
    %1398 = vmatprep.subr.mxu0 0.0
    %1399 = vmatpush1.msra.mxu0 0.0
    %1400 = vmatprep.subr.mxu0 0.0
    %1401 = vmatpush1.msra.mxu0 0.0
    %1402 = vmatprep.subr.mxu0 0.0
    %1403 = vmatpush1.msra.mxu0 0.0
    %1404 = vmatprep.subr.mxu0 0.0
    %1405 = vmatpush1.msra.mxu0 0.0
    %1406 = vmatprep.subr.mxu0 0.0
    %1407 = vmatpush1.msra.mxu0 0.0
    %1408 = vmatprep.subr.mxu0 0.0
    %1409 = vmatpush1.msra.mxu0 0.0
    %1410 = vmatprep.subr.mxu0 0.0
    %1411 = vmatpush1.msra.mxu0 0.0
    %1412 = vmatprep.subr.mxu0 0.0
    %1413 = vmatpush1.msra.mxu0 0.0
    %1414 = vmatprep.subr.mxu0 0.0
    %1415 = vmatpush1.msra.mxu0 0.0
    %1416 = vmatprep.subr.mxu0 0.0
    %1417 = vmatpush1.msra.mxu0 0.0
    %1418 = vmatprep.subr.mxu0 0.0
    %1419 = vmatpush1.msra.mxu0 0.0
    %1420 = vmatprep.subr.mxu0 0.0
    %1421 = vmatpush1.msra.mxu0 0.0
    %1422 = vmatprep.subr.mxu0 0.0
    %1423 = vmatpush1.msra.mxu0 0.0
    %1424 = vmatprep.subr.mxu0 0.0
    %1425 = vmatpush1.msra.mxu0 0.0
    %1426 = vmatprep.subr.mxu0 0.0
    %1427 = vmatpush1.msra.mxu0 0.0
    %1428 = vmatprep.subr.mxu0 0.0
    %1429 = vmatpush1.msra.mxu0 0.0
    %1430 = vmatprep.subr.mxu0 0.0
    %1431 = vmatpush1.msra.mxu0 0.0
    %1432 = vmatprep.subr.mxu0 0.0
    %1433 = vmatpush1.msra.mxu0 0.0
    %1434 = vmatprep.subr.mxu0 0.0
    %1435 = vmatpush1.msra.mxu0 0.0
    %1436 = vmatprep.mubr.f32.mxu0 0.0
    %1437 = vmatmul.mubr.f32.gmra.mrb[0].mxu0 %v1370
    %v1438 = vpop.f32.mrb[0].mxu0
    %v1439 = vadd.f32 0.0, %v1438
    %v1440 = vpop.f32.mrb[0].mxu0
    %1441 = vdwg.mxu0
    %1442 = vrot.lane.b32.xlu0 %v1274, 120
    %v1443 = vpop.permute.xlu0 %1442
    %1444 = vrot.lane.b32.xlu0 %v1274, 88
    %v1445 = vpop.permute.xlu0 %1444
    %v1446 = vsel %vm168, %v1443, 0
    %v1448 = vsel %vm168, %v1445, 0
    %1450 = vmatprep.subr.mxu0 0.0
    %1451 = vmatpush1.xpose.msra.mxu0 %v1448
    %1452 = vmatprep.subr.mxu0 0.0
    %1453 = vmatpush1.xpose.msra.mxu0 0.0
    %1454 = vmatprep.subr.mxu0 0.0
    %1455 = vmatpush1.xpose.msra.mxu0 0.0
    %1456 = vmatprep.subr.mxu0 0.0
    %1457 = vmatpush1.xpose.msra.mxu0 0.0
    %1458 = vmatprep.subr.mxu0 0.0
    %1459 = vmatpush1.xpose.msra.mxu0 0.0
    %1460 = vmatprep.subr.mxu0 0.0
    %1461 = vmatpush1.xpose.msra.mxu0 0.0
    %1462 = vmatprep.subr.mxu0 0.0
    %1463 = vmatpush1.xpose.msra.mxu0 0.0
    %1464 = vmatprep.subr.mxu0 0.0
    %1465 = vmatpush1.xpose.msra.mxu0 0.0
    %1466 = vmatprep.subr.mxu0 0.0
    %1467 = vmatpush1.xpose.msra.mxu0 0.0
    %1468 = vmatprep.subr.mxu0 0.0
    %1469 = vmatpush1.xpose.msra.mxu0 0.0
    %1470 = vmatprep.subr.mxu0 0.0
    %1471 = vmatpush1.xpose.msra.mxu0 0.0
    %1472 = vmatprep.subr.mxu0 0.0
    %1473 = vmatpush1.xpose.msra.mxu0 0.0
    %1474 = vmatprep.subr.mxu0 0.0
    %1475 = vmatpush1.xpose.msra.mxu0 0.0
    %1476 = vmatprep.subr.mxu0 0.0
    %1477 = vmatpush1.xpose.msra.mxu0 0.0
    %1478 = vmatprep.subr.mxu0 0.0
    %1479 = vmatpush1.xpose.msra.mxu0 0.0
    %1480 = vmatprep.subr.mxu0 0.0
    %1481 = vmatpush1.xpose.msra.mxu0 0.0
    %1482 = vmatprep.subr.mxu0 0.0
    %1483 = vmatpush1.xpose.msra.mxu0 0.0
    %1484 = vmatprep.subr.mxu0 0.0
    %1485 = vmatpush1.xpose.msra.mxu0 0.0
    %1486 = vmatprep.subr.mxu0 0.0
    %1487 = vmatpush1.xpose.msra.mxu0 0.0
    %1488 = vmatprep.subr.mxu0 0.0
    %1489 = vmatpush1.xpose.msra.mxu0 0.0
    %1490 = vmatprep.subr.mxu0 0.0
    %1491 = vmatpush1.xpose.msra.mxu0 0.0
    %1492 = vmatprep.subr.mxu0 0.0
    %1493 = vmatpush1.xpose.msra.mxu0 0.0
    %1494 = vmatprep.subr.mxu0 0.0
    %1495 = vmatpush1.xpose.msra.mxu0 0.0
    %1496 = vmatprep.subr.mxu0 0.0
    %1497 = vmatpush1.xpose.msra.mxu0 0.0
    %1498 = vmatprep.subr.mxu0 0.0
    %1499 = vmatpush1.xpose.msra.mxu0 0.0
    %1500 = vmatprep.subr.mxu0 0.0
    %1501 = vmatpush1.xpose.msra.mxu0 0.0
    %1502 = vmatprep.subr.mxu0 0.0
    %1503 = vmatpush1.xpose.msra.mxu0 0.0
    %1504 = vmatprep.subr.mxu0 0.0
    %1505 = vmatpush1.xpose.msra.mxu0 0.0
    %1506 = vmatprep.subr.mxu0 0.0
    %1507 = vmatpush1.xpose.msra.mxu0 0.0
    %1508 = vmatprep.subr.mxu0 0.0
    %1509 = vmatpush1.xpose.msra.mxu0 0.0
    %1510 = vmatprep.subr.mxu0 0.0
    %1511 = vmatpush1.xpose.msra.mxu0 0.0
    %1512 = vmatprep.subr.mxu0 0.0
    %1513 = vmatpush1.xpose.msra.mxu0 0.0
    %1514 = vmatprep.mubr.f32.mxu0 0.0
    %1515 = vmatmul.mubr.f32.gmra.mrb[0].mxu0 %v1446
    %v1516 = vpop.f32.mrb[0].mxu0
    %v1517 = vadd.f32 0.0, %v1516
    %v1518 = vpop.f32.mrb[0].mxu0
    %1519 = vdwg.mxu0
    %v1520 = vmul.f32 %v1517, 0.35355338
    %v1521 = vsel %vm168, %v1520, -inf
    %1522 = vmax.xlane.f32.xlu0 %v1521
    %v1523 = vpop.xlane.xlu0 %1522
    %v1524 = vsub.f32 %v1520, %v1523
    %v1525 = vmul.f32 %v1524, 1.442695
    %v1526 = vpow.pop %v1525
    %v1527 = vsel %vm168, %v1526, 0.0
    %1528 = vadd.xlane.f32.xlu0 %v1527
    %v1529 = vpop.xlane.xlu0 %1528
    %v1530 = vrcp.pop %v1529
    %v1531 = vmul.f32 %v1526, %v1530
    %1532 = vrot.lane.b32.xlu0 %v1274, 56
    %v1533 = vpop.permute.xlu0 %1532
    %v1536 = vsel %vm168, %v1531, 0
    %1538 = vmatprep.subr.mxu0 0.0
    %1539 = vmatpush1.msra.mxu0 %v1533
    %1540 = vmatprep.subr.mxu0 0.0
    %1541 = vmatpush1.msra.mxu0 0.0
    %1542 = vmatprep.subr.mxu0 0.0
    %1543 = vmatpush1.msra.mxu0 0.0
    %1544 = vmatprep.subr.mxu0 0.0
    %1545 = vmatpush1.msra.mxu0 0.0
    %1546 = vmatprep.subr.mxu0 0.0
    %1547 = vmatpush1.msra.mxu0 0.0
    %1548 = vmatprep.subr.mxu0 0.0
    %1549 = vmatpush1.msra.mxu0 0.0
    %1550 = vmatprep.subr.mxu0 0.0
    %1551 = vmatpush1.msra.mxu0 0.0
    %1552 = vmatprep.subr.mxu0 0.0
    %1553 = vmatpush1.msra.mxu0 0.0
    %1554 = vmatprep.subr.mxu0 0.0
    %1555 = vmatpush1.msra.mxu0 0.0
    %1556 = vmatprep.subr.mxu0 0.0
    %1557 = vmatpush1.msra.mxu0 0.0
    %1558 = vmatprep.subr.mxu0 0.0
    %1559 = vmatpush1.msra.mxu0 0.0
    %1560 = vmatprep.subr.mxu0 0.0
    %1561 = vmatpush1.msra.mxu0 0.0
    %1562 = vmatprep.subr.mxu0 0.0
    %1563 = vmatpush1.msra.mxu0 0.0
    %1564 = vmatprep.subr.mxu0 0.0
    %1565 = vmatpush1.msra.mxu0 0.0
    %1566 = vmatprep.subr.mxu0 0.0
    %1567 = vmatpush1.msra.mxu0 0.0
    %1568 = vmatprep.subr.mxu0 0.0
    %1569 = vmatpush1.msra.mxu0 0.0
    %1570 = vmatprep.subr.mxu0 0.0
    %1571 = vmatpush1.msra.mxu0 0.0
    %1572 = vmatprep.subr.mxu0 0.0
    %1573 = vmatpush1.msra.mxu0 0.0
    %1574 = vmatprep.subr.mxu0 0.0
    %1575 = vmatpush1.msra.mxu0 0.0
    %1576 = vmatprep.subr.mxu0 0.0
    %1577 = vmatpush1.msra.mxu0 0.0
    %1578 = vmatprep.subr.mxu0 0.0
    %1579 = vmatpush1.msra.mxu0 0.0
    %1580 = vmatprep.subr.mxu0 0.0
    %1581 = vmatpush1.msra.mxu0 0.0
    %1582 = vmatprep.subr.mxu0 0.0
    %1583 = vmatpush1.msra.mxu0 0.0
    %1584 = vmatprep.subr.mxu0 0.0
    %1585 = vmatpush1.msra.mxu0 0.0
    %1586 = vmatprep.subr.mxu0 0.0
    %1587 = vmatpush1.msra.mxu0 0.0
    %1588 = vmatprep.subr.mxu0 0.0
    %1589 = vmatpush1.msra.mxu0 0.0
    %1590 = vmatprep.subr.mxu0 0.0
    %1591 = vmatpush1.msra.mxu0 0.0
    %1592 = vmatprep.subr.mxu0 0.0
    %1593 = vmatpush1.msra.mxu0 0.0
    %1594 = vmatprep.subr.mxu0 0.0
    %1595 = vmatpush1.msra.mxu0 0.0
    %1596 = vmatprep.subr.mxu0 0.0
    %1597 = vmatpush1.msra.mxu0 0.0
    %1598 = vmatprep.subr.mxu0 0.0
    %1599 = vmatpush1.msra.mxu0 0.0
    %1600 = vmatprep.subr.mxu0 0.0
    %1601 = vmatpush1.msra.mxu0 0.0
    %1602 = vmatprep.mubr.f32.mxu0 0.0
    %1603 = vmatmul.mubr.f32.gmra.mrb[0].mxu0 %v1536
    %v1604 = vpop.f32.mrb[0].mxu0
    %v1605 = vadd.f32 0.0, %v1604
    %v1606 = vpop.f32.mrb[0].mxu0
    %1607 = vdwg.mxu0
    %1608 = vrot.lane.b32.xlu0 %v1274, 112
    %v1609 = vpop.permute.xlu0 %1608
    %1610 = vrot.lane.b32.xlu0 %v1274, 80
    %v1611 = vpop.permute.xlu0 %1610
    %v1612 = vsel %vm168, %v1609, 0
    %v1614 = vsel %vm168, %v1611, 0
    %1616 = vmatprep.subr.mxu0 0.0
    %1617 = vmatpush1.xpose.msra.mxu0 %v1614
    %1618 = vmatprep.subr.mxu0 0.0
    %1619 = vmatpush1.xpose.msra.mxu0 0.0
    %1620 = vmatprep.subr.mxu0 0.0
    %1621 = vmatpush1.xpose.msra.mxu0 0.0
    %1622 = vmatprep.subr.mxu0 0.0
    %1623 = vmatpush1.xpose.msra.mxu0 0.0
    %1624 = vmatprep.subr.mxu0 0.0
    %1625 = vmatpush1.xpose.msra.mxu0 0.0
    %1626 = vmatprep.subr.mxu0 0.0
    %1627 = vmatpush1.xpose.msra.mxu0 0.0
    %1628 = vmatprep.subr.mxu0 0.0
    %1629 = vmatpush1.xpose.msra.mxu0 0.0
    %1630 = vmatprep.subr.mxu0 0.0
    %1631 = vmatpush1.xpose.msra.mxu0 0.0
    %1632 = vmatprep.subr.mxu0 0.0
    %1633 = vmatpush1.xpose.msra.mxu0 0.0
    %1634 = vmatprep.subr.mxu0 0.0
    %1635 = vmatpush1.xpose.msra.mxu0 0.0
    %1636 = vmatprep.subr.mxu0 0.0
    %1637 = vmatpush1.xpose.msra.mxu0 0.0
    %1638 = vmatprep.subr.mxu0 0.0
    %1639 = vmatpush1.xpose.msra.mxu0 0.0
    %1640 = vmatprep.subr.mxu0 0.0
    %1641 = vmatpush1.xpose.msra.mxu0 0.0
    %1642 = vmatprep.subr.mxu0 0.0
    %1643 = vmatpush1.xpose.msra.mxu0 0.0
    %1644 = vmatprep.subr.mxu0 0.0
    %1645 = vmatpush1.xpose.msra.mxu0 0.0
    %1646 = vmatprep.subr.mxu0 0.0
    %1647 = vmatpush1.xpose.msra.mxu0 0.0
    %1648 = vmatprep.subr.mxu0 0.0
    %1649 = vmatpush1.xpose.msra.mxu0 0.0
    %1650 = vmatprep.subr.mxu0 0.0
    %1651 = vmatpush1.xpose.msra.mxu0 0.0
    %1652 = vmatprep.subr.mxu0 0.0
    %1653 = vmatpush1.xpose.msra.mxu0 0.0
    %1654 = vmatprep.subr.mxu0 0.0
    %1655 = vmatpush1.xpose.msra.mxu0 0.0
    %1656 = vmatprep.subr.mxu0 0.0
    %1657 = vmatpush1.xpose.msra.mxu0 0.0
    %1658 = vmatprep.subr.mxu0 0.0
    %1659 = vmatpush1.xpose.msra.mxu0 0.0
    %1660 = vmatprep.subr.mxu0 0.0
    %1661 = vmatpush1.xpose.msra.mxu0 0.0
    %1662 = vmatprep.subr.mxu0 0.0
    %1663 = vmatpush1.xpose.msra.mxu0 0.0
    %1664 = vmatprep.subr.mxu0 0.0
    %1665 = vmatpush1.xpose.msra.mxu0 0.0
    %1666 = vmatprep.subr.mxu0 0.0
    %1667 = vmatpush1.xpose.msra.mxu0 0.0
    %1668 = vmatprep.subr.mxu0 0.0
    %1669 = vmatpush1.xpose.msra.mxu0 0.0
    %1670 = vmatprep.subr.mxu0 0.0
    %1671 = vmatpush1.xpose.msra.mxu0 0.0
    %1672 = vmatprep.subr.mxu0 0.0
    %1673 = vmatpush1.xpose.msra.mxu0 0.0
    %1674 = vmatprep.subr.mxu0 0.0
    %1675 = vmatpush1.xpose.msra.mxu0 0.0
    %1676 = vmatprep.subr.mxu0 0.0
    %1677 = vmatpush1.xpose.msra.mxu0 0.0
    %1678 = vmatprep.subr.mxu0 0.0
    %1679 = vmatpush1.xpose.msra.mxu0 0.0
    %1680 = vmatprep.mubr.f32.mxu0 0.0
    %1681 = vmatmul.mubr.f32.gmra.mrb[0].mxu0 %v1612
    %v1682 = vpop.f32.mrb[0].mxu0
    %v1683 = vadd.f32 0.0, %v1682
    %v1684 = vpop.f32.mrb[0].mxu0
    %1685 = vdwg.mxu0
    %v1686 = vmul.f32 %v1683, 0.35355338
    %v1687 = vsel %vm168, %v1686, -inf
    %1688 = vmax.xlane.f32.xlu0 %v1687
    %v1689 = vpop.xlane.xlu0 %1688
    %v1690 = vsub.f32 %v1686, %v1689
    %v1691 = vmul.f32 %v1690, 1.442695
    %v1692 = vpow.pop %v1691
    %v1693 = vsel %vm168, %v1692, 0.0
    %1694 = vadd.xlane.f32.xlu0 %v1693
    %v1695 = vpop.xlane.xlu0 %1694
    %v1696 = vrcp.pop %v1695
    %v1697 = vmul.f32 %v1692, %v1696
    %1698 = vrot.lane.b32.xlu0 %v1274, 48
    %v1699 = vpop.permute.xlu0 %1698
    %v1702 = vsel %vm168, %v1697, 0
    %1704 = vmatprep.subr.mxu0 0.0
    %1705 = vmatpush1.msra.mxu0 %v1699
    %1706 = vmatprep.subr.mxu0 0.0
    %1707 = vmatpush1.msra.mxu0 0.0
    %1708 = vmatprep.subr.mxu0 0.0
    %1709 = vmatpush1.msra.mxu0 0.0
    %1710 = vmatprep.subr.mxu0 0.0
    %1711 = vmatpush1.msra.mxu0 0.0
    %1712 = vmatprep.subr.mxu0 0.0
    %1713 = vmatpush1.msra.mxu0 0.0
    %1714 = vmatprep.subr.mxu0 0.0
    %1715 = vmatpush1.msra.mxu0 0.0
    %1716 = vmatprep.subr.mxu0 0.0
    %1717 = vmatpush1.msra.mxu0 0.0
    %1718 = vmatprep.subr.mxu0 0.0
    %1719 = vmatpush1.msra.mxu0 0.0
    %1720 = vmatprep.subr.mxu0 0.0
    %1721 = vmatpush1.msra.mxu0 0.0
    %1722 = vmatprep.subr.mxu0 0.0
    %1723 = vmatpush1.msra.mxu0 0.0
    %1724 = vmatprep.subr.mxu0 0.0
    %1725 = vmatpush1.msra.mxu0 0.0
    %1726 = vmatprep.subr.mxu0 0.0
    %1727 = vmatpush1.msra.mxu0 0.0
    %1728 = vmatprep.subr.mxu0 0.0
    %1729 = vmatpush1.msra.mxu0 0.0
    %1730 = vmatprep.subr.mxu0 0.0
    %1731 = vmatpush1.msra.mxu0 0.0
    %1732 = vmatprep.subr.mxu0 0.0
    %1733 = vmatpush1.msra.mxu0 0.0
    %1734 = vmatprep.subr.mxu0 0.0
    %1735 = vmatpush1.msra.mxu0 0.0
    %1736 = vmatprep.subr.mxu0 0.0
    %1737 = vmatpush1.msra.mxu0 0.0
    %1738 = vmatprep.subr.mxu0 0.0
    %1739 = vmatpush1.msra.mxu0 0.0
    %1740 = vmatprep.subr.mxu0 0.0
    %1741 = vmatpush1.msra.mxu0 0.0
    %1742 = vmatprep.subr.mxu0 0.0
    %1743 = vmatpush1.msra.mxu0 0.0
    %1744 = vmatprep.subr.mxu0 0.0
    %1745 = vmatpush1.msra.mxu0 0.0
    %1746 = vmatprep.subr.mxu0 0.0
    %1747 = vmatpush1.msra.mxu0 0.0
    %1748 = vmatprep.subr.mxu0 0.0
    %1749 = vmatpush1.msra.mxu0 0.0
    %1750 = vmatprep.subr.mxu0 0.0
    %1751 = vmatpush1.msra.mxu0 0.0
    %1752 = vmatprep.subr.mxu0 0.0
    %1753 = vmatpush1.msra.mxu0 0.0
    %1754 = vmatprep.subr.mxu0 0.0
    %1755 = vmatpush1.msra.mxu0 0.0
    %1756 = vmatprep.subr.mxu0 0.0
    %1757 = vmatpush1.msra.mxu0 0.0
    %1758 = vmatprep.subr.mxu0 0.0
    %1759 = vmatpush1.msra.mxu0 0.0
    %1760 = vmatprep.subr.mxu0 0.0
    %1761 = vmatpush1.msra.mxu0 0.0
    %1762 = vmatprep.subr.mxu0 0.0
    %1763 = vmatpush1.msra.mxu0 0.0
    %1764 = vmatprep.subr.mxu0 0.0
    %1765 = vmatpush1.msra.mxu0 0.0
    %1766 = vmatprep.subr.mxu0 0.0
    %1767 = vmatpush1.msra.mxu0 0.0
    %1768 = vmatprep.mubr.f32.mxu0 0.0
    %1769 = vmatmul.mubr.f32.gmra.mrb[0].mxu0 %v1702
    %v1770 = vpop.f32.mrb[0].mxu0
    %v1771 = vadd.f32 0.0, %v1770
    %v1772 = vpop.f32.mrb[0].mxu0
    %1773 = vdwg.mxu0
    %1774 = vrot.lane.b32.xlu0 %v1274, 104
    %v1775 = vpop.permute.xlu0 %1774
    %1776 = vrot.lane.b32.xlu0 %v1274, 72
    %v1777 = vpop.permute.xlu0 %1776
    %v1778 = vsel %vm168, %v1775, 0
    %v1780 = vsel %vm168, %v1777, 0
    %1782 = vmatprep.subr.mxu0 0.0
    %1783 = vmatpush1.xpose.msra.mxu0 %v1780
    %1784 = vmatprep.subr.mxu0 0.0
    %1785 = vmatpush1.xpose.msra.mxu0 0.0
    %1786 = vmatprep.subr.mxu0 0.0
    %1787 = vmatpush1.xpose.msra.mxu0 0.0
    %1788 = vmatprep.subr.mxu0 0.0
    %1789 = vmatpush1.xpose.msra.mxu0 0.0
    %1790 = vmatprep.subr.mxu0 0.0
    %1791 = vmatpush1.xpose.msra.mxu0 0.0
    %1792 = vmatprep.subr.mxu0 0.0
    %1793 = vmatpush1.xpose.msra.mxu0 0.0
    %1794 = vmatprep.subr.mxu0 0.0
    %1795 = vmatpush1.xpose.msra.mxu0 0.0
    %1796 = vmatprep.subr.mxu0 0.0
    %1797 = vmatpush1.xpose.msra.mxu0 0.0
    %1798 = vmatprep.subr.mxu0 0.0
    %1799 = vmatpush1.xpose.msra.mxu0 0.0
    %1800 = vmatprep.subr.mxu0 0.0
    %1801 = vmatpush1.xpose.msra.mxu0 0.0
    %1802 = vmatprep.subr.mxu0 0.0
    %1803 = vmatpush1.xpose.msra.mxu0 0.0
    %1804 = vmatprep.subr.mxu0 0.0
    %1805 = vmatpush1.xpose.msra.mxu0 0.0
    %1806 = vmatprep.subr.mxu0 0.0
    %1807 = vmatpush1.xpose.msra.mxu0 0.0
    %1808 = vmatprep.subr.mxu0 0.0
    %1809 = vmatpush1.xpose.msra.mxu0 0.0
    %1810 = vmatprep.subr.mxu0 0.0
    %1811 = vmatpush1.xpose.msra.mxu0 0.0
    %1812 = vmatprep.subr.mxu0 0.0
    %1813 = vmatpush1.xpose.msra.mxu0 0.0
    %1814 = vmatprep.subr.mxu0 0.0
    %1815 = vmatpush1.xpose.msra.mxu0 0.0
    %1816 = vmatprep.subr.mxu0 0.0
    %1817 = vmatpush1.xpose.msra.mxu0 0.0
    %1818 = vmatprep.subr.mxu0 0.0
    %1819 = vmatpush1.xpose.msra.mxu0 0.0
    %1820 = vmatprep.subr.mxu0 0.0
    %1821 = vmatpush1.xpose.msra.mxu0 0.0
    %1822 = vmatprep.subr.mxu0 0.0
    %1823 = vmatpush1.xpose.msra.mxu0 0.0
    %1824 = vmatprep.subr.mxu0 0.0
    %1825 = vmatpush1.xpose.msra.mxu0 0.0
    %1826 = vmatprep.subr.mxu0 0.0
    %1827 = vmatpush1.xpose.msra.mxu0 0.0
    %1828 = vmatprep.subr.mxu0 0.0
    %1829 = vmatpush1.xpose.msra.mxu0 0.0
    %1830 = vmatprep.subr.mxu0 0.0
    %1831 = vmatpush1.xpose.msra.mxu0 0.0
    %1832 = vmatprep.subr.mxu0 0.0
    %1833 = vmatpush1.xpose.msra.mxu0 0.0
    %1834 = vmatprep.subr.mxu0 0.0
    %1835 = vmatpush1.xpose.msra.mxu0 0.0
    %1836 = vmatprep.subr.mxu0 0.0
    %1837 = vmatpush1.xpose.msra.mxu0 0.0
    %1838 = vmatprep.subr.mxu0 0.0
    %1839 = vmatpush1.xpose.msra.mxu0 0.0
    %1840 = vmatprep.subr.mxu0 0.0
    %1841 = vmatpush1.xpose.msra.mxu0 0.0
    %1842 = vmatprep.subr.mxu0 0.0
    %1843 = vmatpush1.xpose.msra.mxu0 0.0
    %1844 = vmatprep.subr.mxu0 0.0
    %1845 = vmatpush1.xpose.msra.mxu0 0.0
    %1846 = vmatprep.mubr.f32.mxu0 0.0
    %1847 = vmatmul.mubr.f32.gmra.mrb[0].mxu0 %v1778
    %v1848 = vpop.f32.mrb[0].mxu0
    %v1849 = vadd.f32 0.0, %v1848
    %v1850 = vpop.f32.mrb[0].mxu0
    %1851 = vdwg.mxu0
    %v1852 = vmul.f32 %v1849, 0.35355338
    %v1853 = vsel %vm168, %v1852, -inf
    %1854 = vmax.xlane.f32.xlu0 %v1853
    %v1855 = vpop.xlane.xlu0 %1854
    %v1856 = vsub.f32 %v1852, %v1855
    %v1857 = vmul.f32 %v1856, 1.442695
    %v1858 = vpow.pop %v1857
    %v1859 = vsel %vm168, %v1858, 0.0
    %1860 = vadd.xlane.f32.xlu0 %v1859
    %v1861 = vpop.xlane.xlu0 %1860
    %v1862 = vrcp.pop %v1861
    %v1863 = vmul.f32 %v1858, %v1862
    %1864 = vrot.lane.b32.xlu0 %v1274, 40
    %v1865 = vpop.permute.xlu0 %1864
    %v1868 = vsel %vm168, %v1863, 0
    %1870 = vmatprep.subr.mxu0 0.0
    %1871 = vmatpush1.msra.mxu0 %v1865
    %1872 = vmatprep.subr.mxu0 0.0
    %1873 = vmatpush1.msra.mxu0 0.0
    %1874 = vmatprep.subr.mxu0 0.0
    %1875 = vmatpush1.msra.mxu0 0.0
    %1876 = vmatprep.subr.mxu0 0.0
    %1877 = vmatpush1.msra.mxu0 0.0
    %1878 = vmatprep.subr.mxu0 0.0
    %1879 = vmatpush1.msra.mxu0 0.0
    %1880 = vmatprep.subr.mxu0 0.0
    %1881 = vmatpush1.msra.mxu0 0.0
    %1882 = vmatprep.subr.mxu0 0.0
    %1883 = vmatpush1.msra.mxu0 0.0
    %1884 = vmatprep.subr.mxu0 0.0
    %1885 = vmatpush1.msra.mxu0 0.0
    %1886 = vmatprep.subr.mxu0 0.0
    %1887 = vmatpush1.msra.mxu0 0.0
    %1888 = vmatprep.subr.mxu0 0.0
    %1889 = vmatpush1.msra.mxu0 0.0
    %1890 = vmatprep.subr.mxu0 0.0
    %1891 = vmatpush1.msra.mxu0 0.0
    %1892 = vmatprep.subr.mxu0 0.0
    %1893 = vmatpush1.msra.mxu0 0.0
    %1894 = vmatprep.subr.mxu0 0.0
    %1895 = vmatpush1.msra.mxu0 0.0
    %1896 = vmatprep.subr.mxu0 0.0
    %1897 = vmatpush1.msra.mxu0 0.0
    %1898 = vmatprep.subr.mxu0 0.0
    %1899 = vmatpush1.msra.mxu0 0.0
    %1900 = vmatprep.subr.mxu0 0.0
    %1901 = vmatpush1.msra.mxu0 0.0
    %1902 = vmatprep.subr.mxu0 0.0
    %1903 = vmatpush1.msra.mxu0 0.0
    %1904 = vmatprep.subr.mxu0 0.0
    %1905 = vmatpush1.msra.mxu0 0.0
    %1906 = vmatprep.subr.mxu0 0.0
    %1907 = vmatpush1.msra.mxu0 0.0
    %1908 = vmatprep.subr.mxu0 0.0
    %1909 = vmatpush1.msra.mxu0 0.0
    %1910 = vmatprep.subr.mxu0 0.0
    %1911 = vmatpush1.msra.mxu0 0.0
    %1912 = vmatprep.subr.mxu0 0.0
    %1913 = vmatpush1.msra.mxu0 0.0
    %1914 = vmatprep.subr.mxu0 0.0
    %1915 = vmatpush1.msra.mxu0 0.0
    %1916 = vmatprep.subr.mxu0 0.0
    %1917 = vmatpush1.msra.mxu0 0.0
    %1918 = vmatprep.subr.mxu0 0.0
    %1919 = vmatpush1.msra.mxu0 0.0
    %1920 = vmatprep.subr.mxu0 0.0
    %1921 = vmatpush1.msra.mxu0 0.0
    %1922 = vmatprep.subr.mxu0 0.0
    %1923 = vmatpush1.msra.mxu0 0.0
    %1924 = vmatprep.subr.mxu0 0.0
    %1925 = vmatpush1.msra.mxu0 0.0
    %1926 = vmatprep.subr.mxu0 0.0
    %1927 = vmatpush1.msra.mxu0 0.0
    %1928 = vmatprep.subr.mxu0 0.0
    %1929 = vmatpush1.msra.mxu0 0.0
    %1930 = vmatprep.subr.mxu0 0.0
    %1931 = vmatpush1.msra.mxu0 0.0
    %1932 = vmatprep.subr.mxu0 0.0
    %1933 = vmatpush1.msra.mxu0 0.0
    %1934 = vmatprep.mubr.f32.mxu0 0.0
    %1935 = vmatmul.mubr.f32.gmra.mrb[0].mxu0 %v1868
    %v1936 = vpop.f32.mrb[0].mxu0
    %v1937 = vadd.f32 0.0, %v1936
    %v1938 = vpop.f32.mrb[0].mxu0
    %1939 = vdwg.mxu0
    %1941 = vrot.lane.b32.xlu0 %v1605, 8
    %v1942 = vpop.permute.xlu0 %1941
    %1945 = vrot.lane.b32.xlu0 %v1771, 16
    %v1946 = vpop.permute.xlu0 %1945
    %1949 = vrot.lane.b32.xlu0 %v1937, 24
    %v1950 = vpop.permute.xlu0 %1949
    %v1952 = vsel %vm168, %v1439, %v1942
    %v1953 = vsel %vm842, %v1952, %v1946
    %v1954 = vsel %vm844, %v1953, %v1950
    %v1955 = vlaneseq
    %v1956 = vshrl.u32 %v1955, 7
    %v1957 = vsub.s32 0, %v1956
    %v1958 = vrot.slane %v1199, %v1957
    %1963 = vrot.lane.b32.xlu0 %v1194, 32
    %v1964 = vpop.permute.xlu0 %1963
    %1965 = vrot.lane.b32.xlu0 %v1195, 32
    %v1966 = vpop.permute.xlu0 %1965
    %1967 = vrot.lane.b32.xlu0 %v1196, 32
    %v1968 = vpop.permute.xlu0 %1967
    %1969 = vrot.lane.b32.xlu0 %v1197, 32
    %v1970 = vpop.permute.xlu0 %1969
    %v1976 = vsel %vm52, %v1954, 0
    %1978 = vmatprep.subr.mxu0 0.0
    %1979 = vmatpush1.msra.mxu0 %v1964
    %1980 = vmatprep.subr.mxu0 0.0
    %1981 = vmatpush1.msra.mxu0 %v1966
    %1982 = vmatprep.subr.mxu0 0.0
    %1983 = vmatpush1.msra.mxu0 %v1968
    %1984 = vmatprep.subr.mxu0 0.0
    %1985 = vmatpush1.msra.mxu0 %v1970
    %1986 = vmatprep.subr.mxu0 0.0
    %1987 = vmatpush1.msra.mxu0 0.0
    %1988 = vmatprep.subr.mxu0 0.0
    %1989 = vmatpush1.msra.mxu0 0.0
    %1990 = vmatprep.subr.mxu0 0.0
    %1991 = vmatpush1.msra.mxu0 0.0
    %1992 = vmatprep.subr.mxu0 0.0
    %1993 = vmatpush1.msra.mxu0 0.0
    %1994 = vmatprep.subr.mxu0 0.0
    %1995 = vmatpush1.msra.mxu0 0.0
    %1996 = vmatprep.subr.mxu0 0.0
    %1997 = vmatpush1.msra.mxu0 0.0
    %1998 = vmatprep.subr.mxu0 0.0
    %1999 = vmatpush1.msra.mxu0 0.0
    %2000 = vmatprep.subr.mxu0 0.0
    %2001 = vmatpush1.msra.mxu0 0.0
    %2002 = vmatprep.subr.mxu0 0.0
    %2003 = vmatpush1.msra.mxu0 0.0
    %2004 = vmatprep.subr.mxu0 0.0
    %2005 = vmatpush1.msra.mxu0 0.0
    %2006 = vmatprep.subr.mxu0 0.0
    %2007 = vmatpush1.msra.mxu0 0.0
    %2008 = vmatprep.subr.mxu0 0.0
    %2009 = vmatpush1.msra.mxu0 0.0
    %2010 = vmatprep.subr.mxu0 0.0
    %2011 = vmatpush1.msra.mxu0 0.0
    %2012 = vmatprep.subr.mxu0 0.0
    %2013 = vmatpush1.msra.mxu0 0.0
    %2014 = vmatprep.subr.mxu0 0.0
    %2015 = vmatpush1.msra.mxu0 0.0
    %2016 = vmatprep.subr.mxu0 0.0
    %2017 = vmatpush1.msra.mxu0 0.0
    %2018 = vmatprep.subr.mxu0 0.0
    %2019 = vmatpush1.msra.mxu0 0.0
    %2020 = vmatprep.subr.mxu0 0.0
    %2021 = vmatpush1.msra.mxu0 0.0
    %2022 = vmatprep.subr.mxu0 0.0
    %2023 = vmatpush1.msra.mxu0 0.0
    %2024 = vmatprep.subr.mxu0 0.0
    %2025 = vmatpush1.msra.mxu0 0.0
    %2026 = vmatprep.subr.mxu0 0.0
    %2027 = vmatpush1.msra.mxu0 0.0
    %2028 = vmatprep.subr.mxu0 0.0
    %2029 = vmatpush1.msra.mxu0 0.0
    %2030 = vmatprep.subr.mxu0 0.0
    %2031 = vmatpush1.msra.mxu0 0.0
    %2032 = vmatprep.subr.mxu0 0.0
    %2033 = vmatpush1.msra.mxu0 0.0
    %2034 = vmatprep.subr.mxu0 0.0
    %2035 = vmatpush1.msra.mxu0 0.0
    %2036 = vmatprep.subr.mxu0 0.0
    %2037 = vmatpush1.msra.mxu0 0.0
    %2038 = vmatprep.subr.mxu0 0.0
    %2039 = vmatpush1.msra.mxu0 0.0
    %2040 = vmatprep.subr.mxu0 0.0
    %2041 = vmatpush1.msra.mxu0 0.0
    %2042 = vmatprep.mubr.f32.mxu0 0.0
    %2043 = vmatmul.mubr.f32.gmra.mrb[0].mxu0 %v1976
    %v2044 = vpop.f32.mrb[0].mxu0
    %v2045 = vadd.f32 %v1958, %v2044
    %v2046 = vpop.f32.mrb[0].mxu0
    %2047 = vdwg.mxu0
    %v2048 = vadd.f32 %v1193, %v2045
    %v2049 = vld [vmem:[%s1 + $0xc] sm:$0x1]
    %v2050 = vld [vmem:[%s1 + $0xd] sm:$0x1]
    %v2051 = vsel %vm52, %v2048, 0.0
    %2052 = vadd.xlane.f32.xlu0 %v2051
    %v2053 = vpop.xlane.xlu0 %2052
    %v2054 = vmul.f32 %v2053, %v945
    %v2055 = vsub.f32 %v2048, %v2054
    %v2056 = vmul.f32 %v2055, %v2055
    %v2057 = vsel %vm52, %v2056, 0.0
    %2058 = vadd.xlane.f32.xlu0 %v2057
    %v2059 = vpop.xlane.xlu0 %2058
    %v2060 = vmul.f32 %v2059, %v945
    %v2061 = vadd.f32 %v2060, 1e-05
    %v2062 = vrsqrt.pop %v2061
    %v2063 = vmul.f32 %v2055, %v2062
    %v2064 = vlaneseq
    %v2065 = vshrl.u32 %v2064, 7
    %v2066 = vsub.s32 0, %v2065
    %v2067 = vrot.slane %v2049, %v2066
    %v2068 = vmul.f32 %v2063, %v2067
    %v2069 = vlaneseq
    %v2070 = vshrl.u32 %v2069, 7
    %v2071 = vsub.s32 0, %v2070
    %v2072 = vrot.slane %v2050, %v2071
    %v2073 = vadd.f32 %v2068, %v2072
    %v2074 = vld [vmem:[#allocation2 + $0x80] sm:$0xff]
    %v2075 = vld [vmem:[#allocation2 + $0x88] sm:$0xff]
    %v2076 = vld [vmem:[#allocation2 + $0x90] sm:$0xff]
    %v2077 = vld [vmem:[#allocation2 + $0x98] sm:$0xff]
    %v2078 = vld [vmem:[%s1 + $0xe] sm:$0x1]
    %v2079 = vlaneseq
    %v2080 = vshrl.u32 %v2079, 7
    %v2081 = vsub.s32 0, %v2080
    %v2082 = vrot.slane %v2078, %v2081
    %v2084 = vsel %vm52, %v2073, 0
    %2086 = vmatprep.subr.mxu0 0.0
    %2087 = vmatpush1.msra.mxu0 %v2074
    %2088 = vmatprep.subr.mxu0 0.0
    %2089 = vmatpush1.msra.mxu0 %v2075
    %2090 = vmatprep.subr.mxu0 0.0
    %2091 = vmatpush1.msra.mxu0 %v2076
    %2092 = vmatprep.subr.mxu0 0.0
    %2093 = vmatpush1.msra.mxu0 %v2077
    %2094 = vmatprep.subr.mxu0 0.0
    %2095 = vmatpush1.msra.mxu0 0.0
    %2096 = vmatprep.subr.mxu0 0.0
    %2097 = vmatpush1.msra.mxu0 0.0
    %2098 = vmatprep.subr.mxu0 0.0
    %2099 = vmatpush1.msra.mxu0 0.0
    %2100 = vmatprep.subr.mxu0 0.0
    %2101 = vmatpush1.msra.mxu0 0.0
    %2102 = vmatprep.subr.mxu0 0.0
    %2103 = vmatpush1.msra.mxu0 0.0
    %2104 = vmatprep.subr.mxu0 0.0
    %2105 = vmatpush1.msra.mxu0 0.0
    %2106 = vmatprep.subr.mxu0 0.0
    %2107 = vmatpush1.msra.mxu0 0.0
    %2108 = vmatprep.subr.mxu0 0.0
    %2109 = vmatpush1.msra.mxu0 0.0
    %2110 = vmatprep.subr.mxu0 0.0
    %2111 = vmatpush1.msra.mxu0 0.0
    %2112 = vmatprep.subr.mxu0 0.0
    %2113 = vmatpush1.msra.mxu0 0.0
    %2114 = vmatprep.subr.mxu0 0.0
    %2115 = vmatpush1.msra.mxu0 0.0
    %2116 = vmatprep.subr.mxu0 0.0
    %2117 = vmatpush1.msra.mxu0 0.0
    %2118 = vmatprep.subr.mxu0 0.0
    %2119 = vmatpush1.msra.mxu0 0.0
    %2120 = vmatprep.subr.mxu0 0.0
    %2121 = vmatpush1.msra.mxu0 0.0
    %2122 = vmatprep.subr.mxu0 0.0
    %2123 = vmatpush1.msra.mxu0 0.0
    %2124 = vmatprep.subr.mxu0 0.0
    %2125 = vmatpush1.msra.mxu0 0.0
    %2126 = vmatprep.subr.mxu0 0.0
    %2127 = vmatpush1.msra.mxu0 0.0
    %2128 = vmatprep.subr.mxu0 0.0
    %2129 = vmatpush1.msra.mxu0 0.0
    %2130 = vmatprep.subr.mxu0 0.0
    %2131 = vmatpush1.msra.mxu0 0.0
    %2132 = vmatprep.subr.mxu0 0.0
    %2133 = vmatpush1.msra.mxu0 0.0
    %2134 = vmatprep.subr.mxu0 0.0
    %2135 = vmatpush1.msra.mxu0 0.0
    %2136 = vmatprep.subr.mxu0 0.0
    %2137 = vmatpush1.msra.mxu0 0.0
    %2138 = vmatprep.subr.mxu0 0.0
    %2139 = vmatpush1.msra.mxu0 0.0
    %2140 = vmatprep.subr.mxu0 0.0
    %2141 = vmatpush1.msra.mxu0 0.0
    %2142 = vmatprep.subr.mxu0 0.0
    %2143 = vmatpush1.msra.mxu0 0.0
    %2144 = vmatprep.subr.mxu0 0.0
    %2145 = vmatpush1.msra.mxu0 0.0
    %2146 = vmatprep.subr.mxu0 0.0
    %2147 = vmatpush1.msra.mxu0 0.0
    %2148 = vmatprep.subr.mxu0 0.0
    %2149 = vmatpush1.msra.mxu0 0.0
    %2150 = vmatprep.mubr.f32.mxu0 0.0
    %2151 = vmatmul.mubr.f32.gmra.mrb[0].mxu0 %v2084
    %v2152 = vpop.f32.mrb[0].mxu0
    %v2153 = vadd.f32 %v2082, %v2152
    %v2154 = vpop.f32.mrb[0].mxu0
    %2155 = vdwg.mxu0
    %v2156 = vmax.f32 %v2153, 0.0
    %v2157 = vld [vmem:[#allocation2 + $0x80] sm:$0xff]
    %v2158 = vld [vmem:[#allocation2 + $0x88] sm:$0xff]
    %v2159 = vld [vmem:[#allocation2 + $0x90] sm:$0xff]
    %v2160 = vld [vmem:[#allocation2 + $0x98] sm:$0xff]
    %v2161 = vld [vmem:[#allocation2 + $0xa0] sm:$0xff]
    %v2162 = vld [vmem:[#allocation2 + $0xa8] sm:$0xff]
    %v2163 = vld [vmem:[#allocation2 + $0xb0] sm:$0xff]
    %v2164 = vld [vmem:[#allocation2 + $0xb8] sm:$0xff]
    %v2165 = vld [vmem:[%s1 + $0xf] sm:$0x1]
    %v2166 = vlaneseq
    %v2167 = vshrl.u32 %v2166, 7
    %v2168 = vsub.s32 0, %v2167
    %v2169 = vrot.slane %v2165, %v2168
    %2178 = vrot.lane.b32.xlu0 %v2157, 64
    %v2179 = vpop.permute.xlu0 %2178
    %2180 = vrot.lane.b32.xlu0 %v2158, 64
    %v2181 = vpop.permute.xlu0 %2180
    %2182 = vrot.lane.b32.xlu0 %v2159, 64
    %v2183 = vpop.permute.xlu0 %2182
    %2184 = vrot.lane.b32.xlu0 %v2160, 64
    %v2185 = vpop.permute.xlu0 %2184
    %2186 = vrot.lane.b32.xlu0 %v2161, 64
    %v2187 = vpop.permute.xlu0 %2186
    %2188 = vrot.lane.b32.xlu0 %v2162, 64
    %v2189 = vpop.permute.xlu0 %2188
    %2190 = vrot.lane.b32.xlu0 %v2163, 64
    %v2191 = vpop.permute.xlu0 %2190
    %2192 = vrot.lane.b32.xlu0 %v2164, 64
    %v2193 = vpop.permute.xlu0 %2192
    %v2203 = vsel %vm1094, %v2156, 0
    %2205 = vmatprep.subr.mxu0 0.0
    %2206 = vmatpush1.msra.mxu0 %v2179
    %2207 = vmatprep.subr.mxu0 0.0
    %2208 = vmatpush1.msra.mxu0 %v2181
    %2209 = vmatprep.subr.mxu0 0.0
    %2210 = vmatpush1.msra.mxu0 %v2183
    %2211 = vmatprep.subr.mxu0 0.0
    %2212 = vmatpush1.msra.mxu0 %v2185
    %2213 = vmatprep.subr.mxu0 0.0
    %2214 = vmatpush1.msra.mxu0 %v2187
    %2215 = vmatprep.subr.mxu0 0.0
    %2216 = vmatpush1.msra.mxu0 %v2189
    %2217 = vmatprep.subr.mxu0 0.0
    %2218 = vmatpush1.msra.mxu0 %v2191
    %2219 = vmatprep.subr.mxu0 0.0
    %2220 = vmatpush1.msra.mxu0 %v2193
    %2221 = vmatprep.subr.mxu0 0.0
    %2222 = vmatpush1.msra.mxu0 0.0
    %2223 = vmatprep.subr.mxu0 0.0
    %2224 = vmatpush1.msra.mxu0 0.0
    %2225 = vmatprep.subr.mxu0 0.0
    %2226 = vmatpush1.msra.mxu0 0.0
    %2227 = vmatprep.subr.mxu0 0.0
    %2228 = vmatpush1.msra.mxu0 0.0
    %2229 = vmatprep.subr.mxu0 0.0
    %2230 = vmatpush1.msra.mxu0 0.0
    %2231 = vmatprep.subr.mxu0 0.0
    %2232 = vmatpush1.msra.mxu0 0.0
    %2233 = vmatprep.subr.mxu0 0.0
    %2234 = vmatpush1.msra.mxu0 0.0
    %2235 = vmatprep.subr.mxu0 0.0
    %2236 = vmatpush1.msra.mxu0 0.0
    %2237 = vmatprep.subr.mxu0 0.0
    %2238 = vmatpush1.msra.mxu0 0.0
    %2239 = vmatprep.subr.mxu0 0.0
    %2240 = vmatpush1.msra.mxu0 0.0
    %2241 = vmatprep.subr.mxu0 0.0
    %2242 = vmatpush1.msra.mxu0 0.0
    %2243 = vmatprep.subr.mxu0 0.0
    %2244 = vmatpush1.msra.mxu0 0.0
    %2245 = vmatprep.subr.mxu0 0.0
    %2246 = vmatpush1.msra.mxu0 0.0
    %2247 = vmatprep.subr.mxu0 0.0
    %2248 = vmatpush1.msra.mxu0 0.0
    %2249 = vmatprep.subr.mxu0 0.0
    %2250 = vmatpush1.msra.mxu0 0.0
    %2251 = vmatprep.subr.mxu0 0.0
    %2252 = vmatpush1.msra.mxu0 0.0
    %2253 = vmatprep.subr.mxu0 0.0
    %2254 = vmatpush1.msra.mxu0 0.0
    %2255 = vmatprep.subr.mxu0 0.0
    %2256 = vmatpush1.msra.mxu0 0.0
    %2257 = vmatprep.subr.mxu0 0.0
    %2258 = vmatpush1.msra.mxu0 0.0
    %2259 = vmatprep.subr.mxu0 0.0
    %2260 = vmatpush1.msra.mxu0 0.0
    %2261 = vmatprep.subr.mxu0 0.0
    %2262 = vmatpush1.msra.mxu0 0.0
    %2263 = vmatprep.subr.mxu0 0.0
    %2264 = vmatpush1.msra.mxu0 0.0
    %2265 = vmatprep.subr.mxu0 0.0
    %2266 = vmatpush1.msra.mxu0 0.0
    %2267 = vmatprep.subr.mxu0 0.0
    %2268 = vmatpush1.msra.mxu0 0.0
    %2269 = vmatprep.mubr.f32.mxu0 0.0
    %2270 = vmatmul.mubr.f32.gmra.mrb[0].mxu0 %v2203
    %v2271 = vpop.f32.mrb[0].mxu0
    %v2272 = vadd.f32 %v2169, %v2271
    %v2273 = vpop.f32.mrb[0].mxu0
    %2274 = vdwg.mxu0
    %v2275 = vadd.f32 %v2073, %v2272
    %v2276 = vld [vmem:[%s1 + $0x10] sm:$0x1]
    %v2277 = vld [vmem:[%s1 + $0x11] sm:$0x1]
    %v2278 = vsel %vm52, %v2275, 0.0
    %2279 = vadd.xlane.f32.xlu0 %v2278
    %v2280 = vpop.xlane.xlu0 %2279
    %v2281 = vmul.f32 %v2280, %v945
    %v2282 = vsub.f32 %v2275, %v2281
    %v2283 = vmul.f32 %v2282, %v2282
    %v2284 = vsel %vm52, %v2283, 0.0
    %2285 = vadd.xlane.f32.xlu0 %v2284
    %v2286 = vpop.xlane.xlu0 %2285
    %v2287 = vmul.f32 %v2286, %v945
    %v2288 = vadd.f32 %v2287, 1e-05
    %v2289 = vrsqrt.pop %v2288
    %v2290 = vmul.f32 %v2282, %v2289
    %v2291 = vlaneseq
    %v2292 = vshrl.u32 %v2291, 7
    %v2293 = vsub.s32 0, %v2292
    %v2294 = vrot.slane %v2276, %v2293
    %v2295 = vmul.f32 %v2290, %v2294
    %v2296 = vlaneseq
    %v2297 = vshrl.u32 %v2296, 7
    %v2298 = vsub.s32 0, %v2297
    %v2299 = vrot.slane %v2277, %v2298
    %v2300 = vadd.f32 %v2295, %v2299
    %v2301 = vld [vmem:[#allocation2 + $0xc0] sm:$0xff]
    %v2302 = vld [vmem:[#allocation2 + $0xc8] sm:$0xff]
    %v2303 = vld [vmem:[#allocation2 + $0xd0] sm:$0xff]
    %v2304 = vld [vmem:[#allocation2 + $0xd8] sm:$0xff]
    %v2305 = vld [vmem:[%s1 + $0x12] sm:$0x1]
    %v2306 = vld [vmem:[%s1 + $0x13] sm:$0x1]
    %v2307 = vlaneseq
    %v2308 = vshrl.u32 %v2307, 7
    %v2309 = vsub.s32 0, %v2308
    %v2310 = vrot.slane %v2305, %v2309
    %v2312 = vsel %vm52, %v2300, 0
    %2314 = vmatprep.subr.mxu0 0.0
    %2315 = vmatpush1.msra.mxu0 %v2301
    %2316 = vmatprep.subr.mxu0 0.0
    %2317 = vmatpush1.msra.mxu0 %v2302
    %2318 = vmatprep.subr.mxu0 0.0
    %2319 = vmatpush1.msra.mxu0 %v2303
    %2320 = vmatprep.subr.mxu0 0.0
    %2321 = vmatpush1.msra.mxu0 %v2304
    %2322 = vmatprep.subr.mxu0 0.0
    %2323 = vmatpush1.msra.mxu0 0.0
    %2324 = vmatprep.subr.mxu0 0.0
    %2325 = vmatpush1.msra.mxu0 0.0
    %2326 = vmatprep.subr.mxu0 0.0
    %2327 = vmatpush1.msra.mxu0 0.0
    %2328 = vmatprep.subr.mxu0 0.0
    %2329 = vmatpush1.msra.mxu0 0.0
    %2330 = vmatprep.subr.mxu0 0.0
    %2331 = vmatpush1.msra.mxu0 0.0
    %2332 = vmatprep.subr.mxu0 0.0
    %2333 = vmatpush1.msra.mxu0 0.0
    %2334 = vmatprep.subr.mxu0 0.0
    %2335 = vmatpush1.msra.mxu0 0.0
    %2336 = vmatprep.subr.mxu0 0.0
    %2337 = vmatpush1.msra.mxu0 0.0
    %2338 = vmatprep.subr.mxu0 0.0
    %2339 = vmatpush1.msra.mxu0 0.0
    %2340 = vmatprep.subr.mxu0 0.0
    %2341 = vmatpush1.msra.mxu0 0.0
    %2342 = vmatprep.subr.mxu0 0.0
    %2343 = vmatpush1.msra.mxu0 0.0
    %2344 = vmatprep.subr.mxu0 0.0
    %2345 = vmatpush1.msra.mxu0 0.0
    %2346 = vmatprep.subr.mxu0 0.0
    %2347 = vmatpush1.msra.mxu0 0.0
    %2348 = vmatprep.subr.mxu0 0.0
    %2349 = vmatpush1.msra.mxu0 0.0
    %2350 = vmatprep.subr.mxu0 0.0
    %2351 = vmatpush1.msra.mxu0 0.0
    %2352 = vmatprep.subr.mxu0 0.0
    %2353 = vmatpush1.msra.mxu0 0.0
    %2354 = vmatprep.subr.mxu0 0.0
    %2355 = vmatpush1.msra.mxu0 0.0
    %2356 = vmatprep.subr.mxu0 0.0
    %2357 = vmatpush1.msra.mxu0 0.0
    %2358 = vmatprep.subr.mxu0 0.0
    %2359 = vmatpush1.msra.mxu0 0.0
    %2360 = vmatprep.subr.mxu0 0.0
    %2361 = vmatpush1.msra.mxu0 0.0
    %2362 = vmatprep.subr.mxu0 0.0
    %2363 = vmatpush1.msra.mxu0 0.0
    %2364 = vmatprep.subr.mxu0 0.0
    %2365 = vmatpush1.msra.mxu0 0.0
    %2366 = vmatprep.subr.mxu0 0.0
    %2367 = vmatpush1.msra.mxu0 0.0
    %2368 = vmatprep.subr.mxu0 0.0
    %2369 = vmatpush1.msra.mxu0 0.0
    %2370 = vmatprep.subr.mxu0 0.0
    %2371 = vmatpush1.msra.mxu0 0.0
    %2372 = vmatprep.subr.mxu0 0.0
    %2373 = vmatpush1.msra.mxu0 0.0
    %2374 = vmatprep.subr.mxu0 0.0
    %2375 = vmatpush1.msra.mxu0 0.0
    %2376 = vmatprep.subr.mxu0 0.0
    %2377 = vmatpush1.msra.mxu0 0.0
    %2378 = vmatprep.mubr.f32.mxu0 0.0
    %2379 = vmatmul.mubr.f32.gmra.mrb[0].mxu0 %v2312
    %v2380 = vpop.f32.mrb[0].mxu0
    %v2381 = vadd.f32 %v2310, %v2380
    %v2382 = vpop.f32.mrb[0].mxu0
    %2383 = vdwg.mxu0
    %2385 = vrot.lane.b32.xlu0 %v2381, 96
    %v2386 = vpop.permute.xlu0 %2385
    %v2387 = vsel %vm168, %v2381, 0
    %v2389 = vsel %vm168, %v2386, 0
    %2391 = vmatprep.subr.mxu0 0.0
    %2392 = vmatpush1.xpose.msra.mxu0 %v2389
    %2393 = vmatprep.subr.mxu0 0.0
    %2394 = vmatpush1.xpose.msra.mxu0 0.0
    %2395 = vmatprep.subr.mxu0 0.0
    %2396 = vmatpush1.xpose.msra.mxu0 0.0
    %2397 = vmatprep.subr.mxu0 0.0
    %2398 = vmatpush1.xpose.msra.mxu0 0.0
    %2399 = vmatprep.subr.mxu0 0.0
    %2400 = vmatpush1.xpose.msra.mxu0 0.0
    %2401 = vmatprep.subr.mxu0 0.0
    %2402 = vmatpush1.xpose.msra.mxu0 0.0
    %2403 = vmatprep.subr.mxu0 0.0
    %2404 = vmatpush1.xpose.msra.mxu0 0.0
    %2405 = vmatprep.subr.mxu0 0.0
    %2406 = vmatpush1.xpose.msra.mxu0 0.0
    %2407 = vmatprep.subr.mxu0 0.0
    %2408 = vmatpush1.xpose.msra.mxu0 0.0
    %2409 = vmatprep.subr.mxu0 0.0
    %2410 = vmatpush1.xpose.msra.mxu0 0.0
    %2411 = vmatprep.subr.mxu0 0.0
    %2412 = vmatpush1.xpose.msra.mxu0 0.0
    %2413 = vmatprep.subr.mxu0 0.0
    %2414 = vmatpush1.xpose.msra.mxu0 0.0
    %2415 = vmatprep.subr.mxu0 0.0
    %2416 = vmatpush1.xpose.msra.mxu0 0.0
    %2417 = vmatprep.subr.mxu0 0.0
    %2418 = vmatpush1.xpose.msra.mxu0 0.0
    %2419 = vmatprep.subr.mxu0 0.0
    %2420 = vmatpush1.xpose.msra.mxu0 0.0
    %2421 = vmatprep.subr.mxu0 0.0
    %2422 = vmatpush1.xpose.msra.mxu0 0.0
    %2423 = vmatprep.subr.mxu0 0.0
    %2424 = vmatpush1.xpose.msra.mxu0 0.0
    %2425 = vmatprep.subr.mxu0 0.0
    %2426 = vmatpush1.xpose.msra.mxu0 0.0
    %2427 = vmatprep.subr.mxu0 0.0
    %2428 = vmatpush1.xpose.msra.mxu0 0.0
    %2429 = vmatprep.subr.mxu0 0.0
    %2430 = vmatpush1.xpose.msra.mxu0 0.0
    %2431 = vmatprep.subr.mxu0 0.0
    %2432 = vmatpush1.xpose.msra.mxu0 0.0
    %2433 = vmatprep.subr.mxu0 0.0
    %2434 = vmatpush1.xpose.msra.mxu0 0.0
    %2435 = vmatprep.subr.mxu0 0.0
    %2436 = vmatpush1.xpose.msra.mxu0 0.0
    %2437 = vmatprep.subr.mxu0 0.0
    %2438 = vmatpush1.xpose.msra.mxu0 0.0
    %2439 = vmatprep.subr.mxu0 0.0
    %2440 = vmatpush1.xpose.msra.mxu0 0.0
    %2441 = vmatprep.subr.mxu0 0.0
    %2442 = vmatpush1.xpose.msra.mxu0 0.0
    %2443 = vmatprep.subr.mxu0 0.0
    %2444 = vmatpush1.xpose.msra.mxu0 0.0
    %2445 = vmatprep.subr.mxu0 0.0
    %2446 = vmatpush1.xpose.msra.mxu0 0.0
    %2447 = vmatprep.subr.mxu0 0.0
    %2448 = vmatpush1.xpose.msra.mxu0 0.0
    %2449 = vmatprep.subr.mxu0 0.0
    %2450 = vmatpush1.xpose.msra.mxu0 0.0
    %2451 = vmatprep.subr.mxu0 0.0
    %2452 = vmatpush1.xpose.msra.mxu0 0.0
    %2453 = vmatprep.subr.mxu0 0.0
    %2454 = vmatpush1.xpose.msra.mxu0 0.0
    %2455 = vmatprep.mubr.f32.mxu0 0.0
    %2456 = vmatmul.mubr.f32.gmra.mrb[0].mxu0 %v2387
    %v2457 = vpop.f32.mrb[0].mxu0
    %v2458 = vadd.f32 0.0, %v2457
    %v2459 = vpop.f32.mrb[0].mxu0
    %2460 = vdwg.mxu0
    %v2461 = vmul.f32 %v2458, 0.35355338
    %v2462 = vsel %vm168, %v2461, -inf
    %2463 = vmax.xlane.f32.xlu0 %v2462
    %v2464 = vpop.xlane.xlu0 %2463
    %v2465 = vsub.f32 %v2461, %v2464
    %v2466 = vmul.f32 %v2465, 1.442695
    %v2467 = vpow.pop %v2466
    %v2468 = vsel %vm168, %v2467, 0.0
    %2469 = vadd.xlane.f32.xlu0 %v2468
    %v2470 = vpop.xlane.xlu0 %2469
    %v2471 = vrcp.pop %v2470
    %v2472 = vmul.f32 %v2467, %v2471
    %2473 = vrot.lane.b32.xlu0 %v2381, 64
    %v2474 = vpop.permute.xlu0 %2473
    %v2477 = vsel %vm168, %v2472, 0
    %2479 = vmatprep.subr.mxu0 0.0
    %2480 = vmatpush1.msra.mxu0 %v2474
    %2481 = vmatprep.subr.mxu0 0.0
    %2482 = vmatpush1.msra.mxu0 0.0
    %2483 = vmatprep.subr.mxu0 0.0
    %2484 = vmatpush1.msra.mxu0 0.0
    %2485 = vmatprep.subr.mxu0 0.0
    %2486 = vmatpush1.msra.mxu0 0.0
    %2487 = vmatprep.subr.mxu0 0.0
    %2488 = vmatpush1.msra.mxu0 0.0
    %2489 = vmatprep.subr.mxu0 0.0
    %2490 = vmatpush1.msra.mxu0 0.0
    %2491 = vmatprep.subr.mxu0 0.0
    %2492 = vmatpush1.msra.mxu0 0.0
    %2493 = vmatprep.subr.mxu0 0.0
    %2494 = vmatpush1.msra.mxu0 0.0
    %2495 = vmatprep.subr.mxu0 0.0
    %2496 = vmatpush1.msra.mxu0 0.0
    %2497 = vmatprep.subr.mxu0 0.0
    %2498 = vmatpush1.msra.mxu0 0.0
    %2499 = vmatprep.subr.mxu0 0.0
    %2500 = vmatpush1.msra.mxu0 0.0
    %2501 = vmatprep.subr.mxu0 0.0
    %2502 = vmatpush1.msra.mxu0 0.0
    %2503 = vmatprep.subr.mxu0 0.0
    %2504 = vmatpush1.msra.mxu0 0.0
    %2505 = vmatprep.subr.mxu0 0.0
    %2506 = vmatpush1.msra.mxu0 0.0
    %2507 = vmatprep.subr.mxu0 0.0
    %2508 = vmatpush1.msra.mxu0 0.0
    %2509 = vmatprep.subr.mxu0 0.0
    %2510 = vmatpush1.msra.mxu0 0.0
    %2511 = vmatprep.subr.mxu0 0.0
    %2512 = vmatpush1.msra.mxu0 0.0
    %2513 = vmatprep.subr.mxu0 0.0
    %2514 = vmatpush1.msra.mxu0 0.0
    %2515 = vmatprep.subr.mxu0 0.0
    %2516 = vmatpush1.msra.mxu0 0.0
    %2517 = vmatprep.subr.mxu0 0.0
    %2518 = vmatpush1.msra.mxu0 0.0
    %2519 = vmatprep.subr.mxu0 0.0
    %2520 = vmatpush1.msra.mxu0 0.0
    %2521 = vmatprep.subr.mxu0 0.0
    %2522 = vmatpush1.msra.mxu0 0.0
    %2523 = vmatprep.subr.mxu0 0.0
    %2524 = vmatpush1.msra.mxu0 0.0
    %2525 = vmatprep.subr.mxu0 0.0
    %2526 = vmatpush1.msra.mxu0 0.0
    %2527 = vmatprep.subr.mxu0 0.0
    %2528 = vmatpush1.msra.mxu0 0.0
    %2529 = vmatprep.subr.mxu0 0.0
    %2530 = vmatpush1.msra.mxu0 0.0
    %2531 = vmatprep.subr.mxu0 0.0
    %2532 = vmatpush1.msra.mxu0 0.0
    %2533 = vmatprep.subr.mxu0 0.0
    %2534 = vmatpush1.msra.mxu0 0.0
    %2535 = vmatprep.subr.mxu0 0.0
    %2536 = vmatpush1.msra.mxu0 0.0
    %2537 = vmatprep.subr.mxu0 0.0
    %2538 = vmatpush1.msra.mxu0 0.0
    %2539 = vmatprep.subr.mxu0 0.0
    %2540 = vmatpush1.msra.mxu0 0.0
    %2541 = vmatprep.subr.mxu0 0.0
    %2542 = vmatpush1.msra.mxu0 0.0
    %2543 = vmatprep.mubr.f32.mxu0 0.0
    %2544 = vmatmul.mubr.f32.gmra.mrb[0].mxu0 %v2477
    %v2545 = vpop.f32.mrb[0].mxu0
    %v2546 = vadd.f32 0.0, %v2545
    %v2547 = vpop.f32.mrb[0].mxu0
    %2548 = vdwg.mxu0
    %2549 = vrot.lane.b32.xlu0 %v2381, 120
    %v2550 = vpop.permute.xlu0 %2549
    %2551 = vrot.lane.b32.xlu0 %v2381, 88
    %v2552 = vpop.permute.xlu0 %2551
    %v2553 = vsel %vm168, %v2550, 0
    %v2555 = vsel %vm168, %v2552, 0
    %2557 = vmatprep.subr.mxu0 0.0
    %2558 = vmatpush1.xpose.msra.mxu0 %v2555
    %2559 = vmatprep.subr.mxu0 0.0
    %2560 = vmatpush1.xpose.msra.mxu0 0.0
    %2561 = vmatprep.subr.mxu0 0.0
    %2562 = vmatpush1.xpose.msra.mxu0 0.0
    %2563 = vmatprep.subr.mxu0 0.0
    %2564 = vmatpush1.xpose.msra.mxu0 0.0
    %2565 = vmatprep.subr.mxu0 0.0
    %2566 = vmatpush1.xpose.msra.mxu0 0.0
    %2567 = vmatprep.subr.mxu0 0.0
    %2568 = vmatpush1.xpose.msra.mxu0 0.0
    %2569 = vmatprep.subr.mxu0 0.0
    %2570 = vmatpush1.xpose.msra.mxu0 0.0
    %2571 = vmatprep.subr.mxu0 0.0
    %2572 = vmatpush1.xpose.msra.mxu0 0.0
    %2573 = vmatprep.subr.mxu0 0.0
    %2574 = vmatpush1.xpose.msra.mxu0 0.0
    %2575 = vmatprep.subr.mxu0 0.0
    %2576 = vmatpush1.xpose.msra.mxu0 0.0
    %2577 = vmatprep.subr.mxu0 0.0
    %2578 = vmatpush1.xpose.msra.mxu0 0.0
    %2579 = vmatprep.subr.mxu0 0.0
    %2580 = vmatpush1.xpose.msra.mxu0 0.0
    %2581 = vmatprep.subr.mxu0 0.0
    %2582 = vmatpush1.xpose.msra.mxu0 0.0
    %2583 = vmatprep.subr.mxu0 0.0
    %2584 = vmatpush1.xpose.msra.mxu0 0.0
    %2585 = vmatprep.subr.mxu0 0.0
    %2586 = vmatpush1.xpose.msra.mxu0 0.0
    %2587 = vmatprep.subr.mxu0 0.0
    %2588 = vmatpush1.xpose.msra.mxu0 0.0
    %2589 = vmatprep.subr.mxu0 0.0
    %2590 = vmatpush1.xpose.msra.mxu0 0.0
    %2591 = vmatprep.subr.mxu0 0.0
    %2592 = vmatpush1.xpose.msra.mxu0 0.0
    %2593 = vmatprep.subr.mxu0 0.0
    %2594 = vmatpush1.xpose.msra.mxu0 0.0
    %2595 = vmatprep.subr.mxu0 0.0
    %2596 = vmatpush1.xpose.msra.mxu0 0.0
    %2597 = vmatprep.subr.mxu0 0.0
    %2598 = vmatpush1.xpose.msra.mxu0 0.0
    %2599 = vmatprep.subr.mxu0 0.0
    %2600 = vmatpush1.xpose.msra.mxu0 0.0
    %2601 = vmatprep.subr.mxu0 0.0
    %2602 = vmatpush1.xpose.msra.mxu0 0.0
    %2603 = vmatprep.subr.mxu0 0.0
    %2604 = vmatpush1.xpose.msra.mxu0 0.0
    %2605 = vmatprep.subr.mxu0 0.0
    %2606 = vmatpush1.xpose.msra.mxu0 0.0
    %2607 = vmatprep.subr.mxu0 0.0
    %2608 = vmatpush1.xpose.msra.mxu0 0.0
    %2609 = vmatprep.subr.mxu0 0.0
    %2610 = vmatpush1.xpose.msra.mxu0 0.0
    %2611 = vmatprep.subr.mxu0 0.0
    %2612 = vmatpush1.xpose.msra.mxu0 0.0
    %2613 = vmatprep.subr.mxu0 0.0
    %2614 = vmatpush1.xpose.msra.mxu0 0.0
    %2615 = vmatprep.subr.mxu0 0.0
    %2616 = vmatpush1.xpose.msra.mxu0 0.0
    %2617 = vmatprep.subr.mxu0 0.0
    %2618 = vmatpush1.xpose.msra.mxu0 0.0
    %2619 = vmatprep.subr.mxu0 0.0
    %2620 = vmatpush1.xpose.msra.mxu0 0.0
    %2621 = vmatprep.mubr.f32.mxu0 0.0
    %2622 = vmatmul.mubr.f32.gmra.mrb[0].mxu0 %v2553
    %v2623 = vpop.f32.mrb[0].mxu0
    %v2624 = vadd.f32 0.0, %v2623
    %v2625 = vpop.f32.mrb[0].mxu0
    %2626 = vdwg.mxu0
    %v2627 = vmul.f32 %v2624, 0.35355338
    %v2628 = vsel %vm168, %v2627, -inf
    %2629 = vmax.xlane.f32.xlu0 %v2628
    %v2630 = vpop.xlane.xlu0 %2629
    %v2631 = vsub.f32 %v2627, %v2630
    %v2632 = vmul.f32 %v2631, 1.442695
    %v2633 = vpow.pop %v2632
    %v2634 = vsel %vm168, %v2633, 0.0
    %2635 = vadd.xlane.f32.xlu0 %v2634
    %v2636 = vpop.xlane.xlu0 %2635
    %v2637 = vrcp.pop %v2636
    %v2638 = vmul.f32 %v2633, %v2637
    %2639 = vrot.lane.b32.xlu0 %v2381, 56
    %v2640 = vpop.permute.xlu0 %2639
    %v2643 = vsel %vm168, %v2638, 0
    %2645 = vmatprep.subr.mxu0 0.0
    %2646 = vmatpush1.msra.mxu0 %v2640
    %2647 = vmatprep.subr.mxu0 0.0
    %2648 = vmatpush1.msra.mxu0 0.0
    %2649 = vmatprep.subr.mxu0 0.0
    %2650 = vmatpush1.msra.mxu0 0.0
    %2651 = vmatprep.subr.mxu0 0.0
    %2652 = vmatpush1.msra.mxu0 0.0
    %2653 = vmatprep.subr.mxu0 0.0
    %2654 = vmatpush1.msra.mxu0 0.0
    %2655 = vmatprep.subr.mxu0 0.0
    %2656 = vmatpush1.msra.mxu0 0.0
    %2657 = vmatprep.subr.mxu0 0.0
    %2658 = vmatpush1.msra.mxu0 0.0
    %2659 = vmatprep.subr.mxu0 0.0
    %2660 = vmatpush1.msra.mxu0 0.0
    %2661 = vmatprep.subr.mxu0 0.0
    %2662 = vmatpush1.msra.mxu0 0.0
    %2663 = vmatprep.subr.mxu0 0.0
    %2664 = vmatpush1.msra.mxu0 0.0
    %2665 = vmatprep.subr.mxu0 0.0
    %2666 = vmatpush1.msra.mxu0 0.0
    %2667 = vmatprep.subr.mxu0 0.0
    %2668 = vmatpush1.msra.mxu0 0.0
    %2669 = vmatprep.subr.mxu0 0.0
    %2670 = vmatpush1.msra.mxu0 0.0
    %2671 = vmatprep.subr.mxu0 0.0
    %2672 = vmatpush1.msra.mxu0 0.0
    %2673 = vmatprep.subr.mxu0 0.0
    %2674 = vmatpush1.msra.mxu0 0.0
    %2675 = vmatprep.subr.mxu0 0.0
    %2676 = vmatpush1.msra.mxu0 0.0
    %2677 = vmatprep.subr.mxu0 0.0
    %2678 = vmatpush1.msra.mxu0 0.0
    %2679 = vmatprep.subr.mxu0 0.0
    %2680 = vmatpush1.msra.mxu0 0.0
    %2681 = vmatprep.subr.mxu0 0.0
    %2682 = vmatpush1.msra.mxu0 0.0
    %2683 = vmatprep.subr.mxu0 0.0
    %2684 = vmatpush1.msra.mxu0 0.0
    %2685 = vmatprep.subr.mxu0 0.0
    %2686 = vmatpush1.msra.mxu0 0.0
    %2687 = vmatprep.subr.mxu0 0.0
    %2688 = vmatpush1.msra.mxu0 0.0
    %2689 = vmatprep.subr.mxu0 0.0
    %2690 = vmatpush1.msra.mxu0 0.0
    %2691 = vmatprep.subr.mxu0 0.0
    %2692 = vmatpush1.msra.mxu0 0.0
    %2693 = vmatprep.subr.mxu0 0.0
    %2694 = vmatpush1.msra.mxu0 0.0
    %2695 = vmatprep.subr.mxu0 0.0
    %2696 = vmatpush1.msra.mxu0 0.0
    %2697 = vmatprep.subr.mxu0 0.0
    %2698 = vmatpush1.msra.mxu0 0.0
    %2699 = vmatprep.subr.mxu0 0.0
    %2700 = vmatpush1.msra.mxu0 0.0
    %2701 = vmatprep.subr.mxu0 0.0
    %2702 = vmatpush1.msra.mxu0 0.0
    %2703 = vmatprep.subr.mxu0 0.0
    %2704 = vmatpush1.msra.mxu0 0.0
    %2705 = vmatprep.subr.mxu0 0.0
    %2706 = vmatpush1.msra.mxu0 0.0
    %2707 = vmatprep.subr.mxu0 0.0
    %2708 = vmatpush1.msra.mxu0 0.0
    %2709 = vmatprep.mubr.f32.mxu0 0.0
    %2710 = vmatmul.mubr.f32.gmra.mrb[0].mxu0 %v2643
    %v2711 = vpop.f32.mrb[0].mxu0
    %v2712 = vadd.f32 0.0, %v2711
    %v2713 = vpop.f32.mrb[0].mxu0
    %2714 = vdwg.mxu0
    %2715 = vrot.lane.b32.xlu0 %v2381, 112
    %v2716 = vpop.permute.xlu0 %2715
    %2717 = vrot.lane.b32.xlu0 %v2381, 80
    %v2718 = vpop.permute.xlu0 %2717
    %v2719 = vsel %vm168, %v2716, 0
    %v2721 = vsel %vm168, %v2718, 0
    %2723 = vmatprep.subr.mxu0 0.0
    %2724 = vmatpush1.xpose.msra.mxu0 %v2721
    %2725 = vmatprep.subr.mxu0 0.0
    %2726 = vmatpush1.xpose.msra.mxu0 0.0
    %2727 = vmatprep.subr.mxu0 0.0
    %2728 = vmatpush1.xpose.msra.mxu0 0.0
    %2729 = vmatprep.subr.mxu0 0.0
    %2730 = vmatpush1.xpose.msra.mxu0 0.0
    %2731 = vmatprep.subr.mxu0 0.0
    %2732 = vmatpush1.xpose.msra.mxu0 0.0
    %2733 = vmatprep.subr.mxu0 0.0
    %2734 = vmatpush1.xpose.msra.mxu0 0.0
    %2735 = vmatprep.subr.mxu0 0.0
    %2736 = vmatpush1.xpose.msra.mxu0 0.0
    %2737 = vmatprep.subr.mxu0 0.0
    %2738 = vmatpush1.xpose.msra.mxu0 0.0
    %2739 = vmatprep.subr.mxu0 0.0
    %2740 = vmatpush1.xpose.msra.mxu0 0.0
    %2741 = vmatprep.subr.mxu0 0.0
    %2742 = vmatpush1.xpose.msra.mxu0 0.0
    %2743 = vmatprep.subr.mxu0 0.0
    %2744 = vmatpush1.xpose.msra.mxu0 0.0
    %2745 = vmatprep.subr.mxu0 0.0
    %2746 = vmatpush1.xpose.msra.mxu0 0.0
    %2747 = vmatprep.subr.mxu0 0.0
    %2748 = vmatpush1.xpose.msra.mxu0 0.0
    %2749 = vmatprep.subr.mxu0 0.0
    %2750 = vmatpush1.xpose.msra.mxu0 0.0
    %2751 = vmatprep.subr.mxu0 0.0
    %2752 = vmatpush1.xpose.msra.mxu0 0.0
    %2753 = vmatprep.subr.mxu0 0.0
    %2754 = vmatpush1.xpose.msra.mxu0 0.0
    %2755 = vmatprep.subr.mxu0 0.0
    %2756 = vmatpush1.xpose.msra.mxu0 0.0
    %2757 = vmatprep.subr.mxu0 0.0
    %2758 = vmatpush1.xpose.msra.mxu0 0.0
    %2759 = vmatprep.subr.mxu0 0.0
    %2760 = vmatpush1.xpose.msra.mxu0 0.0
    %2761 = vmatprep.subr.mxu0 0.0
    %2762 = vmatpush1.xpose.msra.mxu0 0.0
    %2763 = vmatprep.subr.mxu0 0.0
    %2764 = vmatpush1.xpose.msra.mxu0 0.0
    %2765 = vmatprep.subr.mxu0 0.0
    %2766 = vmatpush1.xpose.msra.mxu0 0.0
    %2767 = vmatprep.subr.mxu0 0.0
    %2768 = vmatpush1.xpose.msra.mxu0 0.0
    %2769 = vmatprep.subr.mxu0 0.0
    %2770 = vmatpush1.xpose.msra.mxu0 0.0
    %2771 = vmatprep.subr.mxu0 0.0
    %2772 = vmatpush1.xpose.msra.mxu0 0.0
    %2773 = vmatprep.subr.mxu0 0.0
    %2774 = vmatpush1.xpose.msra.mxu0 0.0
    %2775 = vmatprep.subr.mxu0 0.0
    %2776 = vmatpush1.xpose.msra.mxu0 0.0
    %2777 = vmatprep.subr.mxu0 0.0
    %2778 = vmatpush1.xpose.msra.mxu0 0.0
    %2779 = vmatprep.subr.mxu0 0.0
    %2780 = vmatpush1.xpose.msra.mxu0 0.0
    %2781 = vmatprep.subr.mxu0 0.0
    %2782 = vmatpush1.xpose.msra.mxu0 0.0
    %2783 = vmatprep.subr.mxu0 0.0
    %2784 = vmatpush1.xpose.msra.mxu0 0.0
    %2785 = vmatprep.subr.mxu0 0.0
    %2786 = vmatpush1.xpose.msra.mxu0 0.0
    %2787 = vmatprep.mubr.f32.mxu0 0.0
    %2788 = vmatmul.mubr.f32.gmra.mrb[0].mxu0 %v2719
    %v2789 = vpop.f32.mrb[0].mxu0
    %v2790 = vadd.f32 0.0, %v2789
    %v2791 = vpop.f32.mrb[0].mxu0
    %2792 = vdwg.mxu0
    %v2793 = vmul.f32 %v2790, 0.35355338
    %v2794 = vsel %vm168, %v2793, -inf
    %2795 = vmax.xlane.f32.xlu0 %v2794
    %v2796 = vpop.xlane.xlu0 %2795
    %v2797 = vsub.f32 %v2793, %v2796
    %v2798 = vmul.f32 %v2797, 1.442695
    %v2799 = vpow.pop %v2798
    %v2800 = vsel %vm168, %v2799, 0.0
    %2801 = vadd.xlane.f32.xlu0 %v2800
    %v2802 = vpop.xlane.xlu0 %2801
    %v2803 = vrcp.pop %v2802
    %v2804 = vmul.f32 %v2799, %v2803
    %2805 = vrot.lane.b32.xlu0 %v2381, 48
    %v2806 = vpop.permute.xlu0 %2805
    %v2809 = vsel %vm168, %v2804, 0
    %2811 = vmatprep.subr.mxu0 0.0
    %2812 = vmatpush1.msra.mxu0 %v2806
    %2813 = vmatprep.subr.mxu0 0.0
    %2814 = vmatpush1.msra.mxu0 0.0
    %2815 = vmatprep.subr.mxu0 0.0
    %2816 = vmatpush1.msra.mxu0 0.0
    %2817 = vmatprep.subr.mxu0 0.0
    %2818 = vmatpush1.msra.mxu0 0.0
    %2819 = vmatprep.subr.mxu0 0.0
    %2820 = vmatpush1.msra.mxu0 0.0
    %2821 = vmatprep.subr.mxu0 0.0
    %2822 = vmatpush1.msra.mxu0 0.0
    %2823 = vmatprep.subr.mxu0 0.0
    %2824 = vmatpush1.msra.mxu0 0.0
    %2825 = vmatprep.subr.mxu0 0.0
    %2826 = vmatpush1.msra.mxu0 0.0
    %2827 = vmatprep.subr.mxu0 0.0
    %2828 = vmatpush1.msra.mxu0 0.0
    %2829 = vmatprep.subr.mxu0 0.0
    %2830 = vmatpush1.msra.mxu0 0.0
    %2831 = vmatprep.subr.mxu0 0.0
    %2832 = vmatpush1.msra.mxu0 0.0
    %2833 = vmatprep.subr.mxu0 0.0
    %2834 = vmatpush1.msra.mxu0 0.0
    %2835 = vmatprep.subr.mxu0 0.0
    %2836 = vmatpush1.msra.mxu0 0.0
    %2837 = vmatprep.subr.mxu0 0.0
    %2838 = vmatpush1.msra.mxu0 0.0
    %2839 = vmatprep.subr.mxu0 0.0
    %2840 = vmatpush1.msra.mxu0 0.0
    %2841 = vmatprep.subr.mxu0 0.0
    %2842 = vmatpush1.msra.mxu0 0.0
    %2843 = vmatprep.subr.mxu0 0.0
    %2844 = vmatpush1.msra.mxu0 0.0
    %2845 = vmatprep.subr.mxu0 0.0
    %2846 = vmatpush1.msra.mxu0 0.0
    %2847 = vmatprep.subr.mxu0 0.0
    %2848 = vmatpush1.msra.mxu0 0.0
    %2849 = vmatprep.subr.mxu0 0.0
    %2850 = vmatpush1.msra.mxu0 0.0
    %2851 = vmatprep.subr.mxu0 0.0
    %2852 = vmatpush1.msra.mxu0 0.0
    %2853 = vmatprep.subr.mxu0 0.0
    %2854 = vmatpush1.msra.mxu0 0.0
    %2855 = vmatprep.subr.mxu0 0.0
    %2856 = vmatpush1.msra.mxu0 0.0
    %2857 = vmatprep.subr.mxu0 0.0
    %2858 = vmatpush1.msra.mxu0 0.0
    %2859 = vmatprep.subr.mxu0 0.0
    %2860 = vmatpush1.msra.mxu0 0.0
    %2861 = vmatprep.subr.mxu0 0.0
    %2862 = vmatpush1.msra.mxu0 0.0
    %2863 = vmatprep.subr.mxu0 0.0
    %2864 = vmatpush1.msra.mxu0 0.0
    %2865 = vmatprep.subr.mxu0 0.0
    %2866 = vmatpush1.msra.mxu0 0.0
    %2867 = vmatprep.subr.mxu0 0.0
    %2868 = vmatpush1.msra.mxu0 0.0
    %2869 = vmatprep.subr.mxu0 0.0
    %2870 = vmatpush1.msra.mxu0 0.0
    %2871 = vmatprep.subr.mxu0 0.0
    %2872 = vmatpush1.msra.mxu0 0.0
    %2873 = vmatprep.subr.mxu0 0.0
    %2874 = vmatpush1.msra.mxu0 0.0
    %2875 = vmatprep.mubr.f32.mxu0 0.0
    %2876 = vmatmul.mubr.f32.gmra.mrb[0].mxu0 %v2809
    %v2877 = vpop.f32.mrb[0].mxu0
    %v2878 = vadd.f32 0.0, %v2877
    %v2879 = vpop.f32.mrb[0].mxu0
    %2880 = vdwg.mxu0
    %2881 = vrot.lane.b32.xlu0 %v2381, 104
    %v2882 = vpop.permute.xlu0 %2881
    %2883 = vrot.lane.b32.xlu0 %v2381, 72
    %v2884 = vpop.permute.xlu0 %2883
    %v2885 = vsel %vm168, %v2882, 0
    %v2887 = vsel %vm168, %v2884, 0
    %2889 = vmatprep.subr.mxu0 0.0
    %2890 = vmatpush1.xpose.msra.mxu0 %v2887
    %2891 = vmatprep.subr.mxu0 0.0
    %2892 = vmatpush1.xpose.msra.mxu0 0.0
    %2893 = vmatprep.subr.mxu0 0.0
    %2894 = vmatpush1.xpose.msra.mxu0 0.0
    %2895 = vmatprep.subr.mxu0 0.0
    %2896 = vmatpush1.xpose.msra.mxu0 0.0
    %2897 = vmatprep.subr.mxu0 0.0
    %2898 = vmatpush1.xpose.msra.mxu0 0.0
    %2899 = vmatprep.subr.mxu0 0.0
    %2900 = vmatpush1.xpose.msra.mxu0 0.0
    %2901 = vmatprep.subr.mxu0 0.0
    %2902 = vmatpush1.xpose.msra.mxu0 0.0
    %2903 = vmatprep.subr.mxu0 0.0
    %2904 = vmatpush1.xpose.msra.mxu0 0.0
    %2905 = vmatprep.subr.mxu0 0.0
    %2906 = vmatpush1.xpose.msra.mxu0 0.0
    %2907 = vmatprep.subr.mxu0 0.0
    %2908 = vmatpush1.xpose.msra.mxu0 0.0
    %2909 = vmatprep.subr.mxu0 0.0
    %2910 = vmatpush1.xpose.msra.mxu0 0.0
    %2911 = vmatprep.subr.mxu0 0.0
    %2912 = vmatpush1.xpose.msra.mxu0 0.0
    %2913 = vmatprep.subr.mxu0 0.0
    %2914 = vmatpush1.xpose.msra.mxu0 0.0
    %2915 = vmatprep.subr.mxu0 0.0
    %2916 = vmatpush1.xpose.msra.mxu0 0.0
    %2917 = vmatprep.subr.mxu0 0.0
    %2918 = vmatpush1.xpose.msra.mxu0 0.0
    %2919 = vmatprep.subr.mxu0 0.0
    %2920 = vmatpush1.xpose.msra.mxu0 0.0
    %2921 = vmatprep.subr.mxu0 0.0
    %2922 = vmatpush1.xpose.msra.mxu0 0.0
    %2923 = vmatprep.subr.mxu0 0.0
    %2924 = vmatpush1.xpose.msra.mxu0 0.0
    %2925 = vmatprep.subr.mxu0 0.0
    %2926 = vmatpush1.xpose.msra.mxu0 0.0
    %2927 = vmatprep.subr.mxu0 0.0
    %2928 = vmatpush1.xpose.msra.mxu0 0.0
    %2929 = vmatprep.subr.mxu0 0.0
    %2930 = vmatpush1.xpose.msra.mxu0 0.0
    %2931 = vmatprep.subr.mxu0 0.0
    %2932 = vmatpush1.xpose.msra.mxu0 0.0
    %2933 = vmatprep.subr.mxu0 0.0
    %2934 = vmatpush1.xpose.msra.mxu0 0.0
    %2935 = vmatprep.subr.mxu0 0.0
    %2936 = vmatpush1.xpose.msra.mxu0 0.0
    %2937 = vmatprep.subr.mxu0 0.0
    %2938 = vmatpush1.xpose.msra.mxu0 0.0
    %2939 = vmatprep.subr.mxu0 0.0
    %2940 = vmatpush1.xpose.msra.mxu0 0.0
    %2941 = vmatprep.subr.mxu0 0.0
    %2942 = vmatpush1.xpose.msra.mxu0 0.0
    %2943 = vmatprep.subr.mxu0 0.0
    %2944 = vmatpush1.xpose.msra.mxu0 0.0
    %2945 = vmatprep.subr.mxu0 0.0
    %2946 = vmatpush1.xpose.msra.mxu0 0.0
    %2947 = vmatprep.subr.mxu0 0.0
    %2948 = vmatpush1.xpose.msra.mxu0 0.0
    %2949 = vmatprep.subr.mxu0 0.0
    %2950 = vmatpush1.xpose.msra.mxu0 0.0
    %2951 = vmatprep.subr.mxu0 0.0
    %2952 = vmatpush1.xpose.msra.mxu0 0.0
    %2953 = vmatprep.mubr.f32.mxu0 0.0
    %2954 = vmatmul.mubr.f32.gmra.mrb[0].mxu0 %v2885
    %v2955 = vpop.f32.mrb[0].mxu0
    %v2956 = vadd.f32 0.0, %v2955
    %v2957 = vpop.f32.mrb[0].mxu0
    %2958 = vdwg.mxu0
    %v2959 = vmul.f32 %v2956, 0.35355338
    %v2960 = vsel %vm168, %v2959, -inf
    %2961 = vmax.xlane.f32.xlu0 %v2960
    %v2962 = vpop.xlane.xlu0 %2961
    %v2963 = vsub.f32 %v2959, %v2962
    %v2964 = vmul.f32 %v2963, 1.442695
    %v2965 = vpow.pop %v2964
    %v2966 = vsel %vm168, %v2965, 0.0
    %2967 = vadd.xlane.f32.xlu0 %v2966
    %v2968 = vpop.xlane.xlu0 %2967
    %v2969 = vrcp.pop %v2968
    %v2970 = vmul.f32 %v2965, %v2969
    %2971 = vrot.lane.b32.xlu0 %v2381, 40
    %v2972 = vpop.permute.xlu0 %2971
    %v2975 = vsel %vm168, %v2970, 0
    %2977 = vmatprep.subr.mxu0 0.0
    %2978 = vmatpush1.msra.mxu0 %v2972
    %2979 = vmatprep.subr.mxu0 0.0
    %2980 = vmatpush1.msra.mxu0 0.0
    %2981 = vmatprep.subr.mxu0 0.0
    %2982 = vmatpush1.msra.mxu0 0.0
    %2983 = vmatprep.subr.mxu0 0.0
    %2984 = vmatpush1.msra.mxu0 0.0
    %2985 = vmatprep.subr.mxu0 0.0
    %2986 = vmatpush1.msra.mxu0 0.0
    %2987 = vmatprep.subr.mxu0 0.0
    %2988 = vmatpush1.msra.mxu0 0.0
    %2989 = vmatprep.subr.mxu0 0.0
    %2990 = vmatpush1.msra.mxu0 0.0
    %2991 = vmatprep.subr.mxu0 0.0
    %2992 = vmatpush1.msra.mxu0 0.0
    %2993 = vmatprep.subr.mxu0 0.0
    %2994 = vmatpush1.msra.mxu0 0.0
    %2995 = vmatprep.subr.mxu0 0.0
    %2996 = vmatpush1.msra.mxu0 0.0
    %2997 = vmatprep.subr.mxu0 0.0
    %2998 = vmatpush1.msra.mxu0 0.0
    %2999 = vmatprep.subr.mxu0 0.0
    %3000 = vmatpush1.msra.mxu0 0.0
    %3001 = vmatprep.subr.mxu0 0.0
    %3002 = vmatpush1.msra.mxu0 0.0
    %3003 = vmatprep.subr.mxu0 0.0
    %3004 = vmatpush1.msra.mxu0 0.0
    %3005 = vmatprep.subr.mxu0 0.0
    %3006 = vmatpush1.msra.mxu0 0.0
    %3007 = vmatprep.subr.mxu0 0.0
    %3008 = vmatpush1.msra.mxu0 0.0
    %3009 = vmatprep.subr.mxu0 0.0
    %3010 = vmatpush1.msra.mxu0 0.0
    %3011 = vmatprep.subr.mxu0 0.0
    %3012 = vmatpush1.msra.mxu0 0.0
    %3013 = vmatprep.subr.mxu0 0.0
    %3014 = vmatpush1.msra.mxu0 0.0
    %3015 = vmatprep.subr.mxu0 0.0
    %3016 = vmatpush1.msra.mxu0 0.0
    %3017 = vmatprep.subr.mxu0 0.0
    %3018 = vmatpush1.msra.mxu0 0.0
    %3019 = vmatprep.subr.mxu0 0.0
    %3020 = vmatpush1.msra.mxu0 0.0
    %3021 = vmatprep.subr.mxu0 0.0
    %3022 = vmatpush1.msra.mxu0 0.0
    %3023 = vmatprep.subr.mxu0 0.0
    %3024 = vmatpush1.msra.mxu0 0.0
    %3025 = vmatprep.subr.mxu0 0.0
    %3026 = vmatpush1.msra.mxu0 0.0
    %3027 = vmatprep.subr.mxu0 0.0
    %3028 = vmatpush1.msra.mxu0 0.0
    %3029 = vmatprep.subr.mxu0 0.0
    %3030 = vmatpush1.msra.mxu0 0.0
    %3031 = vmatprep.subr.mxu0 0.0
    %3032 = vmatpush1.msra.mxu0 0.0
    %3033 = vmatprep.subr.mxu0 0.0
    %3034 = vmatpush1.msra.mxu0 0.0
    %3035 = vmatprep.subr.mxu0 0.0
    %3036 = vmatpush1.msra.mxu0 0.0
    %3037 = vmatprep.subr.mxu0 0.0
    %3038 = vmatpush1.msra.mxu0 0.0
    %3039 = vmatprep.subr.mxu0 0.0
    %3040 = vmatpush1.msra.mxu0 0.0
    %3041 = vmatprep.mubr.f32.mxu0 0.0
    %3042 = vmatmul.mubr.f32.gmra.mrb[0].mxu0 %v2975
    %v3043 = vpop.f32.mrb[0].mxu0
    %v3044 = vadd.f32 0.0, %v3043
    %v3045 = vpop.f32.mrb[0].mxu0
    %3046 = vdwg.mxu0
    %3048 = vrot.lane.b32.xlu0 %v2712, 8
    %v3049 = vpop.permute.xlu0 %3048
    %3052 = vrot.lane.b32.xlu0 %v2878, 16
    %v3053 = vpop.permute.xlu0 %3052
    %3056 = vrot.lane.b32.xlu0 %v3044, 24
    %v3057 = vpop.permute.xlu0 %3056
    %v3059 = vsel %vm168, %v2546, %v3049
    %v3060 = vsel %vm842, %v3059, %v3053
    %v3061 = vsel %vm844, %v3060, %v3057
    %v3062 = vlaneseq
    %v3063 = vshrl.u32 %v3062, 7
    %v3064 = vsub.s32 0, %v3063
    %v3065 = vrot.slane %v2306, %v3064
    %3070 = vrot.lane.b32.xlu0 %v2301, 32
    %v3071 = vpop.permute.xlu0 %3070
    %3072 = vrot.lane.b32.xlu0 %v2302, 32
    %v3073 = vpop.permute.xlu0 %3072
    %3074 = vrot.lane.b32.xlu0 %v2303, 32
    %v3075 = vpop.permute.xlu0 %3074
    %3076 = vrot.lane.b32.xlu0 %v2304, 32
    %v3077 = vpop.permute.xlu0 %3076
    %v3083 = vsel %vm52, %v3061, 0
    %3085 = vmatprep.subr.mxu0 0.0
    %3086 = vmatpush1.msra.mxu0 %v3071
    %3087 = vmatprep.subr.mxu0 0.0
    %3088 = vmatpush1.msra.mxu0 %v3073
    %3089 = vmatprep.subr.mxu0 0.0
    %3090 = vmatpush1.msra.mxu0 %v3075
    %3091 = vmatprep.subr.mxu0 0.0
    %3092 = vmatpush1.msra.mxu0 %v3077
    %3093 = vmatprep.subr.mxu0 0.0
    %3094 = vmatpush1.msra.mxu0 0.0
    %3095 = vmatprep.subr.mxu0 0.0
    %3096 = vmatpush1.msra.mxu0 0.0
    %3097 = vmatprep.subr.mxu0 0.0
    %3098 = vmatpush1.msra.mxu0 0.0
    %3099 = vmatprep.subr.mxu0 0.0
    %3100 = vmatpush1.msra.mxu0 0.0
    %3101 = vmatprep.subr.mxu0 0.0
    %3102 = vmatpush1.msra.mxu0 0.0
    %3103 = vmatprep.subr.mxu0 0.0
    %3104 = vmatpush1.msra.mxu0 0.0
    %3105 = vmatprep.subr.mxu0 0.0
    %3106 = vmatpush1.msra.mxu0 0.0
    %3107 = vmatprep.subr.mxu0 0.0
    %3108 = vmatpush1.msra.mxu0 0.0
    %3109 = vmatprep.subr.mxu0 0.0
    %3110 = vmatpush1.msra.mxu0 0.0
    %3111 = vmatprep.subr.mxu0 0.0
    %3112 = vmatpush1.msra.mxu0 0.0
    %3113 = vmatprep.subr.mxu0 0.0
    %3114 = vmatpush1.msra.mxu0 0.0
    %3115 = vmatprep.subr.mxu0 0.0
    %3116 = vmatpush1.msra.mxu0 0.0
    %3117 = vmatprep.subr.mxu0 0.0
    %3118 = vmatpush1.msra.mxu0 0.0
    %3119 = vmatprep.subr.mxu0 0.0
    %3120 = vmatpush1.msra.mxu0 0.0
    %3121 = vmatprep.subr.mxu0 0.0
    %3122 = vmatpush1.msra.mxu0 0.0
    %3123 = vmatprep.subr.mxu0 0.0
    %3124 = vmatpush1.msra.mxu0 0.0
    %3125 = vmatprep.subr.mxu0 0.0
    %3126 = vmatpush1.msra.mxu0 0.0
    %3127 = vmatprep.subr.mxu0 0.0
    %3128 = vmatpush1.msra.mxu0 0.0
    %3129 = vmatprep.subr.mxu0 0.0
    %3130 = vmatpush1.msra.mxu0 0.0
    %3131 = vmatprep.subr.mxu0 0.0
    %3132 = vmatpush1.msra.mxu0 0.0
    %3133 = vmatprep.subr.mxu0 0.0
    %3134 = vmatpush1.msra.mxu0 0.0
    %3135 = vmatprep.subr.mxu0 0.0
    %3136 = vmatpush1.msra.mxu0 0.0
    %3137 = vmatprep.subr.mxu0 0.0
    %3138 = vmatpush1.msra.mxu0 0.0
    %3139 = vmatprep.subr.mxu0 0.0
    %3140 = vmatpush1.msra.mxu0 0.0
    %3141 = vmatprep.subr.mxu0 0.0
    %3142 = vmatpush1.msra.mxu0 0.0
    %3143 = vmatprep.subr.mxu0 0.0
    %3144 = vmatpush1.msra.mxu0 0.0
    %3145 = vmatprep.subr.mxu0 0.0
    %3146 = vmatpush1.msra.mxu0 0.0
    %3147 = vmatprep.subr.mxu0 0.0
    %3148 = vmatpush1.msra.mxu0 0.0
    %3149 = vmatprep.mubr.f32.mxu0 0.0
    %3150 = vmatmul.mubr.f32.gmra.mrb[0].mxu0 %v3083
    %v3151 = vpop.f32.mrb[0].mxu0
    %v3152 = vadd.f32 %v3065, %v3151
    %v3153 = vpop.f32.mrb[0].mxu0
    %3154 = vdwg.mxu0
    %3155 = vst.msk [vmem:[#allocation5] sm:$0xff] %vm52, %v3152
    // Predicated region
    $region18: #{temporal_context_forward.1} parent=1 // pred_check
      _
    $region19: #{temporal_context_forward.1} parent=1 // pred_check_branch
      %3157 = sbr.rel (0) target = $region21
    $region20: #{temporal_context_forward.1} parent=1 // pred_region
      %s3159 = ssub.s32 128, 128
      %3160 = vsyncadd [#allocation4], %s3159
      %s3162 = sshll.u32 [#allocation5], 4
      %s3163 = int_to_ptr.vmem [resolvable:$true] %s3162
      %3165 = dma.vmem_to_hbm [thread:$0]  %s3163, 128, %s3, [#allocation4]
    $region21: #{temporal_context_forward.1} parent=1 // pred_fallthru
      _
    // Predicated region
    $region22: #{temporal_context_forward.1} parent=1 // pred_check
      _
    $region23: #{temporal_context_forward.1} parent=1 // pred_check_branch
      %3167 = sbr.rel (0) target = $region25
    $region24: #{temporal_context_forward.1} parent=1 // pred_region
      %s3169 = ssub.s32 16, 16
      %3170 = vsyncadd [#allocation7], %s3169
      %s3172 = sshll.u32 [#allocation6], 4
      %s3173 = int_to_ptr.vmem [resolvable:$true] %s3172
      %3175 = dma.vmem_to_hbm [thread:$0]  %s3173, 16, %s4, [#allocation7]
    $region25: #{temporal_context_forward.1} parent=1 // pred_fallthru
      _
    // Predicated region
    $region26: #{temporal_context_forward.1} parent=1 // pred_check
      _
    $region27: #{temporal_context_forward.1} parent=1 // pred_check_branch
      %3177 = sbr.rel (0) target = $region29
    $region28: #{temporal_context_forward.1} parent=1 // pred_region
      %3178 = dma.done [#allocation4], 128
    $region29: #{temporal_context_forward.1} parent=1 // pred_fallthru
      _
    // Predicated region
    $region30: #{temporal_context_forward.1} parent=1 // pred_check
      _
    $region31: #{temporal_context_forward.1} parent=1 // pred_check_branch
      %3180 = sbr.rel (0) target = $region33
    $region32: #{temporal_context_forward.1} parent=1 // pred_region
      %3181 = dma.done [#allocation7], 16
    $region33: #{temporal_context_forward.1} parent=1 // pred_fallthru
      _
    %3182 = vsyncpa [#allocation3], 1
    %3183 = vsyncpa [#allocation4], 1
    %3184 = vsyncpa [#allocation7], 1

</llo_original>
